<compile_context>
chip_gen: v7x
topology: tpu7x:2x2x1
jax: 0.10.0
libtpu: 0.0.40
codegen_flags: <defaults>
</compile_context>

<pallas_src>
import jax
import jax.numpy as jnp
import numpy as np
from jax import lax
from jax.experimental import pallas as pl
from jax.experimental.pallas import tpu as pltpu


def lipswish(x):
    return 0.909 * x * jax.nn.sigmoid(x)


def _round_up(x, m):
    return (x + m - 1) // m * m


def _make_kernel(T_blk, Bb, D, H, Hd, n_extra_hidden, T_real, T_pad, unroll):
    """Fused ContinuousLSTM recurrence; one invocation per (batch-block, time-block).

    Ref order:
      y(T_blk,Bb,D) f32,
      flow_w1h(H,Hd) bf16, flow_w1t(1,Hd) f32, flow_b1(1,Hd) f32,
      [flow_wk(Hd,Hd) bf16, flow_bk(1,Hd) f32] * n_extra_hidden,
      flow_wout(Hd,H) bf16, flow_bout(1,H) f32, time_w(1,H) f32,
      lstm_wih(D,4H) f32, lstm_whh(H,4H) bf16, lstm_b(1,4H) f32,
      readout_w_row(1,H) f32,
      out(Bb,128) f32,
      scratch: h(Bb,H), c(Bb,H), ft(T_blk,Bb,Hd), phi(T_blk,Bb,H)   (all f32)
    """
    needs_mask = T_pad != T_real
    bf16 = jnp.bfloat16

    def kernel(*refs):
        y_ref, w1h_ref, w1t_ref, b1_ref = refs[:4]
        rest = refs[4:]
        nh = 2 * n_extra_hidden
        hidden_refs = rest[:nh]
        (wout_ref, bout_ref, wtime_ref,
         wih_ref, whh_ref, lstm_b_ref, wr_ref,
         out_ref,
         h_scr, c_scr, ft_scr, phi_scr) = rest[nh:]

        # Hoist grid queries to the kernel top level (never inside pl.when bodies).
        t_id = pl.program_id(1)
        n_t = pl.num_programs(1)
        t_base = t_id * T_blk

        # Reset the carried recurrent state at the start of each batch block's time sweep.
        @pl.when(t_id == 0)
        def _():
            h_scr[...] = jnp.zeros_like(h_scr)
            c_scr[...] = jnp.zeros_like(c_scr)

        # ---- prologue: hoist the t-dependent (h-independent) flow terms for the block ----
        t_blk = y_ref[...][:, :, 0:1]                           # (T_blk, Bb, 1) absolute time
        ft_scr[...] = t_blk * w1t_ref[...] + b1_ref[...]        # t-part of flow layer 1
        phi_scr[...] = jnp.tanh(t_blk * wtime_ref[...])         # TimeTanh(t)

        def step(j, carry):
            h, c = carry                                        # (Bb, H) f32 each
            # --- continuous (ResNet flow) evolution: h + tanh(t*w) * MLP([h, t]) ---
            z = lipswish(jnp.dot(h.astype(bf16), w1h_ref[...],
                                 preferred_element_type=jnp.float32) + ft_scr[j])
            for k in range(n_extra_hidden):
                z = lipswish(jnp.dot(z.astype(bf16), hidden_refs[2 * k][...],
                                     preferred_element_type=jnp.float32)
                             + hidden_refs[2 * k + 1][...])
            g = (jnp.dot(z.astype(bf16), wout_ref[...],
                         preferred_element_type=jnp.float32) + bout_ref[...])
            h_flow = h + phi_scr[j] * g

            # --- discrete LSTM cell update, packed gates i|f|g|o in one (Bb, 4H) tile ---
            x = y_ref[j]                                        # (Bb, D), D is tiny
            gates = (jnp.dot(h_flow.astype(bf16), whh_ref[...],
                             preferred_element_type=jnp.float32) + lstm_b_ref[...])
            for d in range(D):                                  # x @ W_ih as VPU FMAs
                gates = gates + x[:, d:d + 1] * wih_ref[d:d + 1, :]
            sg = jax.nn.sigmoid(gates)                          # one EUP pass over all gates
            tg = jnp.tanh(gates)
            i_g = sg[:, 0 * H:1 * H]
            f_g = sg[:, 1 * H:2 * H]
            g_g = tg[:, 2 * H:3 * H]
            o_g = sg[:, 3 * H:4 * H]
            c_n = f_g * c + i_g * g_g
            h_n = o_g * jnp.tanh(c_n)

            if needs_mask:                                      # zero-padded time tail
                valid = (t_base + j) < T_real
                h_n = jnp.where(valid, h_n, h)
                c_n = jnp.where(valid, c_n, c)
            return h_n, c_n

        # h/c live in the loop carry; scratch touched once per grid block.
        h, c = lax.fori_loop(0, T_blk, step, (h_scr[...], c_scr[...]), unroll=unroll)
        h_scr[...] = h
        c_scr[...] = c

        # ---- readout on the final hidden state (lane-dense (Bb, 128) store) ----
        @pl.when(t_id == n_t - 1)
        def _():
            score = jnp.sum(h * wr_ref[...], axis=-1, keepdims=True)   # (Bb, 1)
            out_ref[...] = jnp.broadcast_to(score, (Bb, 128))

    return kernel


def lstm_flow_discriminator(y, params):
    """y: (B, T, D) float32, D = dim + 1 (feature 0 is absolute time). Returns scalar."""
    B, T, D = y.shape
    H = params["lstm_whh"].shape[0]
    Hd = params["flow_w1h"].shape[1]
    n_extra_hidden = len(params["flow_hidden"])
    f32, bf16 = jnp.float32, jnp.bfloat16

    # Batch blocks: feed the MXU with as many rows as possible (cap 256); only split into
    # multiple "parallel" blocks when each keeps M >= 128 (v5e users may prefer cap 128).
    n_bb = pl.cdiv(_round_up(B, 8), 256)
    Bb = _round_up(pl.cdiv(B, n_bb), 8)
    B_p = Bb * n_bb

    # Time blocks: robust to any T (zero-padded tail masked in-kernel), amortizes grid-step
    # overhead and h/c scratch writebacks.
    T_blk = min(T, 64)
    n_tt = pl.cdiv(T, T_blk)
    T_p = n_tt * T_blk
    unroll = True if T_blk <= 16 else 8

    # Time-major layout, batch/time zero-padded.
    y_tbd = jnp.transpose(jnp.asarray(y, f32), (1, 0, 2))            # (T, B, D)
    y_tbd = jnp.pad(y_tbd, ((0, T_p - T), (0, B_p - B), (0, 0)))     # (T_p, B_p, D)

    def arr(a, dt=f32):
        return jnp.asarray(a, dt)

    inputs = [
        y_tbd,
        arr(params["flow_w1h"], bf16),
        arr(params["flow_w1t"]),
        arr(params["flow_b1"]),
    ]
    for wk, bk in params["flow_hidden"]:
        inputs += [arr(wk, bf16), arr(bk)]
    inputs += [
        arr(params["flow_wout"], bf16),
        arr(params["flow_bout"]),
        arr(params["time_w"]),
        arr(params["lstm_wih"]),                                      # f32: VPU FMAs
        arr(params["lstm_whh"], bf16),                                # bf16 MXU operand
        arr(params["lstm_bih"]) + arr(params["lstm_bhh"]),            # pre-summed LSTM bias
        arr(params["readout_w"]).reshape(1, H),                       # readout weight, row form
    ]

    def whole(a):
        nd = a.ndim
        return pl.BlockSpec(a.shape, lambda b, i, _n=nd: (0,) * _n)

    in_specs = [pl.BlockSpec((T_blk, Bb, D), lambda b, i: (i, b, 0))]
    in_specs += [whole(a) for a in inputs[1:]]

    # VMEM budget (matters on v7x: 64 MiB physical / 32 MiB scoped default).
    scratch_bytes = (2 * Bb * H + T_blk * Bb * (H + Hd)) * 4
    stream_bytes = 2 * (T_blk * Bb * D * 4 + Bb * 128 * 4)            # double-buffered blocks
    weight_bytes = 2 * sum(int(np.prod(a.shape)) * a.dtype.itemsize for a in inputs[1:])
    est = scratch_bytes + stream_bytes + weight_bytes
    vmem_limit = (int(min(2 * est, 48 * 1024 * 1024))
                  if est > 24 * 1024 * 1024 else None)

    out = pl.pallas_call(
        _make_kernel(T_blk, Bb, D, H, Hd, n_extra_hidden, T, T_p, unroll),
        grid=(n_bb, n_tt),
        out_shape=jax.ShapeDtypeStruct((B_p, 128), f32),
        in_specs=in_specs,
        out_specs=pl.BlockSpec((Bb, 128), lambda b, i: (b, 0)),
        scratch_shapes=[
            pltpu.VMEM((Bb, H), f32),                 # h state (persists across time blocks)
            pltpu.VMEM((Bb, H), f32),                 # c state
            pltpu.VMEM((T_blk, Bb, Hd), f32),         # hoisted t*w1t + b1
            pltpu.VMEM((T_blk, Bb, H), f32),          # hoisted tanh(t*time_w)
        ],
        compiler_params=pltpu.CompilerParams(
            dimension_semantics=("parallel", "arbitrary"),
            vmem_limit_bytes=vmem_limit),
    )(*inputs)

    readout_b = jnp.asarray(params["readout_b"], f32).reshape(())
    # Padded batch rows are sliced off here (keeps the kernel's readout branch trivial).
    return jnp.sum(out[:B, 0]) / B + readout_b


def reference_forward(y, params):
    """Pure-JAX mirror of the same math in full f32 (correctness check)."""
    B, T, D = y.shape
    H = params["lstm_whh"].shape[0]
    h = jnp.zeros((B, H), jnp.float32)
    c = jnp.zeros((B, H), jnp.float32)
    for i in range(T):
        x = y[:, i, :]
        t = x[:, 0:1]
        z = lipswish(h @ params["flow_w1h"] + t @ params["flow_w1t"] + params["flow_b1"])
        for wk, bk in params["flow_hidden"]:
            z = lipswish(z @ wk + bk)
        g = z @ params["flow_wout"] + params["flow_bout"]
        h = h + jnp.tanh(t @ params["time_w"]) * g
        gates = (x @ params["lstm_wih"] + params["lstm_bih"]
                 + h @ params["lstm_whh"] + params["lstm_bhh"])
        i_g = jax.nn.sigmoid(gates[:, :H])
        f_g = jax.nn.sigmoid(gates[:, H:2 * H])
        g_g = jnp.tanh(gates[:, 2 * H:3 * H])
        o_g = jax.nn.sigmoid(gates[:, 3 * H:])
        c = f_g * c + i_g * g_g
        h = o_g * jnp.tanh(c)
    score = h @ params["readout_w"] + params["readout_b"]
    return jnp.mean(score)


def init_params(key, dim, hidden_state_dim, hidden_dim, hidden_layers):
    """Deterministic synthetic init (PyTorch-style uniform(-1/sqrt(fan_in), 1/sqrt(fan_in)))."""
    D = dim + 1
    H = hidden_state_dim
    Hd = hidden_dim

    def u(k, shape, fan_in):
        bound = 1.0 / np.sqrt(fan_in)
        return jax.random.uniform(k, shape, jnp.float32, -bound, bound)

    keys = iter(jax.random.split(key, 32))
    params = {}
    # flow MLP: Linear(H+1 -> Hd), [Linear(Hd -> Hd)] * (hidden_layers-1), Linear(Hd -> H)
    params["flow_w1h"] = u(next(keys), (H, Hd), H + 1)
    params["flow_w1t"] = u(next(keys), (1, Hd), H + 1)
    params["flow_b1"] = u(next(keys), (1, Hd), H + 1)
    params["flow_hidden"] = [
        (u(next(keys), (Hd, Hd), Hd), u(next(keys), (1, Hd), Hd))
        for _ in range(hidden_layers - 1)
    ]
    params["flow_wout"] = u(next(keys), (Hd, H), Hd)
    params["flow_bout"] = u(next(keys), (1, H), Hd)
    # TimeTanh time-net: phi(t) = tanh(t * w)
    params["time_w"] = u(next(keys), (1, H), 1)
    # LSTMCell(D, H)
    params["lstm_wih"] = u(next(keys), (D, 4 * H), H)
    params["lstm_whh"] = u(next(keys), (H, 4 * H), H)
    params["lstm_bih"] = u(next(keys), (1, 4 * H), H)
    params["lstm_bhh"] = u(next(keys), (1, 4 * H), H)
    # readout Linear(H, 1)
    params["readout_w"] = u(next(keys), (H, 1), H)
    params["readout_b"] = u(next(keys), (1, 1), H)
    return params


if __name__ == "__main__":
    # Small, module-consistent shapes.
    dim = 3                 # data dimension (y has dim + 1 features, feature 0 = time)
    hidden_state_dim = 32   # LSTM hidden state size H
    hidden_dim = 32         # flow MLP width
    hidden_layers = 2       # flow MLP hidden layers
    B, T = 4, 8
    D = dim + 1

    root = jax.random.PRNGKey(0)
    k_params, k_data = jax.random.split(root)
    params = init_params(k_params, dim, hidden_state_dim, hidden_dim, hidden_layers)

    # y: (B, T, D); channel 0 is an increasing time grid, the rest are data features.
    feats = 0.5 * jax.random.normal(k_data, (B, T, dim), jnp.float32)
    times = jnp.broadcast_to(jnp.linspace(0.0, 1.0, T, dtype=jnp.float32)[None, :, None],
                             (B, T, 1))
    y = jnp.concatenate([times, feats], axis=-1)

    score = jax.block_until_ready(lstm_flow_discriminator(y, params))
    ref = jax.block_until_ready(reference_forward(y, params))
    # Kernel uses bf16 MXU operands with f32 accumulation (per perf review), so compare
    # against the pure-f32 reference with a bf16-appropriate tolerance.
    np.testing.assert_allclose(np.asarray(score), np.asarray(ref), rtol=3e-2, atol=1e-2)

    print("KERNEL_OK")
</pallas_src>

<mosaic_0001>
module attributes {stable_mosaic.version = 11 : i64} {
  func.func @kernel(%arg0: i32, %arg1: i32, %arg2: memref<8x8x4xf32, #tpu.memory_space<vmem>>, %arg3: memref<32x32xbf16, #tpu.memory_space<vmem>>, %arg4: memref<1x32xf32, #tpu.memory_space<vmem>>, %arg5: memref<1x32xf32, #tpu.memory_space<vmem>>, %arg6: memref<32x32xbf16, #tpu.memory_space<vmem>>, %arg7: memref<1x32xf32, #tpu.memory_space<vmem>>, %arg8: memref<32x32xbf16, #tpu.memory_space<vmem>>, %arg9: memref<1x32xf32, #tpu.memory_space<vmem>>, %arg10: memref<1x32xf32, #tpu.memory_space<vmem>>, %arg11: memref<4x128xf32, #tpu.memory_space<vmem>>, %arg12: memref<32x128xbf16, #tpu.memory_space<vmem>>, %arg13: memref<1x128xf32, #tpu.memory_space<vmem>>, %arg14: memref<1x32xf32, #tpu.memory_space<vmem>>, %arg15: memref<8x128xf32, #tpu.memory_space<vmem>>, %arg16: memref<8x32xf32, #tpu.memory_space<vmem>>, %arg17: memref<8x32xf32, #tpu.memory_space<vmem>>, %arg18: memref<8x8x32xf32, #tpu.memory_space<vmem>>, %arg19: memref<8x8x32xf32, #tpu.memory_space<vmem>>) attributes {dimension_semantics = [#tpu.dimension_semantics<parallel>, #tpu.dimension_semantics<arbitrary>], iteration_bounds = array<i64: 1, 1>, scalar_prefetch = 0 : i64, scratch_operands = 4 : i64, tpu.core_type = #tpu.core_type<tc>, window_params = [{transform_indices = @transform_0, window_bounds = array<i64: 8, 8, 4>}, {pipeline_mode = #tpu.pipeline_mode<synchronous>, transform_indices = @transform_1, window_bounds = array<i64: 32, 32>}, {pipeline_mode = #tpu.pipeline_mode<synchronous>, transform_indices = @transform_2, window_bounds = array<i64: 1, 32>}, {pipeline_mode = #tpu.pipeline_mode<synchronous>, transform_indices = @transform_3, window_bounds = array<i64: 1, 32>}, {pipeline_mode = #tpu.pipeline_mode<synchronous>, transform_indices = @transform_4, window_bounds = array<i64: 32, 32>}, {pipeline_mode = #tpu.pipeline_mode<synchronous>, transform_indices = @transform_5, window_bounds = array<i64: 1, 32>}, {pipeline_mode = #tpu.pipeline_mode<synchronous>, transform_indices = @transform_6, window_bounds = array<i64: 32, 32>}, {pipeline_mode = #tpu.pipeline_mode<synchronous>, transform_indices = @transform_7, window_bounds = array<i64: 1, 32>}, {pipeline_mode = #tpu.pipeline_mode<synchronous>, transform_indices = @transform_8, window_bounds = array<i64: 1, 32>}, {pipeline_mode = #tpu.pipeline_mode<synchronous>, transform_indices = @transform_9, window_bounds = array<i64: 4, 128>}, {pipeline_mode = #tpu.pipeline_mode<synchronous>, transform_indices = @transform_10, window_bounds = array<i64: 32, 128>}, {pipeline_mode = #tpu.pipeline_mode<synchronous>, transform_indices = @transform_11, window_bounds = array<i64: 1, 128>}, {pipeline_mode = #tpu.pipeline_mode<synchronous>, transform_indices = @transform_12, window_bounds = array<i64: 1, 32>}, {transform_indices = @transform_13, window_bounds = array<i64: 8, 128>}]} {
    %c0_i32 = arith.constant 0 : i32
    %0 = arith.cmpi eq, %arg1, %c0_i32 : i32
    %1 = arith.extui %0 : i1 to i32
    %c0_i32_0 = arith.constant 0 : i32
    %2 = arith.cmpi ne, %1, %c0_i32_0 : i32
    scf.if %2 {
      %cst_318 = arith.constant 0.000000e+00 : f32
      %733 = vector.broadcast %cst_318 : f32 to vector<8x32xf32>
      %c0_319 = arith.constant 0 : index
      %c0_320 = arith.constant 0 : index
      %734 = vector.load %arg16[%c0_319, %c0_320] : memref<8x32xf32, #tpu.memory_space<vmem>>, vector<8x32xf32>
      tpu.vector_store %arg16[%c0_319, %c0_320], %733 {strides = array<i32>} : memref<8x32xf32, #tpu.memory_space<vmem>>, vector<8x32xf32>,
      %cst_321 = arith.constant 0.000000e+00 : f32
      %735 = vector.broadcast %cst_321 : f32 to vector<8x32xf32>
      %c0_322 = arith.constant 0 : index
      %c0_323 = arith.constant 0 : index
      %736 = vector.load %arg17[%c0_322, %c0_323] : memref<8x32xf32, #tpu.memory_space<vmem>>, vector<8x32xf32>
      tpu.vector_store %arg17[%c0_322, %c0_323], %735 {strides = array<i32>} : memref<8x32xf32, #tpu.memory_space<vmem>>, vector<8x32xf32>,
    } else {
    }
    %c0 = arith.constant 0 : index
    %c0_1 = arith.constant 0 : index
    %c0_2 = arith.constant 0 : index
    %3 = vector.load %arg2[%c0, %c0_1, %c0_2] : memref<8x8x4xf32, #tpu.memory_space<vmem>>, vector<8x8x4xf32>
    %4 = vector.extract_strided_slice %3 {offsets = [0, 0, 0], sizes = [8, 8, 1], strides = [1, 1, 1]} : vector<8x8x4xf32> to vector<8x8x1xf32>
    %c0_3 = arith.constant 0 : index
    %c0_4 = arith.constant 0 : index
    %5 = vector.load %arg4[%c0_3, %c0_4] : memref<1x32xf32, #tpu.memory_space<vmem>>, vector<1x32xf32>
    %6 = vector.shape_cast %5 : vector<1x32xf32> to vector<1x1x32xf32>
    %7 = vector.broadcast %4 : vector<8x8x1xf32> to vector<8x8x32xf32>
    %8 = vector.broadcast %6 : vector<1x1x32xf32> to vector<8x8x32xf32>
    %9 = arith.mulf %7, %8 : vector<8x8x32xf32>
    %c0_5 = arith.constant 0 : index
    %c0_6 = arith.constant 0 : index
    %10 = vector.load %arg5[%c0_5, %c0_6] : memref<1x32xf32, #tpu.memory_space<vmem>>, vector<1x32xf32>
    %11 = vector.shape_cast %10 : vector<1x32xf32> to vector<1x1x32xf32>
    %12 = vector.broadcast %11 : vector<1x1x32xf32> to vector<8x8x32xf32>
    %13 = arith.addf %9, %12 : vector<8x8x32xf32>
    %c0_7 = arith.constant 0 : index
    %c0_8 = arith.constant 0 : index
    %c0_9 = arith.constant 0 : index
    %14 = vector.load %arg18[%c0_7, %c0_8, %c0_9] : memref<8x8x32xf32, #tpu.memory_space<vmem>>, vector<8x8x32xf32>
    tpu.vector_store %arg18[%c0_7, %c0_8, %c0_9], %13 {strides = array<i32>} : memref<8x8x32xf32, #tpu.memory_space<vmem>>, vector<8x8x32xf32>,
    %c0_10 = arith.constant 0 : index
    %c0_11 = arith.constant 0 : index
    %15 = vector.load %arg10[%c0_10, %c0_11] : memref<1x32xf32, #tpu.memory_space<vmem>>, vector<1x32xf32>
    %16 = vector.shape_cast %15 : vector<1x32xf32> to vector<1x1x32xf32>
    %17 = vector.broadcast %4 : vector<8x8x1xf32> to vector<8x8x32xf32>
    %18 = vector.broadcast %16 : vector<1x1x32xf32> to vector<8x8x32xf32>
    %19 = arith.mulf %17, %18 : vector<8x8x32xf32>
    %20 = math.tanh %19 : vector<8x8x32xf32>
    %c0_12 = arith.constant 0 : index
    %c0_13 = arith.constant 0 : index
    %c0_14 = arith.constant 0 : index
    %21 = vector.load %arg19[%c0_12, %c0_13, %c0_14] : memref<8x8x32xf32, #tpu.memory_space<vmem>>, vector<8x8x32xf32>
    tpu.vector_store %arg19[%c0_12, %c0_13, %c0_14], %20 {strides = array<i32>} : memref<8x8x32xf32, #tpu.memory_space<vmem>>, vector<8x8x32xf32>,
    %c0_15 = arith.constant 0 : index
    %c0_16 = arith.constant 0 : index
    %22 = vector.load %arg16[%c0_15, %c0_16] : memref<8x32xf32, #tpu.memory_space<vmem>>, vector<8x32xf32>
    %c0_17 = arith.constant 0 : index
    %c0_18 = arith.constant 0 : index
    %23 = vector.load %arg17[%c0_17, %c0_18] : memref<8x32xf32, #tpu.memory_space<vmem>>, vector<8x32xf32>
    %c0_i32_19 = arith.constant 0 : i32
    %24 = arith.truncf %22 : vector<8x32xf32> to vector<8x32xbf16>
    %c0_20 = arith.constant 0 : index
    %c0_21 = arith.constant 0 : index
    %25 = vector.load %arg3[%c0_20, %c0_21] : memref<32x32xbf16, #tpu.memory_space<vmem>>, vector<32x32xbf16>
    %cst = arith.constant dense<0.000000e+00> : vector<8x32xf32>
    %26 = tpu.matmul %24, %25, %cst {dimension_numbers = #tpu.dot_dimension_numbers<[1], [0], [0], [1], [0, 0, 1, 1], [], []>} : vector<8x32xbf16>, vector<32x32xbf16>, vector<8x32xf32> -> vector<8x32xf32>
    %27 = arith.index_cast %c0_i32_19 : i32 to index
    %c0_22 = arith.constant 0 : index
    %c0_23 = arith.constant 0 : index
    %28 = vector.load %arg18[%27, %c0_22, %c0_23] : memref<8x8x32xf32, #tpu.memory_space<vmem>>, vector<1x8x32xf32>
    %29 = vector.shape_cast %28 : vector<1x8x32xf32> to vector<8x32xf32>
    %30 = arith.addf %26, %29 : vector<8x32xf32>
    %cst_24 = arith.constant 0.908999979 : f32
    %31 = vector.broadcast %cst_24 : f32 to vector<8x32xf32>
    %32 = arith.mulf %31, %30 : vector<8x32xf32>
    %33 = arith.negf %30 : vector<8x32xf32>
    %34 = math.exp %33 : vector<8x32xf32>
    %cst_25 = arith.constant 1.000000e+00 : f32
    %35 = vector.broadcast %cst_25 : f32 to vector<8x32xf32>
    %36 = arith.addf %35, %34 : vector<8x32xf32>
    %37 = arith.divf %35, %36 : vector<8x32xf32>
    %38 = arith.mulf %32, %37 : vector<8x32xf32>
    %39 = arith.truncf %38 : vector<8x32xf32> to vector<8x32xbf16>
    %c0_26 = arith.constant 0 : index
    %c0_27 = arith.constant 0 : index
    %40 = vector.load %arg6[%c0_26, %c0_27] : memref<32x32xbf16, #tpu.memory_space<vmem>>, vector<32x32xbf16>
    %cst_28 = arith.constant dense<0.000000e+00> : vector<8x32xf32>
    %41 = tpu.matmul %39, %40, %cst_28 {dimension_numbers = #tpu.dot_dimension_numbers<[1], [0], [0], [1], [0, 0, 1, 1], [], []>} : vector<8x32xbf16>, vector<32x32xbf16>, vector<8x32xf32> -> vector<8x32xf32>
    %c0_29 = arith.constant 0 : index
    %c0_30 = arith.constant 0 : index
    %42 = vector.load %arg7[%c0_29, %c0_30] : memref<1x32xf32, #tpu.memory_space<vmem>>, vector<1x32xf32>
    %43 = vector.broadcast %42 : vector<1x32xf32> to vector<8x32xf32>
    %44 = arith.addf %41, %43 : vector<8x32xf32>
    %cst_31 = arith.constant 0.908999979 : f32
    %45 = vector.broadcast %cst_31 : f32 to vector<8x32xf32>
    %46 = arith.mulf %45, %44 : vector<8x32xf32>
    %47 = arith.negf %44 : vector<8x32xf32>
    %48 = math.exp %47 : vector<8x32xf32>
    %cst_32 = arith.constant 1.000000e+00 : f32
    %49 = vector.broadcast %cst_32 : f32 to vector<8x32xf32>
    %50 = arith.addf %49, %48 : vector<8x32xf32>
    %51 = arith.divf %49, %50 : vector<8x32xf32>
    %52 = arith.mulf %46, %51 : vector<8x32xf32>
    %53 = arith.truncf %52 : vector<8x32xf32> to vector<8x32xbf16>
    %c0_33 = arith.constant 0 : index
    %c0_34 = arith.constant 0 : index
    %54 = vector.load %arg8[%c0_33, %c0_34] : memref<32x32xbf16, #tpu.memory_space<vmem>>, vector<32x32xbf16>
    %cst_35 = arith.constant dense<0.000000e+00> : vector<8x32xf32>
    %55 = tpu.matmul %53, %54, %cst_35 {dimension_numbers = #tpu.dot_dimension_numbers<[1], [0], [0], [1], [0, 0, 1, 1], [], []>} : vector<8x32xbf16>, vector<32x32xbf16>, vector<8x32xf32> -> vector<8x32xf32>
    %c0_36 = arith.constant 0 : index
    %c0_37 = arith.constant 0 : index
    %56 = vector.load %arg9[%c0_36, %c0_37] : memref<1x32xf32, #tpu.memory_space<vmem>>, vector<1x32xf32>
    %57 = vector.broadcast %56 : vector<1x32xf32> to vector<8x32xf32>
    %58 = arith.addf %55, %57 : vector<8x32xf32>
    %59 = arith.index_cast %c0_i32_19 : i32 to index
    %c0_38 = arith.constant 0 : index
    %c0_39 = arith.constant 0 : index
    %60 = vector.load %arg19[%59, %c0_38, %c0_39] : memref<8x8x32xf32, #tpu.memory_space<vmem>>, vector<1x8x32xf32>
    %61 = vector.shape_cast %60 : vector<1x8x32xf32> to vector<8x32xf32>
    %62 = arith.mulf %61, %58 : vector<8x32xf32>
    %63 = arith.addf %22, %62 : vector<8x32xf32>
    %64 = arith.index_cast %c0_i32_19 : i32 to index
    %c0_40 = arith.constant 0 : index
    %c0_41 = arith.constant 0 : index
    %65 = vector.load %arg2[%64, %c0_40, %c0_41] : memref<8x8x4xf32, #tpu.memory_space<vmem>>, vector<1x8x4xf32>
    %66 = vector.shape_cast %65 : vector<1x8x4xf32> to vector<8x4xf32>
    %67 = arith.truncf %63 : vector<8x32xf32> to vector<8x32xbf16>
    %c0_42 = arith.constant 0 : index
    %c0_43 = arith.constant 0 : index
    %68 = vector.load %arg12[%c0_42, %c0_43] : memref<32x128xbf16, #tpu.memory_space<vmem>>, vector<32x128xbf16>
    %cst_44 = arith.constant dense<0.000000e+00> : vector<8x128xf32>
    %69 = tpu.matmul %67, %68, %cst_44 {dimension_numbers = #tpu.dot_dimension_numbers<[1], [0], [0], [1], [0, 0, 1, 1], [], []>} : vector<8x32xbf16>, vector<32x128xbf16>, vector<8x128xf32> -> vector<8x128xf32>
    %c0_45 = arith.constant 0 : index
    %c0_46 = arith.constant 0 : index
    %70 = vector.load %arg13[%c0_45, %c0_46] : memref<1x128xf32, #tpu.memory_space<vmem>>, vector<1x128xf32>
    %71 = vector.broadcast %70 : vector<1x128xf32> to vector<8x128xf32>
    %72 = arith.addf %69, %71 : vector<8x128xf32>
    %73 = vector.extract_strided_slice %66 {offsets = [0, 0], sizes = [8, 1], strides = [1, 1]} : vector<8x4xf32> to vector<8x1xf32>
    %c0_47 = arith.constant 0 : index
    %c0_48 = arith.constant 0 : index
    %74 = vector.load %arg11[%c0_47, %c0_48] : memref<4x128xf32, #tpu.memory_space<vmem>>, vector<1x128xf32>
    %75 = vector.broadcast %73 : vector<8x1xf32> to vector<8x128xf32>
    %76 = vector.broadcast %74 : vector<1x128xf32> to vector<8x128xf32>
    %77 = arith.mulf %75, %76 : vector<8x128xf32>
    %78 = arith.addf %72, %77 : vector<8x128xf32>
    %79 = vector.extract_strided_slice %66 {offsets = [0, 1], sizes = [8, 1], strides = [1, 1]} : vector<8x4xf32> to vector<8x1xf32>
    %c1 = arith.constant 1 : index
    %c0_49 = arith.constant 0 : index
    %80 = vector.load %arg11[%c1, %c0_49] : memref<4x128xf32, #tpu.memory_space<vmem>>, vector<1x128xf32>
    %81 = vector.broadcast %79 : vector<8x1xf32> to vector<8x128xf32>
    %82 = vector.broadcast %80 : vector<1x128xf32> to vector<8x128xf32>
    %83 = arith.mulf %81, %82 : vector<8x128xf32>
    %84 = arith.addf %78, %83 : vector<8x128xf32>
    %85 = vector.extract_strided_slice %66 {offsets = [0, 2], sizes = [8, 1], strides = [1, 1]} : vector<8x4xf32> to vector<8x1xf32>
    %c2 = arith.constant 2 : index
    %c0_50 = arith.constant 0 : index
    %86 = vector.load %arg11[%c2, %c0_50] : memref<4x128xf32, #tpu.memory_space<vmem>>, vector<1x128xf32>
    %87 = vector.broadcast %85 : vector<8x1xf32> to vector<8x128xf32>
    %88 = vector.broadcast %86 : vector<1x128xf32> to vector<8x128xf32>
    %89 = arith.mulf %87, %88 : vector<8x128xf32>
    %90 = arith.addf %84, %89 : vector<8x128xf32>
    %91 = vector.extract_strided_slice %66 {offsets = [0, 3], sizes = [8, 1], strides = [1, 1]} : vector<8x4xf32> to vector<8x1xf32>
    %c3 = arith.constant 3 : index
    %c0_51 = arith.constant 0 : index
    %92 = vector.load %arg11[%c3, %c0_51] : memref<4x128xf32, #tpu.memory_space<vmem>>, vector<1x128xf32>
    %93 = vector.broadcast %91 : vector<8x1xf32> to vector<8x128xf32>
    %94 = vector.broadcast %92 : vector<1x128xf32> to vector<8x128xf32>
    %95 = arith.mulf %93, %94 : vector<8x128xf32>
    %96 = arith.addf %90, %95 : vector<8x128xf32>
    %97 = arith.negf %96 : vector<8x128xf32>
    %98 = math.exp %97 : vector<8x128xf32>
    %cst_52 = arith.constant 1.000000e+00 : f32
    %99 = vector.broadcast %cst_52 : f32 to vector<8x128xf32>
    %100 = arith.addf %99, %98 : vector<8x128xf32>
    %101 = arith.divf %99, %100 : vector<8x128xf32>
    %102 = math.tanh %96 : vector<8x128xf32>
    %103 = vector.extract_strided_slice %101 {offsets = [0, 0], sizes = [8, 32], strides = [1, 1]} : vector<8x128xf32> to vector<8x32xf32>
    %104 = vector.extract_strided_slice %101 {offsets = [0, 32], sizes = [8, 32], strides = [1, 1]} : vector<8x128xf32> to vector<8x32xf32>
    %105 = vector.extract_strided_slice %102 {offsets = [0, 64], sizes = [8, 32], strides = [1, 1]} : vector<8x128xf32> to vector<8x32xf32>
    %106 = vector.extract_strided_slice %101 {offsets = [0, 96], sizes = [8, 32], strides = [1, 1]} : vector<8x128xf32> to vector<8x32xf32>
    %107 = arith.mulf %104, %23 : vector<8x32xf32>
    %108 = arith.mulf %103, %105 : vector<8x32xf32>
    %109 = arith.addf %107, %108 : vector<8x32xf32>
    %110 = math.tanh %109 : vector<8x32xf32>
    %111 = arith.mulf %106, %110 : vector<8x32xf32>
    %c1_i32 = arith.constant 1 : i32
    %112 = arith.truncf %111 : vector<8x32xf32> to vector<8x32xbf16>
    %c0_53 = arith.constant 0 : index
    %c0_54 = arith.constant 0 : index
    %113 = vector.load %arg3[%c0_53, %c0_54] : memref<32x32xbf16, #tpu.memory_space<vmem>>, vector<32x32xbf16>
    %cst_55 = arith.constant dense<0.000000e+00> : vector<8x32xf32>
    %114 = tpu.matmul %112, %113, %cst_55 {dimension_numbers = #tpu.dot_dimension_numbers<[1], [0], [0], [1], [0, 0, 1, 1], [], []>} : vector<8x32xbf16>, vector<32x32xbf16>, vector<8x32xf32> -> vector<8x32xf32>
    %115 = arith.index_cast %c1_i32 : i32 to index
    %c0_56 = arith.constant 0 : index
    %c0_57 = arith.constant 0 : index
    %116 = vector.load %arg18[%115, %c0_56, %c0_57] : memref<8x8x32xf32, #tpu.memory_space<vmem>>, vector<1x8x32xf32>
    %117 = vector.shape_cast %116 : vector<1x8x32xf32> to vector<8x32xf32>
    %118 = arith.addf %114, %117 : vector<8x32xf32>
    %cst_58 = arith.constant 0.908999979 : f32
    %119 = vector.broadcast %cst_58 : f32 to vector<8x32xf32>
    %120 = arith.mulf %119, %118 : vector<8x32xf32>
    %121 = arith.negf %118 : vector<8x32xf32>
    %122 = math.exp %121 : vector<8x32xf32>
    %cst_59 = arith.constant 1.000000e+00 : f32
    %123 = vector.broadcast %cst_59 : f32 to vector<8x32xf32>
    %124 = arith.addf %123, %122 : vector<8x32xf32>
    %125 = arith.divf %123, %124 : vector<8x32xf32>
    %126 = arith.mulf %120, %125 : vector<8x32xf32>
    %127 = arith.truncf %126 : vector<8x32xf32> to vector<8x32xbf16>
    %c0_60 = arith.constant 0 : index
    %c0_61 = arith.constant 0 : index
    %128 = vector.load %arg6[%c0_60, %c0_61] : memref<32x32xbf16, #tpu.memory_space<vmem>>, vector<32x32xbf16>
    %cst_62 = arith.constant dense<0.000000e+00> : vector<8x32xf32>
    %129 = tpu.matmul %127, %128, %cst_62 {dimension_numbers = #tpu.dot_dimension_numbers<[1], [0], [0], [1], [0, 0, 1, 1], [], []>} : vector<8x32xbf16>, vector<32x32xbf16>, vector<8x32xf32> -> vector<8x32xf32>
    %c0_63 = arith.constant 0 : index
    %c0_64 = arith.constant 0 : index
    %130 = vector.load %arg7[%c0_63, %c0_64] : memref<1x32xf32, #tpu.memory_space<vmem>>, vector<1x32xf32>
    %131 = vector.broadcast %130 : vector<1x32xf32> to vector<8x32xf32>
    %132 = arith.addf %129, %131 : vector<8x32xf32>
    %cst_65 = arith.constant 0.908999979 : f32
    %133 = vector.broadcast %cst_65 : f32 to vector<8x32xf32>
    %134 = arith.mulf %133, %132 : vector<8x32xf32>
    %135 = arith.negf %132 : vector<8x32xf32>
    %136 = math.exp %135 : vector<8x32xf32>
    %cst_66 = arith.constant 1.000000e+00 : f32
    %137 = vector.broadcast %cst_66 : f32 to vector<8x32xf32>
    %138 = arith.addf %137, %136 : vector<8x32xf32>
    %139 = arith.divf %137, %138 : vector<8x32xf32>
    %140 = arith.mulf %134, %139 : vector<8x32xf32>
    %141 = arith.truncf %140 : vector<8x32xf32> to vector<8x32xbf16>
    %c0_67 = arith.constant 0 : index
    %c0_68 = arith.constant 0 : index
    %142 = vector.load %arg8[%c0_67, %c0_68] : memref<32x32xbf16, #tpu.memory_space<vmem>>, vector<32x32xbf16>
    %cst_69 = arith.constant dense<0.000000e+00> : vector<8x32xf32>
    %143 = tpu.matmul %141, %142, %cst_69 {dimension_numbers = #tpu.dot_dimension_numbers<[1], [0], [0], [1], [0, 0, 1, 1], [], []>} : vector<8x32xbf16>, vector<32x32xbf16>, vector<8x32xf32> -> vector<8x32xf32>
    %c0_70 = arith.constant 0 : index
    %c0_71 = arith.constant 0 : index
    %144 = vector.load %arg9[%c0_70, %c0_71] : memref<1x32xf32, #tpu.memory_space<vmem>>, vector<1x32xf32>
    %145 = vector.broadcast %144 : vector<1x32xf32> to vector<8x32xf32>
    %146 = arith.addf %143, %145 : vector<8x32xf32>
    %147 = arith.index_cast %c1_i32 : i32 to index
    %c0_72 = arith.constant 0 : index
    %c0_73 = arith.constant 0 : index
    %148 = vector.load %arg19[%147, %c0_72, %c0_73] : memref<8x8x32xf32, #tpu.memory_space<vmem>>, vector<1x8x32xf32>
    %149 = vector.shape_cast %148 : vector<1x8x32xf32> to vector<8x32xf32>
    %150 = arith.mulf %149, %146 : vector<8x32xf32>
    %151 = arith.addf %111, %150 : vector<8x32xf32>
    %152 = arith.index_cast %c1_i32 : i32 to index
    %c0_74 = arith.constant 0 : index
    %c0_75 = arith.constant 0 : index
    %153 = vector.load %arg2[%152, %c0_74, %c0_75] : memref<8x8x4xf32, #tpu.memory_space<vmem>>, vector<1x8x4xf32>
    %154 = vector.shape_cast %153 : vector<1x8x4xf32> to vector<8x4xf32>
    %155 = arith.truncf %151 : vector<8x32xf32> to vector<8x32xbf16>
    %c0_76 = arith.constant 0 : index
    %c0_77 = arith.constant 0 : index
    %156 = vector.load %arg12[%c0_76, %c0_77] : memref<32x128xbf16, #tpu.memory_space<vmem>>, vector<32x128xbf16>
    %cst_78 = arith.constant dense<0.000000e+00> : vector<8x128xf32>
    %157 = tpu.matmul %155, %156, %cst_78 {dimension_numbers = #tpu.dot_dimension_numbers<[1], [0], [0], [1], [0, 0, 1, 1], [], []>} : vector<8x32xbf16>, vector<32x128xbf16>, vector<8x128xf32> -> vector<8x128xf32>
    %c0_79 = arith.constant 0 : index
    %c0_80 = arith.constant 0 : index
    %158 = vector.load %arg13[%c0_79, %c0_80] : memref<1x128xf32, #tpu.memory_space<vmem>>, vector<1x128xf32>
    %159 = vector.broadcast %158 : vector<1x128xf32> to vector<8x128xf32>
    %160 = arith.addf %157, %159 : vector<8x128xf32>
    %161 = vector.extract_strided_slice %154 {offsets = [0, 0], sizes = [8, 1], strides = [1, 1]} : vector<8x4xf32> to vector<8x1xf32>
    %c0_81 = arith.constant 0 : index
    %c0_82 = arith.constant 0 : index
    %162 = vector.load %arg11[%c0_81, %c0_82] : memref<4x128xf32, #tpu.memory_space<vmem>>, vector<1x128xf32>
    %163 = vector.broadcast %161 : vector<8x1xf32> to vector<8x128xf32>
    %164 = vector.broadcast %162 : vector<1x128xf32> to vector<8x128xf32>
    %165 = arith.mulf %163, %164 : vector<8x128xf32>
    %166 = arith.addf %160, %165 : vector<8x128xf32>
    %167 = vector.extract_strided_slice %154 {offsets = [0, 1], sizes = [8, 1], strides = [1, 1]} : vector<8x4xf32> to vector<8x1xf32>
    %c1_83 = arith.constant 1 : index
    %c0_84 = arith.constant 0 : index
    %168 = vector.load %arg11[%c1_83, %c0_84] : memref<4x128xf32, #tpu.memory_space<vmem>>, vector<1x128xf32>
    %169 = vector.broadcast %167 : vector<8x1xf32> to vector<8x128xf32>
    %170 = vector.broadcast %168 : vector<1x128xf32> to vector<8x128xf32>
    %171 = arith.mulf %169, %170 : vector<8x128xf32>
    %172 = arith.addf %166, %171 : vector<8x128xf32>
    %173 = vector.extract_strided_slice %154 {offsets = [0, 2], sizes = [8, 1], strides = [1, 1]} : vector<8x4xf32> to vector<8x1xf32>
    %c2_85 = arith.constant 2 : index
    %c0_86 = arith.constant 0 : index
    %174 = vector.load %arg11[%c2_85, %c0_86] : memref<4x128xf32, #tpu.memory_space<vmem>>, vector<1x128xf32>
    %175 = vector.broadcast %173 : vector<8x1xf32> to vector<8x128xf32>
    %176 = vector.broadcast %174 : vector<1x128xf32> to vector<8x128xf32>
    %177 = arith.mulf %175, %176 : vector<8x128xf32>
    %178 = arith.addf %172, %177 : vector<8x128xf32>
    %179 = vector.extract_strided_slice %154 {offsets = [0, 3], sizes = [8, 1], strides = [1, 1]} : vector<8x4xf32> to vector<8x1xf32>
    %c3_87 = arith.constant 3 : index
    %c0_88 = arith.constant 0 : index
    %180 = vector.load %arg11[%c3_87, %c0_88] : memref<4x128xf32, #tpu.memory_space<vmem>>, vector<1x128xf32>
    %181 = vector.broadcast %179 : vector<8x1xf32> to vector<8x128xf32>
    %182 = vector.broadcast %180 : vector<1x128xf32> to vector<8x128xf32>
    %183 = arith.mulf %181, %182 : vector<8x128xf32>
    %184 = arith.addf %178, %183 : vector<8x128xf32>
    %185 = arith.negf %184 : vector<8x128xf32>
    %186 = math.exp %185 : vector<8x128xf32>
    %cst_89 = arith.constant 1.000000e+00 : f32
    %187 = vector.broadcast %cst_89 : f32 to vector<8x128xf32>
    %188 = arith.addf %187, %186 : vector<8x128xf32>
    %189 = arith.divf %187, %188 : vector<8x128xf32>
    %190 = math.tanh %184 : vector<8x128xf32>
    %191 = vector.extract_strided_slice %189 {offsets = [0, 0], sizes = [8, 32], strides = [1, 1]} : vector<8x128xf32> to vector<8x32xf32>
    %192 = vector.extract_strided_slice %189 {offsets = [0, 32], sizes = [8, 32], strides = [1, 1]} : vector<8x128xf32> to vector<8x32xf32>
    %193 = vector.extract_strided_slice %190 {offsets = [0, 64], sizes = [8, 32], strides = [1, 1]} : vector<8x128xf32> to vector<8x32xf32>
    %194 = vector.extract_strided_slice %189 {offsets = [0, 96], sizes = [8, 32], strides = [1, 1]} : vector<8x128xf32> to vector<8x32xf32>
    %195 = arith.mulf %192, %109 : vector<8x32xf32>
    %196 = arith.mulf %191, %193 : vector<8x32xf32>
    %197 = arith.addf %195, %196 : vector<8x32xf32>
    %198 = math.tanh %197 : vector<8x32xf32>
    %199 = arith.mulf %194, %198 : vector<8x32xf32>
    %c2_i32 = arith.constant 2 : i32
    %200 = arith.truncf %199 : vector<8x32xf32> to vector<8x32xbf16>
    %c0_90 = arith.constant 0 : index
    %c0_91 = arith.constant 0 : index
    %201 = vector.load %arg3[%c0_90, %c0_91] : memref<32x32xbf16, #tpu.memory_space<vmem>>, vector<32x32xbf16>
    %cst_92 = arith.constant dense<0.000000e+00> : vector<8x32xf32>
    %202 = tpu.matmul %200, %201, %cst_92 {dimension_numbers = #tpu.dot_dimension_numbers<[1], [0], [0], [1], [0, 0, 1, 1], [], []>} : vector<8x32xbf16>, vector<32x32xbf16>, vector<8x32xf32> -> vector<8x32xf32>
    %203 = arith.index_cast %c2_i32 : i32 to index
    %c0_93 = arith.constant 0 : index
    %c0_94 = arith.constant 0 : index
    %204 = vector.load %arg18[%203, %c0_93, %c0_94] : memref<8x8x32xf32, #tpu.memory_space<vmem>>, vector<1x8x32xf32>
    %205 = vector.shape_cast %204 : vector<1x8x32xf32> to vector<8x32xf32>
    %206 = arith.addf %202, %205 : vector<8x32xf32>
    %cst_95 = arith.constant 0.908999979 : f32
    %207 = vector.broadcast %cst_95 : f32 to vector<8x32xf32>
    %208 = arith.mulf %207, %206 : vector<8x32xf32>
    %209 = arith.negf %206 : vector<8x32xf32>
    %210 = math.exp %209 : vector<8x32xf32>
    %cst_96 = arith.constant 1.000000e+00 : f32
    %211 = vector.broadcast %cst_96 : f32 to vector<8x32xf32>
    %212 = arith.addf %211, %210 : vector<8x32xf32>
    %213 = arith.divf %211, %212 : vector<8x32xf32>
    %214 = arith.mulf %208, %213 : vector<8x32xf32>
    %215 = arith.truncf %214 : vector<8x32xf32> to vector<8x32xbf16>
    %c0_97 = arith.constant 0 : index
    %c0_98 = arith.constant 0 : index
    %216 = vector.load %arg6[%c0_97, %c0_98] : memref<32x32xbf16, #tpu.memory_space<vmem>>, vector<32x32xbf16>
    %cst_99 = arith.constant dense<0.000000e+00> : vector<8x32xf32>
    %217 = tpu.matmul %215, %216, %cst_99 {dimension_numbers = #tpu.dot_dimension_numbers<[1], [0], [0], [1], [0, 0, 1, 1], [], []>} : vector<8x32xbf16>, vector<32x32xbf16>, vector<8x32xf32> -> vector<8x32xf32>
    %c0_100 = arith.constant 0 : index
    %c0_101 = arith.constant 0 : index
    %218 = vector.load %arg7[%c0_100, %c0_101] : memref<1x32xf32, #tpu.memory_space<vmem>>, vector<1x32xf32>
    %219 = vector.broadcast %218 : vector<1x32xf32> to vector<8x32xf32>
    %220 = arith.addf %217, %219 : vector<8x32xf32>
    %cst_102 = arith.constant 0.908999979 : f32
    %221 = vector.broadcast %cst_102 : f32 to vector<8x32xf32>
    %222 = arith.mulf %221, %220 : vector<8x32xf32>
    %223 = arith.negf %220 : vector<8x32xf32>
    %224 = math.exp %223 : vector<8x32xf32>
    %cst_103 = arith.constant 1.000000e+00 : f32
    %225 = vector.broadcast %cst_103 : f32 to vector<8x32xf32>
    %226 = arith.addf %225, %224 : vector<8x32xf32>
    %227 = arith.divf %225, %226 : vector<8x32xf32>
    %228 = arith.mulf %222, %227 : vector<8x32xf32>
    %229 = arith.truncf %228 : vector<8x32xf32> to vector<8x32xbf16>
    %c0_104 = arith.constant 0 : index
    %c0_105 = arith.constant 0 : index
    %230 = vector.load %arg8[%c0_104, %c0_105] : memref<32x32xbf16, #tpu.memory_space<vmem>>, vector<32x32xbf16>
    %cst_106 = arith.constant dense<0.000000e+00> : vector<8x32xf32>
    %231 = tpu.matmul %229, %230, %cst_106 {dimension_numbers = #tpu.dot_dimension_numbers<[1], [0], [0], [1], [0, 0, 1, 1], [], []>} : vector<8x32xbf16>, vector<32x32xbf16>, vector<8x32xf32> -> vector<8x32xf32>
    %c0_107 = arith.constant 0 : index
    %c0_108 = arith.constant 0 : index
    %232 = vector.load %arg9[%c0_107, %c0_108] : memref<1x32xf32, #tpu.memory_space<vmem>>, vector<1x32xf32>
    %233 = vector.broadcast %232 : vector<1x32xf32> to vector<8x32xf32>
    %234 = arith.addf %231, %233 : vector<8x32xf32>
    %235 = arith.index_cast %c2_i32 : i32 to index
    %c0_109 = arith.constant 0 : index
    %c0_110 = arith.constant 0 : index
    %236 = vector.load %arg19[%235, %c0_109, %c0_110] : memref<8x8x32xf32, #tpu.memory_space<vmem>>, vector<1x8x32xf32>
    %237 = vector.shape_cast %236 : vector<1x8x32xf32> to vector<8x32xf32>
    %238 = arith.mulf %237, %234 : vector<8x32xf32>
    %239 = arith.addf %199, %238 : vector<8x32xf32>
    %240 = arith.index_cast %c2_i32 : i32 to index
    %c0_111 = arith.constant 0 : index
    %c0_112 = arith.constant 0 : index
    %241 = vector.load %arg2[%240, %c0_111, %c0_112] : memref<8x8x4xf32, #tpu.memory_space<vmem>>, vector<1x8x4xf32>
    %242 = vector.shape_cast %241 : vector<1x8x4xf32> to vector<8x4xf32>
    %243 = arith.truncf %239 : vector<8x32xf32> to vector<8x32xbf16>
    %c0_113 = arith.constant 0 : index
    %c0_114 = arith.constant 0 : index
    %244 = vector.load %arg12[%c0_113, %c0_114] : memref<32x128xbf16, #tpu.memory_space<vmem>>, vector<32x128xbf16>
    %cst_115 = arith.constant dense<0.000000e+00> : vector<8x128xf32>
    %245 = tpu.matmul %243, %244, %cst_115 {dimension_numbers = #tpu.dot_dimension_numbers<[1], [0], [0], [1], [0, 0, 1, 1], [], []>} : vector<8x32xbf16>, vector<32x128xbf16>, vector<8x128xf32> -> vector<8x128xf32>
    %c0_116 = arith.constant 0 : index
    %c0_117 = arith.constant 0 : index
    %246 = vector.load %arg13[%c0_116, %c0_117] : memref<1x128xf32, #tpu.memory_space<vmem>>, vector<1x128xf32>
    %247 = vector.broadcast %246 : vector<1x128xf32> to vector<8x128xf32>
    %248 = arith.addf %245, %247 : vector<8x128xf32>
    %249 = vector.extract_strided_slice %242 {offsets = [0, 0], sizes = [8, 1], strides = [1, 1]} : vector<8x4xf32> to vector<8x1xf32>
    %c0_118 = arith.constant 0 : index
    %c0_119 = arith.constant 0 : index
    %250 = vector.load %arg11[%c0_118, %c0_119] : memref<4x128xf32, #tpu.memory_space<vmem>>, vector<1x128xf32>
    %251 = vector.broadcast %249 : vector<8x1xf32> to vector<8x128xf32>
    %252 = vector.broadcast %250 : vector<1x128xf32> to vector<8x128xf32>
    %253 = arith.mulf %251, %252 : vector<8x128xf32>
    %254 = arith.addf %248, %253 : vector<8x128xf32>
    %255 = vector.extract_strided_slice %242 {offsets = [0, 1], sizes = [8, 1], strides = [1, 1]} : vector<8x4xf32> to vector<8x1xf32>
    %c1_120 = arith.constant 1 : index
    %c0_121 = arith.constant 0 : index
    %256 = vector.load %arg11[%c1_120, %c0_121] : memref<4x128xf32, #tpu.memory_space<vmem>>, vector<1x128xf32>
    %257 = vector.broadcast %255 : vector<8x1xf32> to vector<8x128xf32>
    %258 = vector.broadcast %256 : vector<1x128xf32> to vector<8x128xf32>
    %259 = arith.mulf %257, %258 : vector<8x128xf32>
    %260 = arith.addf %254, %259 : vector<8x128xf32>
    %261 = vector.extract_strided_slice %242 {offsets = [0, 2], sizes = [8, 1], strides = [1, 1]} : vector<8x4xf32> to vector<8x1xf32>
    %c2_122 = arith.constant 2 : index
    %c0_123 = arith.constant 0 : index
    %262 = vector.load %arg11[%c2_122, %c0_123] : memref<4x128xf32, #tpu.memory_space<vmem>>, vector<1x128xf32>
    %263 = vector.broadcast %261 : vector<8x1xf32> to vector<8x128xf32>
    %264 = vector.broadcast %262 : vector<1x128xf32> to vector<8x128xf32>
    %265 = arith.mulf %263, %264 : vector<8x128xf32>
    %266 = arith.addf %260, %265 : vector<8x128xf32>
    %267 = vector.extract_strided_slice %242 {offsets = [0, 3], sizes = [8, 1], strides = [1, 1]} : vector<8x4xf32> to vector<8x1xf32>
    %c3_124 = arith.constant 3 : index
    %c0_125 = arith.constant 0 : index
    %268 = vector.load %arg11[%c3_124, %c0_125] : memref<4x128xf32, #tpu.memory_space<vmem>>, vector<1x128xf32>
    %269 = vector.broadcast %267 : vector<8x1xf32> to vector<8x128xf32>
    %270 = vector.broadcast %268 : vector<1x128xf32> to vector<8x128xf32>
    %271 = arith.mulf %269, %270 : vector<8x128xf32>
    %272 = arith.addf %266, %271 : vector<8x128xf32>
    %273 = arith.negf %272 : vector<8x128xf32>
    %274 = math.exp %273 : vector<8x128xf32>
    %cst_126 = arith.constant 1.000000e+00 : f32
    %275 = vector.broadcast %cst_126 : f32 to vector<8x128xf32>
    %276 = arith.addf %275, %274 : vector<8x128xf32>
    %277 = arith.divf %275, %276 : vector<8x128xf32>
    %278 = math.tanh %272 : vector<8x128xf32>
    %279 = vector.extract_strided_slice %277 {offsets = [0, 0], sizes = [8, 32], strides = [1, 1]} : vector<8x128xf32> to vector<8x32xf32>
    %280 = vector.extract_strided_slice %277 {offsets = [0, 32], sizes = [8, 32], strides = [1, 1]} : vector<8x128xf32> to vector<8x32xf32>
    %281 = vector.extract_strided_slice %278 {offsets = [0, 64], sizes = [8, 32], strides = [1, 1]} : vector<8x128xf32> to vector<8x32xf32>
    %282 = vector.extract_strided_slice %277 {offsets = [0, 96], sizes = [8, 32], strides = [1, 1]} : vector<8x128xf32> to vector<8x32xf32>
    %283 = arith.mulf %280, %197 : vector<8x32xf32>
    %284 = arith.mulf %279, %281 : vector<8x32xf32>
    %285 = arith.addf %283, %284 : vector<8x32xf32>
    %286 = math.tanh %285 : vector<8x32xf32>
    %287 = arith.mulf %282, %286 : vector<8x32xf32>
    %c3_i32 = arith.constant 3 : i32
    %288 = arith.truncf %287 : vector<8x32xf32> to vector<8x32xbf16>
    %c0_127 = arith.constant 0 : index
    %c0_128 = arith.constant 0 : index
    %289 = vector.load %arg3[%c0_127, %c0_128] : memref<32x32xbf16, #tpu.memory_space<vmem>>, vector<32x32xbf16>
    %cst_129 = arith.constant dense<0.000000e+00> : vector<8x32xf32>
    %290 = tpu.matmul %288, %289, %cst_129 {dimension_numbers = #tpu.dot_dimension_numbers<[1], [0], [0], [1], [0, 0, 1, 1], [], []>} : vector<8x32xbf16>, vector<32x32xbf16>, vector<8x32xf32> -> vector<8x32xf32>
    %291 = arith.index_cast %c3_i32 : i32 to index
    %c0_130 = arith.constant 0 : index
    %c0_131 = arith.constant 0 : index
    %292 = vector.load %arg18[%291, %c0_130, %c0_131] : memref<8x8x32xf32, #tpu.memory_space<vmem>>, vector<1x8x32xf32>
    %293 = vector.shape_cast %292 : vector<1x8x32xf32> to vector<8x32xf32>
    %294 = arith.addf %290, %293 : vector<8x32xf32>
    %cst_132 = arith.constant 0.908999979 : f32
    %295 = vector.broadcast %cst_132 : f32 to vector<8x32xf32>
    %296 = arith.mulf %295, %294 : vector<8x32xf32>
    %297 = arith.negf %294 : vector<8x32xf32>
    %298 = math.exp %297 : vector<8x32xf32>
    %cst_133 = arith.constant 1.000000e+00 : f32
    %299 = vector.broadcast %cst_133 : f32 to vector<8x32xf32>
    %300 = arith.addf %299, %298 : vector<8x32xf32>
    %301 = arith.divf %299, %300 : vector<8x32xf32>
    %302 = arith.mulf %296, %301 : vector<8x32xf32>
    %303 = arith.truncf %302 : vector<8x32xf32> to vector<8x32xbf16>
    %c0_134 = arith.constant 0 : index
    %c0_135 = arith.constant 0 : index
    %304 = vector.load %arg6[%c0_134, %c0_135] : memref<32x32xbf16, #tpu.memory_space<vmem>>, vector<32x32xbf16>
    %cst_136 = arith.constant dense<0.000000e+00> : vector<8x32xf32>
    %305 = tpu.matmul %303, %304, %cst_136 {dimension_numbers = #tpu.dot_dimension_numbers<[1], [0], [0], [1], [0, 0, 1, 1], [], []>} : vector<8x32xbf16>, vector<32x32xbf16>, vector<8x32xf32> -> vector<8x32xf32>
    %c0_137 = arith.constant 0 : index
    %c0_138 = arith.constant 0 : index
    %306 = vector.load %arg7[%c0_137, %c0_138] : memref<1x32xf32, #tpu.memory_space<vmem>>, vector<1x32xf32>
    %307 = vector.broadcast %306 : vector<1x32xf32> to vector<8x32xf32>
    %308 = arith.addf %305, %307 : vector<8x32xf32>
    %cst_139 = arith.constant 0.908999979 : f32
    %309 = vector.broadcast %cst_139 : f32 to vector<8x32xf32>
    %310 = arith.mulf %309, %308 : vector<8x32xf32>
    %311 = arith.negf %308 : vector<8x32xf32>
    %312 = math.exp %311 : vector<8x32xf32>
    %cst_140 = arith.constant 1.000000e+00 : f32
    %313 = vector.broadcast %cst_140 : f32 to vector<8x32xf32>
    %314 = arith.addf %313, %312 : vector<8x32xf32>
    %315 = arith.divf %313, %314 : vector<8x32xf32>
    %316 = arith.mulf %310, %315 : vector<8x32xf32>
    %317 = arith.truncf %316 : vector<8x32xf32> to vector<8x32xbf16>
    %c0_141 = arith.constant 0 : index
    %c0_142 = arith.constant 0 : index
    %318 = vector.load %arg8[%c0_141, %c0_142] : memref<32x32xbf16, #tpu.memory_space<vmem>>, vector<32x32xbf16>
    %cst_143 = arith.constant dense<0.000000e+00> : vector<8x32xf32>
    %319 = tpu.matmul %317, %318, %cst_143 {dimension_numbers = #tpu.dot_dimension_numbers<[1], [0], [0], [1], [0, 0, 1, 1], [], []>} : vector<8x32xbf16>, vector<32x32xbf16>, vector<8x32xf32> -> vector<8x32xf32>
    %c0_144 = arith.constant 0 : index
    %c0_145 = arith.constant 0 : index
    %320 = vector.load %arg9[%c0_144, %c0_145] : memref<1x32xf32, #tpu.memory_space<vmem>>, vector<1x32xf32>
    %321 = vector.broadcast %320 : vector<1x32xf32> to vector<8x32xf32>
    %322 = arith.addf %319, %321 : vector<8x32xf32>
    %323 = arith.index_cast %c3_i32 : i32 to index
    %c0_146 = arith.constant 0 : index
    %c0_147 = arith.constant 0 : index
    %324 = vector.load %arg19[%323, %c0_146, %c0_147] : memref<8x8x32xf32, #tpu.memory_space<vmem>>, vector<1x8x32xf32>
    %325 = vector.shape_cast %324 : vector<1x8x32xf32> to vector<8x32xf32>
    %326 = arith.mulf %325, %322 : vector<8x32xf32>
    %327 = arith.addf %287, %326 : vector<8x32xf32>
    %328 = arith.index_cast %c3_i32 : i32 to index
    %c0_148 = arith.constant 0 : index
    %c0_149 = arith.constant 0 : index
    %329 = vector.load %arg2[%328, %c0_148, %c0_149] : memref<8x8x4xf32, #tpu.memory_space<vmem>>, vector<1x8x4xf32>
    %330 = vector.shape_cast %329 : vector<1x8x4xf32> to vector<8x4xf32>
    %331 = arith.truncf %327 : vector<8x32xf32> to vector<8x32xbf16>
    %c0_150 = arith.constant 0 : index
    %c0_151 = arith.constant 0 : index
    %332 = vector.load %arg12[%c0_150, %c0_151] : memref<32x128xbf16, #tpu.memory_space<vmem>>, vector<32x128xbf16>
    %cst_152 = arith.constant dense<0.000000e+00> : vector<8x128xf32>
    %333 = tpu.matmul %331, %332, %cst_152 {dimension_numbers = #tpu.dot_dimension_numbers<[1], [0], [0], [1], [0, 0, 1, 1], [], []>} : vector<8x32xbf16>, vector<32x128xbf16>, vector<8x128xf32> -> vector<8x128xf32>
    %c0_153 = arith.constant 0 : index
    %c0_154 = arith.constant 0 : index
    %334 = vector.load %arg13[%c0_153, %c0_154] : memref<1x128xf32, #tpu.memory_space<vmem>>, vector<1x128xf32>
    %335 = vector.broadcast %334 : vector<1x128xf32> to vector<8x128xf32>
    %336 = arith.addf %333, %335 : vector<8x128xf32>
    %337 = vector.extract_strided_slice %330 {offsets = [0, 0], sizes = [8, 1], strides = [1, 1]} : vector<8x4xf32> to vector<8x1xf32>
    %c0_155 = arith.constant 0 : index
    %c0_156 = arith.constant 0 : index
    %338 = vector.load %arg11[%c0_155, %c0_156] : memref<4x128xf32, #tpu.memory_space<vmem>>, vector<1x128xf32>
    %339 = vector.broadcast %337 : vector<8x1xf32> to vector<8x128xf32>
    %340 = vector.broadcast %338 : vector<1x128xf32> to vector<8x128xf32>
    %341 = arith.mulf %339, %340 : vector<8x128xf32>
    %342 = arith.addf %336, %341 : vector<8x128xf32>
    %343 = vector.extract_strided_slice %330 {offsets = [0, 1], sizes = [8, 1], strides = [1, 1]} : vector<8x4xf32> to vector<8x1xf32>
    %c1_157 = arith.constant 1 : index
    %c0_158 = arith.constant 0 : index
    %344 = vector.load %arg11[%c1_157, %c0_158] : memref<4x128xf32, #tpu.memory_space<vmem>>, vector<1x128xf32>
    %345 = vector.broadcast %343 : vector<8x1xf32> to vector<8x128xf32>
    %346 = vector.broadcast %344 : vector<1x128xf32> to vector<8x128xf32>
    %347 = arith.mulf %345, %346 : vector<8x128xf32>
    %348 = arith.addf %342, %347 : vector<8x128xf32>
    %349 = vector.extract_strided_slice %330 {offsets = [0, 2], sizes = [8, 1], strides = [1, 1]} : vector<8x4xf32> to vector<8x1xf32>
    %c2_159 = arith.constant 2 : index
    %c0_160 = arith.constant 0 : index
    %350 = vector.load %arg11[%c2_159, %c0_160] : memref<4x128xf32, #tpu.memory_space<vmem>>, vector<1x128xf32>
    %351 = vector.broadcast %349 : vector<8x1xf32> to vector<8x128xf32>
    %352 = vector.broadcast %350 : vector<1x128xf32> to vector<8x128xf32>
    %353 = arith.mulf %351, %352 : vector<8x128xf32>
    %354 = arith.addf %348, %353 : vector<8x128xf32>
    %355 = vector.extract_strided_slice %330 {offsets = [0, 3], sizes = [8, 1], strides = [1, 1]} : vector<8x4xf32> to vector<8x1xf32>
    %c3_161 = arith.constant 3 : index
    %c0_162 = arith.constant 0 : index
    %356 = vector.load %arg11[%c3_161, %c0_162] : memref<4x128xf32, #tpu.memory_space<vmem>>, vector<1x128xf32>
    %357 = vector.broadcast %355 : vector<8x1xf32> to vector<8x128xf32>
    %358 = vector.broadcast %356 : vector<1x128xf32> to vector<8x128xf32>
    %359 = arith.mulf %357, %358 : vector<8x128xf32>
    %360 = arith.addf %354, %359 : vector<8x128xf32>
    %361 = arith.negf %360 : vector<8x128xf32>
    %362 = math.exp %361 : vector<8x128xf32>
    %cst_163 = arith.constant 1.000000e+00 : f32
    %363 = vector.broadcast %cst_163 : f32 to vector<8x128xf32>
    %364 = arith.addf %363, %362 : vector<8x128xf32>
    %365 = arith.divf %363, %364 : vector<8x128xf32>
    %366 = math.tanh %360 : vector<8x128xf32>
    %367 = vector.extract_strided_slice %365 {offsets = [0, 0], sizes = [8, 32], strides = [1, 1]} : vector<8x128xf32> to vector<8x32xf32>
    %368 = vector.extract_strided_slice %365 {offsets = [0, 32], sizes = [8, 32], strides = [1, 1]} : vector<8x128xf32> to vector<8x32xf32>
    %369 = vector.extract_strided_slice %366 {offsets = [0, 64], sizes = [8, 32], strides = [1, 1]} : vector<8x128xf32> to vector<8x32xf32>
    %370 = vector.extract_strided_slice %365 {offsets = [0, 96], sizes = [8, 32], strides = [1, 1]} : vector<8x128xf32> to vector<8x32xf32>
    %371 = arith.mulf %368, %285 : vector<8x32xf32>
    %372 = arith.mulf %367, %369 : vector<8x32xf32>
    %373 = arith.addf %371, %372 : vector<8x32xf32>
    %374 = math.tanh %373 : vector<8x32xf32>
    %375 = arith.mulf %370, %374 : vector<8x32xf32>
    %c4_i32 = arith.constant 4 : i32
    %376 = arith.truncf %375 : vector<8x32xf32> to vector<8x32xbf16>
    %c0_164 = arith.constant 0 : index
    %c0_165 = arith.constant 0 : index
    %377 = vector.load %arg3[%c0_164, %c0_165] : memref<32x32xbf16, #tpu.memory_space<vmem>>, vector<32x32xbf16>
    %cst_166 = arith.constant dense<0.000000e+00> : vector<8x32xf32>
    %378 = tpu.matmul %376, %377, %cst_166 {dimension_numbers = #tpu.dot_dimension_numbers<[1], [0], [0], [1], [0, 0, 1, 1], [], []>} : vector<8x32xbf16>, vector<32x32xbf16>, vector<8x32xf32> -> vector<8x32xf32>
    %379 = arith.index_cast %c4_i32 : i32 to index
    %c0_167 = arith.constant 0 : index
    %c0_168 = arith.constant 0 : index
    %380 = vector.load %arg18[%379, %c0_167, %c0_168] : memref<8x8x32xf32, #tpu.memory_space<vmem>>, vector<1x8x32xf32>
    %381 = vector.shape_cast %380 : vector<1x8x32xf32> to vector<8x32xf32>
    %382 = arith.addf %378, %381 : vector<8x32xf32>
    %cst_169 = arith.constant 0.908999979 : f32
    %383 = vector.broadcast %cst_169 : f32 to vector<8x32xf32>
    %384 = arith.mulf %383, %382 : vector<8x32xf32>
    %385 = arith.negf %382 : vector<8x32xf32>
    %386 = math.exp %385 : vector<8x32xf32>
    %cst_170 = arith.constant 1.000000e+00 : f32
    %387 = vector.broadcast %cst_170 : f32 to vector<8x32xf32>
    %388 = arith.addf %387, %386 : vector<8x32xf32>
    %389 = arith.divf %387, %388 : vector<8x32xf32>
    %390 = arith.mulf %384, %389 : vector<8x32xf32>
    %391 = arith.truncf %390 : vector<8x32xf32> to vector<8x32xbf16>
    %c0_171 = arith.constant 0 : index
    %c0_172 = arith.constant 0 : index
    %392 = vector.load %arg6[%c0_171, %c0_172] : memref<32x32xbf16, #tpu.memory_space<vmem>>, vector<32x32xbf16>
    %cst_173 = arith.constant dense<0.000000e+00> : vector<8x32xf32>
    %393 = tpu.matmul %391, %392, %cst_173 {dimension_numbers = #tpu.dot_dimension_numbers<[1], [0], [0], [1], [0, 0, 1, 1], [], []>} : vector<8x32xbf16>, vector<32x32xbf16>, vector<8x32xf32> -> vector<8x32xf32>
    %c0_174 = arith.constant 0 : index
    %c0_175 = arith.constant 0 : index
    %394 = vector.load %arg7[%c0_174, %c0_175] : memref<1x32xf32, #tpu.memory_space<vmem>>, vector<1x32xf32>
    %395 = vector.broadcast %394 : vector<1x32xf32> to vector<8x32xf32>
    %396 = arith.addf %393, %395 : vector<8x32xf32>
    %cst_176 = arith.constant 0.908999979 : f32
    %397 = vector.broadcast %cst_176 : f32 to vector<8x32xf32>
    %398 = arith.mulf %397, %396 : vector<8x32xf32>
    %399 = arith.negf %396 : vector<8x32xf32>
    %400 = math.exp %399 : vector<8x32xf32>
    %cst_177 = arith.constant 1.000000e+00 : f32
    %401 = vector.broadcast %cst_177 : f32 to vector<8x32xf32>
    %402 = arith.addf %401, %400 : vector<8x32xf32>
    %403 = arith.divf %401, %402 : vector<8x32xf32>
    %404 = arith.mulf %398, %403 : vector<8x32xf32>
    %405 = arith.truncf %404 : vector<8x32xf32> to vector<8x32xbf16>
    %c0_178 = arith.constant 0 : index
    %c0_179 = arith.constant 0 : index
    %406 = vector.load %arg8[%c0_178, %c0_179] : memref<32x32xbf16, #tpu.memory_space<vmem>>, vector<32x32xbf16>
    %cst_180 = arith.constant dense<0.000000e+00> : vector<8x32xf32>
    %407 = tpu.matmul %405, %406, %cst_180 {dimension_numbers = #tpu.dot_dimension_numbers<[1], [0], [0], [1], [0, 0, 1, 1], [], []>} : vector<8x32xbf16>, vector<32x32xbf16>, vector<8x32xf32> -> vector<8x32xf32>
    %c0_181 = arith.constant 0 : index
    %c0_182 = arith.constant 0 : index
    %408 = vector.load %arg9[%c0_181, %c0_182] : memref<1x32xf32, #tpu.memory_space<vmem>>, vector<1x32xf32>
    %409 = vector.broadcast %408 : vector<1x32xf32> to vector<8x32xf32>
    %410 = arith.addf %407, %409 : vector<8x32xf32>
    %411 = arith.index_cast %c4_i32 : i32 to index
    %c0_183 = arith.constant 0 : index
    %c0_184 = arith.constant 0 : index
    %412 = vector.load %arg19[%411, %c0_183, %c0_184] : memref<8x8x32xf32, #tpu.memory_space<vmem>>, vector<1x8x32xf32>
    %413 = vector.shape_cast %412 : vector<1x8x32xf32> to vector<8x32xf32>
    %414 = arith.mulf %413, %410 : vector<8x32xf32>
    %415 = arith.addf %375, %414 : vector<8x32xf32>
    %416 = arith.index_cast %c4_i32 : i32 to index
    %c0_185 = arith.constant 0 : index
    %c0_186 = arith.constant 0 : index
    %417 = vector.load %arg2[%416, %c0_185, %c0_186] : memref<8x8x4xf32, #tpu.memory_space<vmem>>, vector<1x8x4xf32>
    %418 = vector.shape_cast %417 : vector<1x8x4xf32> to vector<8x4xf32>
    %419 = arith.truncf %415 : vector<8x32xf32> to vector<8x32xbf16>
    %c0_187 = arith.constant 0 : index
    %c0_188 = arith.constant 0 : index
    %420 = vector.load %arg12[%c0_187, %c0_188] : memref<32x128xbf16, #tpu.memory_space<vmem>>, vector<32x128xbf16>
    %cst_189 = arith.constant dense<0.000000e+00> : vector<8x128xf32>
    %421 = tpu.matmul %419, %420, %cst_189 {dimension_numbers = #tpu.dot_dimension_numbers<[1], [0], [0], [1], [0, 0, 1, 1], [], []>} : vector<8x32xbf16>, vector<32x128xbf16>, vector<8x128xf32> -> vector<8x128xf32>
    %c0_190 = arith.constant 0 : index
    %c0_191 = arith.constant 0 : index
    %422 = vector.load %arg13[%c0_190, %c0_191] : memref<1x128xf32, #tpu.memory_space<vmem>>, vector<1x128xf32>
    %423 = vector.broadcast %422 : vector<1x128xf32> to vector<8x128xf32>
    %424 = arith.addf %421, %423 : vector<8x128xf32>
    %425 = vector.extract_strided_slice %418 {offsets = [0, 0], sizes = [8, 1], strides = [1, 1]} : vector<8x4xf32> to vector<8x1xf32>
    %c0_192 = arith.constant 0 : index
    %c0_193 = arith.constant 0 : index
    %426 = vector.load %arg11[%c0_192, %c0_193] : memref<4x128xf32, #tpu.memory_space<vmem>>, vector<1x128xf32>
    %427 = vector.broadcast %425 : vector<8x1xf32> to vector<8x128xf32>
    %428 = vector.broadcast %426 : vector<1x128xf32> to vector<8x128xf32>
    %429 = arith.mulf %427, %428 : vector<8x128xf32>
    %430 = arith.addf %424, %429 : vector<8x128xf32>
    %431 = vector.extract_strided_slice %418 {offsets = [0, 1], sizes = [8, 1], strides = [1, 1]} : vector<8x4xf32> to vector<8x1xf32>
    %c1_194 = arith.constant 1 : index
    %c0_195 = arith.constant 0 : index
    %432 = vector.load %arg11[%c1_194, %c0_195] : memref<4x128xf32, #tpu.memory_space<vmem>>, vector<1x128xf32>
    %433 = vector.broadcast %431 : vector<8x1xf32> to vector<8x128xf32>
    %434 = vector.broadcast %432 : vector<1x128xf32> to vector<8x128xf32>
    %435 = arith.mulf %433, %434 : vector<8x128xf32>
    %436 = arith.addf %430, %435 : vector<8x128xf32>
    %437 = vector.extract_strided_slice %418 {offsets = [0, 2], sizes = [8, 1], strides = [1, 1]} : vector<8x4xf32> to vector<8x1xf32>
    %c2_196 = arith.constant 2 : index
    %c0_197 = arith.constant 0 : index
    %438 = vector.load %arg11[%c2_196, %c0_197] : memref<4x128xf32, #tpu.memory_space<vmem>>, vector<1x128xf32>
    %439 = vector.broadcast %437 : vector<8x1xf32> to vector<8x128xf32>
    %440 = vector.broadcast %438 : vector<1x128xf32> to vector<8x128xf32>
    %441 = arith.mulf %439, %440 : vector<8x128xf32>
    %442 = arith.addf %436, %441 : vector<8x128xf32>
    %443 = vector.extract_strided_slice %418 {offsets = [0, 3], sizes = [8, 1], strides = [1, 1]} : vector<8x4xf32> to vector<8x1xf32>
    %c3_198 = arith.constant 3 : index
    %c0_199 = arith.constant 0 : index
    %444 = vector.load %arg11[%c3_198, %c0_199] : memref<4x128xf32, #tpu.memory_space<vmem>>, vector<1x128xf32>
    %445 = vector.broadcast %443 : vector<8x1xf32> to vector<8x128xf32>
    %446 = vector.broadcast %444 : vector<1x128xf32> to vector<8x128xf32>
    %447 = arith.mulf %445, %446 : vector<8x128xf32>
    %448 = arith.addf %442, %447 : vector<8x128xf32>
    %449 = arith.negf %448 : vector<8x128xf32>
    %450 = math.exp %449 : vector<8x128xf32>
    %cst_200 = arith.constant 1.000000e+00 : f32
    %451 = vector.broadcast %cst_200 : f32 to vector<8x128xf32>
    %452 = arith.addf %451, %450 : vector<8x128xf32>
    %453 = arith.divf %451, %452 : vector<8x128xf32>
    %454 = math.tanh %448 : vector<8x128xf32>
    %455 = vector.extract_strided_slice %453 {offsets = [0, 0], sizes = [8, 32], strides = [1, 1]} : vector<8x128xf32> to vector<8x32xf32>
    %456 = vector.extract_strided_slice %453 {offsets = [0, 32], sizes = [8, 32], strides = [1, 1]} : vector<8x128xf32> to vector<8x32xf32>
    %457 = vector.extract_strided_slice %454 {offsets = [0, 64], sizes = [8, 32], strides = [1, 1]} : vector<8x128xf32> to vector<8x32xf32>
    %458 = vector.extract_strided_slice %453 {offsets = [0, 96], sizes = [8, 32], strides = [1, 1]} : vector<8x128xf32> to vector<8x32xf32>
    %459 = arith.mulf %456, %373 : vector<8x32xf32>
    %460 = arith.mulf %455, %457 : vector<8x32xf32>
    %461 = arith.addf %459, %460 : vector<8x32xf32>
    %462 = math.tanh %461 : vector<8x32xf32>
    %463 = arith.mulf %458, %462 : vector<8x32xf32>
    %c5_i32 = arith.constant 5 : i32
    %464 = arith.truncf %463 : vector<8x32xf32> to vector<8x32xbf16>
    %c0_201 = arith.constant 0 : index
    %c0_202 = arith.constant 0 : index
    %465 = vector.load %arg3[%c0_201, %c0_202] : memref<32x32xbf16, #tpu.memory_space<vmem>>, vector<32x32xbf16>
    %cst_203 = arith.constant dense<0.000000e+00> : vector<8x32xf32>
    %466 = tpu.matmul %464, %465, %cst_203 {dimension_numbers = #tpu.dot_dimension_numbers<[1], [0], [0], [1], [0, 0, 1, 1], [], []>} : vector<8x32xbf16>, vector<32x32xbf16>, vector<8x32xf32> -> vector<8x32xf32>
    %467 = arith.index_cast %c5_i32 : i32 to index
    %c0_204 = arith.constant 0 : index
    %c0_205 = arith.constant 0 : index
    %468 = vector.load %arg18[%467, %c0_204, %c0_205] : memref<8x8x32xf32, #tpu.memory_space<vmem>>, vector<1x8x32xf32>
    %469 = vector.shape_cast %468 : vector<1x8x32xf32> to vector<8x32xf32>
    %470 = arith.addf %466, %469 : vector<8x32xf32>
    %cst_206 = arith.constant 0.908999979 : f32
    %471 = vector.broadcast %cst_206 : f32 to vector<8x32xf32>
    %472 = arith.mulf %471, %470 : vector<8x32xf32>
    %473 = arith.negf %470 : vector<8x32xf32>
    %474 = math.exp %473 : vector<8x32xf32>
    %cst_207 = arith.constant 1.000000e+00 : f32
    %475 = vector.broadcast %cst_207 : f32 to vector<8x32xf32>
    %476 = arith.addf %475, %474 : vector<8x32xf32>
    %477 = arith.divf %475, %476 : vector<8x32xf32>
    %478 = arith.mulf %472, %477 : vector<8x32xf32>
    %479 = arith.truncf %478 : vector<8x32xf32> to vector<8x32xbf16>
    %c0_208 = arith.constant 0 : index
    %c0_209 = arith.constant 0 : index
    %480 = vector.load %arg6[%c0_208, %c0_209] : memref<32x32xbf16, #tpu.memory_space<vmem>>, vector<32x32xbf16>
    %cst_210 = arith.constant dense<0.000000e+00> : vector<8x32xf32>
    %481 = tpu.matmul %479, %480, %cst_210 {dimension_numbers = #tpu.dot_dimension_numbers<[1], [0], [0], [1], [0, 0, 1, 1], [], []>} : vector<8x32xbf16>, vector<32x32xbf16>, vector<8x32xf32> -> vector<8x32xf32>
    %c0_211 = arith.constant 0 : index
    %c0_212 = arith.constant 0 : index
    %482 = vector.load %arg7[%c0_211, %c0_212] : memref<1x32xf32, #tpu.memory_space<vmem>>, vector<1x32xf32>
    %483 = vector.broadcast %482 : vector<1x32xf32> to vector<8x32xf32>
    %484 = arith.addf %481, %483 : vector<8x32xf32>
    %cst_213 = arith.constant 0.908999979 : f32
    %485 = vector.broadcast %cst_213 : f32 to vector<8x32xf32>
    %486 = arith.mulf %485, %484 : vector<8x32xf32>
    %487 = arith.negf %484 : vector<8x32xf32>
    %488 = math.exp %487 : vector<8x32xf32>
    %cst_214 = arith.constant 1.000000e+00 : f32
    %489 = vector.broadcast %cst_214 : f32 to vector<8x32xf32>
    %490 = arith.addf %489, %488 : vector<8x32xf32>
    %491 = arith.divf %489, %490 : vector<8x32xf32>
    %492 = arith.mulf %486, %491 : vector<8x32xf32>
    %493 = arith.truncf %492 : vector<8x32xf32> to vector<8x32xbf16>
    %c0_215 = arith.constant 0 : index
    %c0_216 = arith.constant 0 : index
    %494 = vector.load %arg8[%c0_215, %c0_216] : memref<32x32xbf16, #tpu.memory_space<vmem>>, vector<32x32xbf16>
    %cst_217 = arith.constant dense<0.000000e+00> : vector<8x32xf32>
    %495 = tpu.matmul %493, %494, %cst_217 {dimension_numbers = #tpu.dot_dimension_numbers<[1], [0], [0], [1], [0, 0, 1, 1], [], []>} : vector<8x32xbf16>, vector<32x32xbf16>, vector<8x32xf32> -> vector<8x32xf32>
    %c0_218 = arith.constant 0 : index
    %c0_219 = arith.constant 0 : index
    %496 = vector.load %arg9[%c0_218, %c0_219] : memref<1x32xf32, #tpu.memory_space<vmem>>, vector<1x32xf32>
    %497 = vector.broadcast %496 : vector<1x32xf32> to vector<8x32xf32>
    %498 = arith.addf %495, %497 : vector<8x32xf32>
    %499 = arith.index_cast %c5_i32 : i32 to index
    %c0_220 = arith.constant 0 : index
    %c0_221 = arith.constant 0 : index
    %500 = vector.load %arg19[%499, %c0_220, %c0_221] : memref<8x8x32xf32, #tpu.memory_space<vmem>>, vector<1x8x32xf32>
    %501 = vector.shape_cast %500 : vector<1x8x32xf32> to vector<8x32xf32>
    %502 = arith.mulf %501, %498 : vector<8x32xf32>
    %503 = arith.addf %463, %502 : vector<8x32xf32>
    %504 = arith.index_cast %c5_i32 : i32 to index
    %c0_222 = arith.constant 0 : index
    %c0_223 = arith.constant 0 : index
    %505 = vector.load %arg2[%504, %c0_222, %c0_223] : memref<8x8x4xf32, #tpu.memory_space<vmem>>, vector<1x8x4xf32>
    %506 = vector.shape_cast %505 : vector<1x8x4xf32> to vector<8x4xf32>
    %507 = arith.truncf %503 : vector<8x32xf32> to vector<8x32xbf16>
    %c0_224 = arith.constant 0 : index
    %c0_225 = arith.constant 0 : index
    %508 = vector.load %arg12[%c0_224, %c0_225] : memref<32x128xbf16, #tpu.memory_space<vmem>>, vector<32x128xbf16>
    %cst_226 = arith.constant dense<0.000000e+00> : vector<8x128xf32>
    %509 = tpu.matmul %507, %508, %cst_226 {dimension_numbers = #tpu.dot_dimension_numbers<[1], [0], [0], [1], [0, 0, 1, 1], [], []>} : vector<8x32xbf16>, vector<32x128xbf16>, vector<8x128xf32> -> vector<8x128xf32>
    %c0_227 = arith.constant 0 : index
    %c0_228 = arith.constant 0 : index
    %510 = vector.load %arg13[%c0_227, %c0_228] : memref<1x128xf32, #tpu.memory_space<vmem>>, vector<1x128xf32>
    %511 = vector.broadcast %510 : vector<1x128xf32> to vector<8x128xf32>
    %512 = arith.addf %509, %511 : vector<8x128xf32>
    %513 = vector.extract_strided_slice %506 {offsets = [0, 0], sizes = [8, 1], strides = [1, 1]} : vector<8x4xf32> to vector<8x1xf32>
    %c0_229 = arith.constant 0 : index
    %c0_230 = arith.constant 0 : index
    %514 = vector.load %arg11[%c0_229, %c0_230] : memref<4x128xf32, #tpu.memory_space<vmem>>, vector<1x128xf32>
    %515 = vector.broadcast %513 : vector<8x1xf32> to vector<8x128xf32>
    %516 = vector.broadcast %514 : vector<1x128xf32> to vector<8x128xf32>
    %517 = arith.mulf %515, %516 : vector<8x128xf32>
    %518 = arith.addf %512, %517 : vector<8x128xf32>
    %519 = vector.extract_strided_slice %506 {offsets = [0, 1], sizes = [8, 1], strides = [1, 1]} : vector<8x4xf32> to vector<8x1xf32>
    %c1_231 = arith.constant 1 : index
    %c0_232 = arith.constant 0 : index
    %520 = vector.load %arg11[%c1_231, %c0_232] : memref<4x128xf32, #tpu.memory_space<vmem>>, vector<1x128xf32>
    %521 = vector.broadcast %519 : vector<8x1xf32> to vector<8x128xf32>
    %522 = vector.broadcast %520 : vector<1x128xf32> to vector<8x128xf32>
    %523 = arith.mulf %521, %522 : vector<8x128xf32>
    %524 = arith.addf %518, %523 : vector<8x128xf32>
    %525 = vector.extract_strided_slice %506 {offsets = [0, 2], sizes = [8, 1], strides = [1, 1]} : vector<8x4xf32> to vector<8x1xf32>
    %c2_233 = arith.constant 2 : index
    %c0_234 = arith.constant 0 : index
    %526 = vector.load %arg11[%c2_233, %c0_234] : memref<4x128xf32, #tpu.memory_space<vmem>>, vector<1x128xf32>
    %527 = vector.broadcast %525 : vector<8x1xf32> to vector<8x128xf32>
    %528 = vector.broadcast %526 : vector<1x128xf32> to vector<8x128xf32>
    %529 = arith.mulf %527, %528 : vector<8x128xf32>
    %530 = arith.addf %524, %529 : vector<8x128xf32>
    %531 = vector.extract_strided_slice %506 {offsets = [0, 3], sizes = [8, 1], strides = [1, 1]} : vector<8x4xf32> to vector<8x1xf32>
    %c3_235 = arith.constant 3 : index
    %c0_236 = arith.constant 0 : index
    %532 = vector.load %arg11[%c3_235, %c0_236] : memref<4x128xf32, #tpu.memory_space<vmem>>, vector<1x128xf32>
    %533 = vector.broadcast %531 : vector<8x1xf32> to vector<8x128xf32>
    %534 = vector.broadcast %532 : vector<1x128xf32> to vector<8x128xf32>
    %535 = arith.mulf %533, %534 : vector<8x128xf32>
    %536 = arith.addf %530, %535 : vector<8x128xf32>
    %537 = arith.negf %536 : vector<8x128xf32>
    %538 = math.exp %537 : vector<8x128xf32>
    %cst_237 = arith.constant 1.000000e+00 : f32
    %539 = vector.broadcast %cst_237 : f32 to vector<8x128xf32>
    %540 = arith.addf %539, %538 : vector<8x128xf32>
    %541 = arith.divf %539, %540 : vector<8x128xf32>
    %542 = math.tanh %536 : vector<8x128xf32>
    %543 = vector.extract_strided_slice %541 {offsets = [0, 0], sizes = [8, 32], strides = [1, 1]} : vector<8x128xf32> to vector<8x32xf32>
    %544 = vector.extract_strided_slice %541 {offsets = [0, 32], sizes = [8, 32], strides = [1, 1]} : vector<8x128xf32> to vector<8x32xf32>
    %545 = vector.extract_strided_slice %542 {offsets = [0, 64], sizes = [8, 32], strides = [1, 1]} : vector<8x128xf32> to vector<8x32xf32>
    %546 = vector.extract_strided_slice %541 {offsets = [0, 96], sizes = [8, 32], strides = [1, 1]} : vector<8x128xf32> to vector<8x32xf32>
    %547 = arith.mulf %544, %461 : vector<8x32xf32>
    %548 = arith.mulf %543, %545 : vector<8x32xf32>
    %549 = arith.addf %547, %548 : vector<8x32xf32>
    %550 = math.tanh %549 : vector<8x32xf32>
    %551 = arith.mulf %546, %550 : vector<8x32xf32>
    %c6_i32 = arith.constant 6 : i32
    %552 = arith.truncf %551 : vector<8x32xf32> to vector<8x32xbf16>
    %c0_238 = arith.constant 0 : index
    %c0_239 = arith.constant 0 : index
    %553 = vector.load %arg3[%c0_238, %c0_239] : memref<32x32xbf16, #tpu.memory_space<vmem>>, vector<32x32xbf16>
    %cst_240 = arith.constant dense<0.000000e+00> : vector<8x32xf32>
    %554 = tpu.matmul %552, %553, %cst_240 {dimension_numbers = #tpu.dot_dimension_numbers<[1], [0], [0], [1], [0, 0, 1, 1], [], []>} : vector<8x32xbf16>, vector<32x32xbf16>, vector<8x32xf32> -> vector<8x32xf32>
    %555 = arith.index_cast %c6_i32 : i32 to index
    %c0_241 = arith.constant 0 : index
    %c0_242 = arith.constant 0 : index
    %556 = vector.load %arg18[%555, %c0_241, %c0_242] : memref<8x8x32xf32, #tpu.memory_space<vmem>>, vector<1x8x32xf32>
    %557 = vector.shape_cast %556 : vector<1x8x32xf32> to vector<8x32xf32>
    %558 = arith.addf %554, %557 : vector<8x32xf32>
    %cst_243 = arith.constant 0.908999979 : f32
    %559 = vector.broadcast %cst_243 : f32 to vector<8x32xf32>
    %560 = arith.mulf %559, %558 : vector<8x32xf32>
    %561 = arith.negf %558 : vector<8x32xf32>
    %562 = math.exp %561 : vector<8x32xf32>
    %cst_244 = arith.constant 1.000000e+00 : f32
    %563 = vector.broadcast %cst_244 : f32 to vector<8x32xf32>
    %564 = arith.addf %563, %562 : vector<8x32xf32>
    %565 = arith.divf %563, %564 : vector<8x32xf32>
    %566 = arith.mulf %560, %565 : vector<8x32xf32>
    %567 = arith.truncf %566 : vector<8x32xf32> to vector<8x32xbf16>
    %c0_245 = arith.constant 0 : index
    %c0_246 = arith.constant 0 : index
    %568 = vector.load %arg6[%c0_245, %c0_246] : memref<32x32xbf16, #tpu.memory_space<vmem>>, vector<32x32xbf16>
    %cst_247 = arith.constant dense<0.000000e+00> : vector<8x32xf32>
    %569 = tpu.matmul %567, %568, %cst_247 {dimension_numbers = #tpu.dot_dimension_numbers<[1], [0], [0], [1], [0, 0, 1, 1], [], []>} : vector<8x32xbf16>, vector<32x32xbf16>, vector<8x32xf32> -> vector<8x32xf32>
    %c0_248 = arith.constant 0 : index
    %c0_249 = arith.constant 0 : index
    %570 = vector.load %arg7[%c0_248, %c0_249] : memref<1x32xf32, #tpu.memory_space<vmem>>, vector<1x32xf32>
    %571 = vector.broadcast %570 : vector<1x32xf32> to vector<8x32xf32>
    %572 = arith.addf %569, %571 : vector<8x32xf32>
    %cst_250 = arith.constant 0.908999979 : f32
    %573 = vector.broadcast %cst_250 : f32 to vector<8x32xf32>
    %574 = arith.mulf %573, %572 : vector<8x32xf32>
    %575 = arith.negf %572 : vector<8x32xf32>
    %576 = math.exp %575 : vector<8x32xf32>
    %cst_251 = arith.constant 1.000000e+00 : f32
    %577 = vector.broadcast %cst_251 : f32 to vector<8x32xf32>
    %578 = arith.addf %577, %576 : vector<8x32xf32>
    %579 = arith.divf %577, %578 : vector<8x32xf32>
    %580 = arith.mulf %574, %579 : vector<8x32xf32>
    %581 = arith.truncf %580 : vector<8x32xf32> to vector<8x32xbf16>
    %c0_252 = arith.constant 0 : index
    %c0_253 = arith.constant 0 : index
    %582 = vector.load %arg8[%c0_252, %c0_253] : memref<32x32xbf16, #tpu.memory_space<vmem>>, vector<32x32xbf16>
    %cst_254 = arith.constant dense<0.000000e+00> : vector<8x32xf32>
    %583 = tpu.matmul %581, %582, %cst_254 {dimension_numbers = #tpu.dot_dimension_numbers<[1], [0], [0], [1], [0, 0, 1, 1], [], []>} : vector<8x32xbf16>, vector<32x32xbf16>, vector<8x32xf32> -> vector<8x32xf32>
    %c0_255 = arith.constant 0 : index
    %c0_256 = arith.constant 0 : index
    %584 = vector.load %arg9[%c0_255, %c0_256] : memref<1x32xf32, #tpu.memory_space<vmem>>, vector<1x32xf32>
    %585 = vector.broadcast %584 : vector<1x32xf32> to vector<8x32xf32>
    %586 = arith.addf %583, %585 : vector<8x32xf32>
    %587 = arith.index_cast %c6_i32 : i32 to index
    %c0_257 = arith.constant 0 : index
    %c0_258 = arith.constant 0 : index
    %588 = vector.load %arg19[%587, %c0_257, %c0_258] : memref<8x8x32xf32, #tpu.memory_space<vmem>>, vector<1x8x32xf32>
    %589 = vector.shape_cast %588 : vector<1x8x32xf32> to vector<8x32xf32>
    %590 = arith.mulf %589, %586 : vector<8x32xf32>
    %591 = arith.addf %551, %590 : vector<8x32xf32>
    %592 = arith.index_cast %c6_i32 : i32 to index
    %c0_259 = arith.constant 0 : index
    %c0_260 = arith.constant 0 : index
    %593 = vector.load %arg2[%592, %c0_259, %c0_260] : memref<8x8x4xf32, #tpu.memory_space<vmem>>, vector<1x8x4xf32>
    %594 = vector.shape_cast %593 : vector<1x8x4xf32> to vector<8x4xf32>
    %595 = arith.truncf %591 : vector<8x32xf32> to vector<8x32xbf16>
    %c0_261 = arith.constant 0 : index
    %c0_262 = arith.constant 0 : index
    %596 = vector.load %arg12[%c0_261, %c0_262] : memref<32x128xbf16, #tpu.memory_space<vmem>>, vector<32x128xbf16>
    %cst_263 = arith.constant dense<0.000000e+00> : vector<8x128xf32>
    %597 = tpu.matmul %595, %596, %cst_263 {dimension_numbers = #tpu.dot_dimension_numbers<[1], [0], [0], [1], [0, 0, 1, 1], [], []>} : vector<8x32xbf16>, vector<32x128xbf16>, vector<8x128xf32> -> vector<8x128xf32>
    %c0_264 = arith.constant 0 : index
    %c0_265 = arith.constant 0 : index
    %598 = vector.load %arg13[%c0_264, %c0_265] : memref<1x128xf32, #tpu.memory_space<vmem>>, vector<1x128xf32>
    %599 = vector.broadcast %598 : vector<1x128xf32> to vector<8x128xf32>
    %600 = arith.addf %597, %599 : vector<8x128xf32>
    %601 = vector.extract_strided_slice %594 {offsets = [0, 0], sizes = [8, 1], strides = [1, 1]} : vector<8x4xf32> to vector<8x1xf32>
    %c0_266 = arith.constant 0 : index
    %c0_267 = arith.constant 0 : index
    %602 = vector.load %arg11[%c0_266, %c0_267] : memref<4x128xf32, #tpu.memory_space<vmem>>, vector<1x128xf32>
    %603 = vector.broadcast %601 : vector<8x1xf32> to vector<8x128xf32>
    %604 = vector.broadcast %602 : vector<1x128xf32> to vector<8x128xf32>
    %605 = arith.mulf %603, %604 : vector<8x128xf32>
    %606 = arith.addf %600, %605 : vector<8x128xf32>
    %607 = vector.extract_strided_slice %594 {offsets = [0, 1], sizes = [8, 1], strides = [1, 1]} : vector<8x4xf32> to vector<8x1xf32>
    %c1_268 = arith.constant 1 : index
    %c0_269 = arith.constant 0 : index
    %608 = vector.load %arg11[%c1_268, %c0_269] : memref<4x128xf32, #tpu.memory_space<vmem>>, vector<1x128xf32>
    %609 = vector.broadcast %607 : vector<8x1xf32> to vector<8x128xf32>
    %610 = vector.broadcast %608 : vector<1x128xf32> to vector<8x128xf32>
    %611 = arith.mulf %609, %610 : vector<8x128xf32>
    %612 = arith.addf %606, %611 : vector<8x128xf32>
    %613 = vector.extract_strided_slice %594 {offsets = [0, 2], sizes = [8, 1], strides = [1, 1]} : vector<8x4xf32> to vector<8x1xf32>
    %c2_270 = arith.constant 2 : index
    %c0_271 = arith.constant 0 : index
    %614 = vector.load %arg11[%c2_270, %c0_271] : memref<4x128xf32, #tpu.memory_space<vmem>>, vector<1x128xf32>
    %615 = vector.broadcast %613 : vector<8x1xf32> to vector<8x128xf32>
    %616 = vector.broadcast %614 : vector<1x128xf32> to vector<8x128xf32>
    %617 = arith.mulf %615, %616 : vector<8x128xf32>
    %618 = arith.addf %612, %617 : vector<8x128xf32>
    %619 = vector.extract_strided_slice %594 {offsets = [0, 3], sizes = [8, 1], strides = [1, 1]} : vector<8x4xf32> to vector<8x1xf32>
    %c3_272 = arith.constant 3 : index
    %c0_273 = arith.constant 0 : index
    %620 = vector.load %arg11[%c3_272, %c0_273] : memref<4x128xf32, #tpu.memory_space<vmem>>, vector<1x128xf32>
    %621 = vector.broadcast %619 : vector<8x1xf32> to vector<8x128xf32>
    %622 = vector.broadcast %620 : vector<1x128xf32> to vector<8x128xf32>
    %623 = arith.mulf %621, %622 : vector<8x128xf32>
    %624 = arith.addf %618, %623 : vector<8x128xf32>
    %625 = arith.negf %624 : vector<8x128xf32>
    %626 = math.exp %625 : vector<8x128xf32>
    %cst_274 = arith.constant 1.000000e+00 : f32
    %627 = vector.broadcast %cst_274 : f32 to vector<8x128xf32>
    %628 = arith.addf %627, %626 : vector<8x128xf32>
    %629 = arith.divf %627, %628 : vector<8x128xf32>
    %630 = math.tanh %624 : vector<8x128xf32>
    %631 = vector.extract_strided_slice %629 {offsets = [0, 0], sizes = [8, 32], strides = [1, 1]} : vector<8x128xf32> to vector<8x32xf32>
    %632 = vector.extract_strided_slice %629 {offsets = [0, 32], sizes = [8, 32], strides = [1, 1]} : vector<8x128xf32> to vector<8x32xf32>
    %633 = vector.extract_strided_slice %630 {offsets = [0, 64], sizes = [8, 32], strides = [1, 1]} : vector<8x128xf32> to vector<8x32xf32>
    %634 = vector.extract_strided_slice %629 {offsets = [0, 96], sizes = [8, 32], strides = [1, 1]} : vector<8x128xf32> to vector<8x32xf32>
    %635 = arith.mulf %632, %549 : vector<8x32xf32>
    %636 = arith.mulf %631, %633 : vector<8x32xf32>
    %637 = arith.addf %635, %636 : vector<8x32xf32>
    %638 = math.tanh %637 : vector<8x32xf32>
    %639 = arith.mulf %634, %638 : vector<8x32xf32>
    %c7_i32 = arith.constant 7 : i32
    %640 = arith.truncf %639 : vector<8x32xf32> to vector<8x32xbf16>
    %c0_275 = arith.constant 0 : index
    %c0_276 = arith.constant 0 : index
    %641 = vector.load %arg3[%c0_275, %c0_276] : memref<32x32xbf16, #tpu.memory_space<vmem>>, vector<32x32xbf16>
    %cst_277 = arith.constant dense<0.000000e+00> : vector<8x32xf32>
    %642 = tpu.matmul %640, %641, %cst_277 {dimension_numbers = #tpu.dot_dimension_numbers<[1], [0], [0], [1], [0, 0, 1, 1], [], []>} : vector<8x32xbf16>, vector<32x32xbf16>, vector<8x32xf32> -> vector<8x32xf32>
    %643 = arith.index_cast %c7_i32 : i32 to index
    %c0_278 = arith.constant 0 : index
    %c0_279 = arith.constant 0 : index
    %644 = vector.load %arg18[%643, %c0_278, %c0_279] : memref<8x8x32xf32, #tpu.memory_space<vmem>>, vector<1x8x32xf32>
    %645 = vector.shape_cast %644 : vector<1x8x32xf32> to vector<8x32xf32>
    %646 = arith.addf %642, %645 : vector<8x32xf32>
    %cst_280 = arith.constant 0.908999979 : f32
    %647 = vector.broadcast %cst_280 : f32 to vector<8x32xf32>
    %648 = arith.mulf %647, %646 : vector<8x32xf32>
    %649 = arith.negf %646 : vector<8x32xf32>
    %650 = math.exp %649 : vector<8x32xf32>
    %cst_281 = arith.constant 1.000000e+00 : f32
    %651 = vector.broadcast %cst_281 : f32 to vector<8x32xf32>
    %652 = arith.addf %651, %650 : vector<8x32xf32>
    %653 = arith.divf %651, %652 : vector<8x32xf32>
    %654 = arith.mulf %648, %653 : vector<8x32xf32>
    %655 = arith.truncf %654 : vector<8x32xf32> to vector<8x32xbf16>
    %c0_282 = arith.constant 0 : index
    %c0_283 = arith.constant 0 : index
    %656 = vector.load %arg6[%c0_282, %c0_283] : memref<32x32xbf16, #tpu.memory_space<vmem>>, vector<32x32xbf16>
    %cst_284 = arith.constant dense<0.000000e+00> : vector<8x32xf32>
    %657 = tpu.matmul %655, %656, %cst_284 {dimension_numbers = #tpu.dot_dimension_numbers<[1], [0], [0], [1], [0, 0, 1, 1], [], []>} : vector<8x32xbf16>, vector<32x32xbf16>, vector<8x32xf32> -> vector<8x32xf32>
    %c0_285 = arith.constant 0 : index
    %c0_286 = arith.constant 0 : index
    %658 = vector.load %arg7[%c0_285, %c0_286] : memref<1x32xf32, #tpu.memory_space<vmem>>, vector<1x32xf32>
    %659 = vector.broadcast %658 : vector<1x32xf32> to vector<8x32xf32>
    %660 = arith.addf %657, %659 : vector<8x32xf32>
    %cst_287 = arith.constant 0.908999979 : f32
    %661 = vector.broadcast %cst_287 : f32 to vector<8x32xf32>
    %662 = arith.mulf %661, %660 : vector<8x32xf32>
    %663 = arith.negf %660 : vector<8x32xf32>
    %664 = math.exp %663 : vector<8x32xf32>
    %cst_288 = arith.constant 1.000000e+00 : f32
    %665 = vector.broadcast %cst_288 : f32 to vector<8x32xf32>
    %666 = arith.addf %665, %664 : vector<8x32xf32>
    %667 = arith.divf %665, %666 : vector<8x32xf32>
    %668 = arith.mulf %662, %667 : vector<8x32xf32>
    %669 = arith.truncf %668 : vector<8x32xf32> to vector<8x32xbf16>
    %c0_289 = arith.constant 0 : index
    %c0_290 = arith.constant 0 : index
    %670 = vector.load %arg8[%c0_289, %c0_290] : memref<32x32xbf16, #tpu.memory_space<vmem>>, vector<32x32xbf16>
    %cst_291 = arith.constant dense<0.000000e+00> : vector<8x32xf32>
    %671 = tpu.matmul %669, %670, %cst_291 {dimension_numbers = #tpu.dot_dimension_numbers<[1], [0], [0], [1], [0, 0, 1, 1], [], []>} : vector<8x32xbf16>, vector<32x32xbf16>, vector<8x32xf32> -> vector<8x32xf32>
    %c0_292 = arith.constant 0 : index
    %c0_293 = arith.constant 0 : index
    %672 = vector.load %arg9[%c0_292, %c0_293] : memref<1x32xf32, #tpu.memory_space<vmem>>, vector<1x32xf32>
    %673 = vector.broadcast %672 : vector<1x32xf32> to vector<8x32xf32>
    %674 = arith.addf %671, %673 : vector<8x32xf32>
    %675 = arith.index_cast %c7_i32 : i32 to index
    %c0_294 = arith.constant 0 : index
    %c0_295 = arith.constant 0 : index
    %676 = vector.load %arg19[%675, %c0_294, %c0_295] : memref<8x8x32xf32, #tpu.memory_space<vmem>>, vector<1x8x32xf32>
    %677 = vector.shape_cast %676 : vector<1x8x32xf32> to vector<8x32xf32>
    %678 = arith.mulf %677, %674 : vector<8x32xf32>
    %679 = arith.addf %639, %678 : vector<8x32xf32>
    %680 = arith.index_cast %c7_i32 : i32 to index
    %c0_296 = arith.constant 0 : index
    %c0_297 = arith.constant 0 : index
    %681 = vector.load %arg2[%680, %c0_296, %c0_297] : memref<8x8x4xf32, #tpu.memory_space<vmem>>, vector<1x8x4xf32>
    %682 = vector.shape_cast %681 : vector<1x8x4xf32> to vector<8x4xf32>
    %683 = arith.truncf %679 : vector<8x32xf32> to vector<8x32xbf16>
    %c0_298 = arith.constant 0 : index
    %c0_299 = arith.constant 0 : index
    %684 = vector.load %arg12[%c0_298, %c0_299] : memref<32x128xbf16, #tpu.memory_space<vmem>>, vector<32x128xbf16>
    %cst_300 = arith.constant dense<0.000000e+00> : vector<8x128xf32>
    %685 = tpu.matmul %683, %684, %cst_300 {dimension_numbers = #tpu.dot_dimension_numbers<[1], [0], [0], [1], [0, 0, 1, 1], [], []>} : vector<8x32xbf16>, vector<32x128xbf16>, vector<8x128xf32> -> vector<8x128xf32>
    %c0_301 = arith.constant 0 : index
    %c0_302 = arith.constant 0 : index
    %686 = vector.load %arg13[%c0_301, %c0_302] : memref<1x128xf32, #tpu.memory_space<vmem>>, vector<1x128xf32>
    %687 = vector.broadcast %686 : vector<1x128xf32> to vector<8x128xf32>
    %688 = arith.addf %685, %687 : vector<8x128xf32>
    %689 = vector.extract_strided_slice %682 {offsets = [0, 0], sizes = [8, 1], strides = [1, 1]} : vector<8x4xf32> to vector<8x1xf32>
    %c0_303 = arith.constant 0 : index
    %c0_304 = arith.constant 0 : index
    %690 = vector.load %arg11[%c0_303, %c0_304] : memref<4x128xf32, #tpu.memory_space<vmem>>, vector<1x128xf32>
    %691 = vector.broadcast %689 : vector<8x1xf32> to vector<8x128xf32>
    %692 = vector.broadcast %690 : vector<1x128xf32> to vector<8x128xf32>
    %693 = arith.mulf %691, %692 : vector<8x128xf32>
    %694 = arith.addf %688, %693 : vector<8x128xf32>
    %695 = vector.extract_strided_slice %682 {offsets = [0, 1], sizes = [8, 1], strides = [1, 1]} : vector<8x4xf32> to vector<8x1xf32>
    %c1_305 = arith.constant 1 : index
    %c0_306 = arith.constant 0 : index
    %696 = vector.load %arg11[%c1_305, %c0_306] : memref<4x128xf32, #tpu.memory_space<vmem>>, vector<1x128xf32>
    %697 = vector.broadcast %695 : vector<8x1xf32> to vector<8x128xf32>
    %698 = vector.broadcast %696 : vector<1x128xf32> to vector<8x128xf32>
    %699 = arith.mulf %697, %698 : vector<8x128xf32>
    %700 = arith.addf %694, %699 : vector<8x128xf32>
    %701 = vector.extract_strided_slice %682 {offsets = [0, 2], sizes = [8, 1], strides = [1, 1]} : vector<8x4xf32> to vector<8x1xf32>
    %c2_307 = arith.constant 2 : index
    %c0_308 = arith.constant 0 : index
    %702 = vector.load %arg11[%c2_307, %c0_308] : memref<4x128xf32, #tpu.memory_space<vmem>>, vector<1x128xf32>
    %703 = vector.broadcast %701 : vector<8x1xf32> to vector<8x128xf32>
    %704 = vector.broadcast %702 : vector<1x128xf32> to vector<8x128xf32>
    %705 = arith.mulf %703, %704 : vector<8x128xf32>
    %706 = arith.addf %700, %705 : vector<8x128xf32>
    %707 = vector.extract_strided_slice %682 {offsets = [0, 3], sizes = [8, 1], strides = [1, 1]} : vector<8x4xf32> to vector<8x1xf32>
    %c3_309 = arith.constant 3 : index
    %c0_310 = arith.constant 0 : index
    %708 = vector.load %arg11[%c3_309, %c0_310] : memref<4x128xf32, #tpu.memory_space<vmem>>, vector<1x128xf32>
    %709 = vector.broadcast %707 : vector<8x1xf32> to vector<8x128xf32>
    %710 = vector.broadcast %708 : vector<1x128xf32> to vector<8x128xf32>
    %711 = arith.mulf %709, %710 : vector<8x128xf32>
    %712 = arith.addf %706, %711 : vector<8x128xf32>
    %713 = arith.negf %712 : vector<8x128xf32>
    %714 = math.exp %713 : vector<8x128xf32>
    %cst_311 = arith.constant 1.000000e+00 : f32
    %715 = vector.broadcast %cst_311 : f32 to vector<8x128xf32>
    %716 = arith.addf %715, %714 : vector<8x128xf32>
    %717 = arith.divf %715, %716 : vector<8x128xf32>
    %718 = math.tanh %712 : vector<8x128xf32>
    %719 = vector.extract_strided_slice %717 {offsets = [0, 0], sizes = [8, 32], strides = [1, 1]} : vector<8x128xf32> to vector<8x32xf32>
    %720 = vector.extract_strided_slice %717 {offsets = [0, 32], sizes = [8, 32], strides = [1, 1]} : vector<8x128xf32> to vector<8x32xf32>
    %721 = vector.extract_strided_slice %718 {offsets = [0, 64], sizes = [8, 32], strides = [1, 1]} : vector<8x128xf32> to vector<8x32xf32>
    %722 = vector.extract_strided_slice %717 {offsets = [0, 96], sizes = [8, 32], strides = [1, 1]} : vector<8x128xf32> to vector<8x32xf32>
    %723 = arith.mulf %720, %637 : vector<8x32xf32>
    %724 = arith.mulf %719, %721 : vector<8x32xf32>
    %725 = arith.addf %723, %724 : vector<8x32xf32>
    %726 = math.tanh %725 : vector<8x32xf32>
    %727 = arith.mulf %722, %726 : vector<8x32xf32>
    %c8_i32 = arith.constant 8 : i32
    %c0_312 = arith.constant 0 : index
    %c0_313 = arith.constant 0 : index
    %728 = vector.load %arg16[%c0_312, %c0_313] : memref<8x32xf32, #tpu.memory_space<vmem>>, vector<8x32xf32>
    tpu.vector_store %arg16[%c0_312, %c0_313], %727 {strides = array<i32>} : memref<8x32xf32, #tpu.memory_space<vmem>>, vector<8x32xf32>,
    %c0_314 = arith.constant 0 : index
    %c0_315 = arith.constant 0 : index
    %729 = vector.load %arg17[%c0_314, %c0_315] : memref<8x32xf32, #tpu.memory_space<vmem>>, vector<8x32xf32>
    tpu.vector_store %arg17[%c0_314, %c0_315], %725 {strides = array<i32>} : memref<8x32xf32, #tpu.memory_space<vmem>>, vector<8x32xf32>,
    %c0_i32_316 = arith.constant 0 : i32
    %730 = arith.cmpi eq, %arg1, %c0_i32_316 : i32
    %731 = arith.extui %730 : i1 to i32
    %c0_i32_317 = arith.constant 0 : i32
    %732 = arith.cmpi ne, %731, %c0_i32_317 : i32
    scf.if %732 {
      %c0_318 = arith.constant 0 : index
      %c0_319 = arith.constant 0 : index
      %733 = vector.load %arg14[%c0_318, %c0_319] : memref<1x32xf32, #tpu.memory_space<vmem>>, vector<1x32xf32>
      %734 = vector.broadcast %733 : vector<1x32xf32> to vector<8x32xf32>
      %735 = arith.mulf %727, %734 : vector<8x32xf32>
      %cst_320 = arith.constant dense<0.000000e+00> : vector<8xf32>
      %736 = vector.multi_reduction <add>, %735, %cst_320 [1] : vector<8x32xf32> to vector<8xf32>
      %737 = vector.shape_cast %736 : vector<8xf32> to vector<8x1xf32>
      %738 = vector.shape_cast %737 : vector<8x1xf32> to vector<8x1xf32>
      %739 = vector.broadcast %738 : vector<8x1xf32> to vector<8x128xf32>
      %c0_321 = arith.constant 0 : index
      %c0_322 = arith.constant 0 : index
      %740 = vector.load %arg15[%c0_321, %c0_322] : memref<8x128xf32, #tpu.memory_space<vmem>>, vector<8x128xf32>
      tpu.vector_store %arg15[%c0_321, %c0_322], %739 {strides = array<i32>} : memref<8x128xf32, #tpu.memory_space<vmem>>, vector<8x128xf32>,
    } else {
    }
    return
  }
  func.func @transform_0(%arg0: i32, %arg1: i32) -> (i32, i32, i32) {
    %c0_i32 = arith.constant 0 : i32
    %c0_i32_0 = arith.constant 0 : i32
    return %arg1, %arg0, %c0_i32 : i32, i32, i32
  }
  func.func @transform_1(%arg0: i32, %arg1: i32) -> (i32, i32) {
    %c0_i32 = arith.constant 0 : i32
    %c0_i32_0 = arith.constant 0 : i32
    %c0_i32_1 = arith.constant 0 : i32
    return %c0_i32, %c0_i32_0 : i32, i32
  }
  func.func @transform_2(%arg0: i32, %arg1: i32) -> (i32, i32) {
    %c0_i32 = arith.constant 0 : i32
    %c0_i32_0 = arith.constant 0 : i32
    %c0_i32_1 = arith.constant 0 : i32
    return %c0_i32, %c0_i32_0 : i32, i32
  }
  func.func @transform_3(%arg0: i32, %arg1: i32) -> (i32, i32) {
    %c0_i32 = arith.constant 0 : i32
    %c0_i32_0 = arith.constant 0 : i32
    %c0_i32_1 = arith.constant 0 : i32
    return %c0_i32, %c0_i32_0 : i32, i32
  }
  func.func @transform_4(%arg0: i32, %arg1: i32) -> (i32, i32) {
    %c0_i32 = arith.constant 0 : i32
    %c0_i32_0 = arith.constant 0 : i32
    %c0_i32_1 = arith.constant 0 : i32
    return %c0_i32, %c0_i32_0 : i32, i32
  }
  func.func @transform_5(%arg0: i32, %arg1: i32) -> (i32, i32) {
    %c0_i32 = arith.constant 0 : i32
    %c0_i32_0 = arith.constant 0 : i32
    %c0_i32_1 = arith.constant 0 : i32
    return %c0_i32, %c0_i32_0 : i32, i32
  }
  func.func @transform_6(%arg0: i32, %arg1: i32) -> (i32, i32) {
    %c0_i32 = arith.constant 0 : i32
    %c0_i32_0 = arith.constant 0 : i32
    %c0_i32_1 = arith.constant 0 : i32
    return %c0_i32, %c0_i32_0 : i32, i32
  }
  func.func @transform_7(%arg0: i32, %arg1: i32) -> (i32, i32) {
    %c0_i32 = arith.constant 0 : i32
    %c0_i32_0 = arith.constant 0 : i32
    %c0_i32_1 = arith.constant 0 : i32
    return %c0_i32, %c0_i32_0 : i32, i32
  }
  func.func @transform_8(%arg0: i32, %arg1: i32) -> (i32, i32) {
    %c0_i32 = arith.constant 0 : i32
    %c0_i32_0 = arith.constant 0 : i32
    %c0_i32_1 = arith.constant 0 : i32
    return %c0_i32, %c0_i32_0 : i32, i32
  }
  func.func @transform_9(%arg0: i32, %arg1: i32) -> (i32, i32) {
    %c0_i32 = arith.constant 0 : i32
    %c0_i32_0 = arith.constant 0 : i32
    %c0_i32_1 = arith.constant 0 : i32
    return %c0_i32, %c0_i32_0 : i32, i32
  }
  func.func @transform_10(%arg0: i32, %arg1: i32) -> (i32, i32) {
    %c0_i32 = arith.constant 0 : i32
    %c0_i32_0 = arith.constant 0 : i32
    %c0_i32_1 = arith.constant 0 : i32
    return %c0_i32, %c0_i32_0 : i32, i32
  }
  func.func @transform_11(%arg0: i32, %arg1: i32) -> (i32, i32) {
    %c0_i32 = arith.constant 0 : i32
    %c0_i32_0 = arith.constant 0 : i32
    %c0_i32_1 = arith.constant 0 : i32
    return %c0_i32, %c0_i32_0 : i32, i32
  }
  func.func @transform_12(%arg0: i32, %arg1: i32) -> (i32, i32) {
    %c0_i32 = arith.constant 0 : i32
    %c0_i32_0 = arith.constant 0 : i32
    %c0_i32_1 = arith.constant 0 : i32
    return %c0_i32, %c0_i32_0 : i32, i32
  }
  func.func @transform_13(%arg0: i32, %arg1: i32) -> (i32, i32) {
    %c0_i32 = arith.constant 0 : i32
    %c0_i32_0 = arith.constant 0 : i32
    return %arg0, %c0_i32 : i32, i32
  }
}

</mosaic_0001>

<llo_original>
// kernel: tpu_custom_call.1
$region0: #{tpu_custom_call.1}
  #allocation0 [shape = 'u32[]', space=smem, size = 0x4, offset = 0x4, fixed_abs, tag = 'smem constant byte address 0x4 - core index']
  #allocation1 [shape = 'u32[144,128]{1,0:T(1,128)}', space=vmem, size = 0x12000, scoped, tag = 'internal scratch']
  #allocation2 [shape = 'f32[8,32]{1,0:T(8,128)}', space=vmem, size = 0x1000, scoped, tag = 'scratch operand']
  #allocation3 [shape = 'f32[8,32]{1,0:T(8,128)}', space=vmem, size = 0x1000, scoped, tag = 'scratch operand']
  #allocation4 [shape = 'f32[8,8,32]{2,1,0:T(8,128)}', space=vmem, size = 0x8000, scoped, tag = 'scratch operand']
  #allocation5 [shape = 'f32[8,8,32]{2,1,0:T(8,128)}', space=vmem, size = 0x8000, scoped, tag = 'scratch operand']
  %s0 = inlined_call_operand.vmem [shape: f32[8,8,4], index: 0, kind: input, shape index: {}]
  %s1 = inlined_call_operand.vmem [shape: bf16[32,32], index: 1, kind: input, shape index: {}]
  %s2 = inlined_call_operand.vmem [shape: f32[1,32], index: 2, kind: input, shape index: {}]
  %s3 = inlined_call_operand.vmem [shape: f32[1,32], index: 3, kind: input, shape index: {}]
  %s4 = inlined_call_operand.vmem [shape: bf16[32,32], index: 4, kind: input, shape index: {}]
  %s5 = inlined_call_operand.vmem [shape: f32[1,32], index: 5, kind: input, shape index: {}]
  %s6 = inlined_call_operand.vmem [shape: bf16[32,32], index: 6, kind: input, shape index: {}]
  %s7 = inlined_call_operand.vmem [shape: f32[1,32], index: 7, kind: input, shape index: {}]
  %s8 = inlined_call_operand.vmem [shape: f32[1,32], index: 8, kind: input, shape index: {}]
  %s9 = inlined_call_operand.vmem [shape: f32[4,128], index: 9, kind: input, shape index: {}]
  %s10 = inlined_call_operand.vmem [shape: bf16[32,128], index: 10, kind: input, shape index: {}]
  %s11 = inlined_call_operand.vmem [shape: f32[1,128], index: 11, kind: input, shape index: {}]
  %s12 = inlined_call_operand.vmem [shape: f32[1,32], index: 12, kind: input, shape index: {}]
  %s13 = inlined_call_operand.hbm [shape: f32[8,128], index: 13, kind: output, shape index: {}]
  %s14 = sld [smem:[#allocation0]]
  $region70: #{tpu_custom_call.1} parent=0
    _
  %s16 = ssub.s32 1, %s14
  %s17 = scalar_select 0, %s16, %s14
  $region1: #{tpu_custom_call.1} parent=0
    #allocation6 [shape = 'u8[4096]{0}', space=vmem, size = 0x1000, scoped, tag = 'output window, operand 0, single buffered']
    #allocation7 [shape = 's32[1]{0}', space=sflag, size = 0x4, scoped, tag = 'scoped memory for tpu_custom_call.1']
    %18 = vsyncpa [#allocation7], 0
    // Predicated region
    $region2: #{tpu_custom_call.1} parent=1 // pred_check
      _
    $region3: #{tpu_custom_call.1} parent=1 // pred_check_branch
      %20 = sbr.rel (0) target = $region5
    $region4: #{tpu_custom_call.1} parent=1 // pred_region
      _
    $region5: #{tpu_custom_call.1} parent=1 // pred_fallthru
      _
    // Predicated region
    $region6: #{tpu_custom_call.1} parent=1 // pred_check
      _
    $region7: #{tpu_custom_call.1} parent=1 // pred_check_branch
      %22 = sbr.rel (0) target = $region9
    $region8: #{tpu_custom_call.1} parent=1 // pred_region
      _
    $region9: #{tpu_custom_call.1} parent=1 // pred_fallthru
      _
    // Predicated region
    $region10: #{tpu_custom_call.1} parent=1 // pred_check
      _
    $region11: #{tpu_custom_call.1} parent=1 // pred_check_branch
      %24 = sbr.rel (0) target = $region13
    $region12: #{tpu_custom_call.1} parent=1 // pred_region
      _
    $region13: #{tpu_custom_call.1} parent=1 // pred_fallthru
      _
    // Predicated region
    $region14: #{tpu_custom_call.1} parent=1 // pred_check
      _
    $region15: #{tpu_custom_call.1} parent=1 // pred_check_branch
      %26 = sbr.rel (0) target = $region17
    $region16: #{tpu_custom_call.1} parent=1 // pred_region
      _
    $region17: #{tpu_custom_call.1} parent=1 // pred_fallthru
      _
    // Predicated region
    $region18: #{tpu_custom_call.1} parent=1 // pred_check
      _
    $region19: #{tpu_custom_call.1} parent=1 // pred_check_branch
      %28 = sbr.rel (0) target = $region21
    $region20: #{tpu_custom_call.1} parent=1 // pred_region
      _
    $region21: #{tpu_custom_call.1} parent=1 // pred_fallthru
      _
    // Predicated region
    $region22: #{tpu_custom_call.1} parent=1 // pred_check
      _
    $region23: #{tpu_custom_call.1} parent=1 // pred_check_branch
      %30 = sbr.rel (0) target = $region25
    $region24: #{tpu_custom_call.1} parent=1 // pred_region
      _
    $region25: #{tpu_custom_call.1} parent=1 // pred_fallthru
      _
    // Predicated region
    $region26: #{tpu_custom_call.1} parent=1 // pred_check
      _
    $region27: #{tpu_custom_call.1} parent=1 // pred_check_branch
      %32 = sbr.rel (0) target = $region29
    $region28: #{tpu_custom_call.1} parent=1 // pred_region
      _
    $region29: #{tpu_custom_call.1} parent=1 // pred_fallthru
      _
    // Predicated region
    $region30: #{tpu_custom_call.1} parent=1 // pred_check
      _
    $region31: #{tpu_custom_call.1} parent=1 // pred_check_branch
      %34 = sbr.rel (0) target = $region33
    $region32: #{tpu_custom_call.1} parent=1 // pred_region
      _
    $region33: #{tpu_custom_call.1} parent=1 // pred_fallthru
      _
    // Predicated region
    $region34: #{tpu_custom_call.1} parent=1 // pred_check
      _
    $region35: #{tpu_custom_call.1} parent=1 // pred_check_branch
      %36 = sbr.rel (0) target = $region37
    $region36: #{tpu_custom_call.1} parent=1 // pred_region
      _
    $region37: #{tpu_custom_call.1} parent=1 // pred_fallthru
      _
    // Predicated region
    $region38: #{tpu_custom_call.1} parent=1 // pred_check
      _
    $region39: #{tpu_custom_call.1} parent=1 // pred_check_branch
      %38 = sbr.rel (0) target = $region41
    $region40: #{tpu_custom_call.1} parent=1 // pred_region
      _
    $region41: #{tpu_custom_call.1} parent=1 // pred_fallthru
      _
    // Predicated region
    $region42: #{tpu_custom_call.1} parent=1 // pred_check
      _
    $region43: #{tpu_custom_call.1} parent=1 // pred_check_branch
      %40 = sbr.rel (0) target = $region45
    $region44: #{tpu_custom_call.1} parent=1 // pred_region
      _
    $region45: #{tpu_custom_call.1} parent=1 // pred_fallthru
      _
    // Predicated region
    $region46: #{tpu_custom_call.1} parent=1 // pred_check
      _
    $region47: #{tpu_custom_call.1} parent=1 // pred_check_branch
      %42 = sbr.rel (0) target = $region49
    $region48: #{tpu_custom_call.1} parent=1 // pred_region
      _
    $region49: #{tpu_custom_call.1} parent=1 // pred_fallthru
      _
    // Predicated region
    $region50: #{tpu_custom_call.1} parent=1 // pred_check
      _
    $region51: #{tpu_custom_call.1} parent=1 // pred_check_branch
      %44 = sbr.rel (0) target = $region53
    $region52: #{tpu_custom_call.1} parent=1 // pred_region
      _
    $region53: #{tpu_custom_call.1} parent=1 // pred_fallthru
      _
    %p46 = scmp.eq.s32.totalorder 0, 0
    // Predicated region
    $region54: #{tpu_custom_call.1} parent=1 // pred_check
      %p47 = pneg %p46
    $region55: #{tpu_custom_call.1} parent=1 // pred_check_branch
      %49 = sbr.rel (%p47) target = $region57
    $region56: #{tpu_custom_call.1} parent=1 // pred_region
      %vm50 = vcmask 261120
      %51 = vst.msk [vmem:[#allocation2] sm:$0xff] %vm50, 0.0
      %52 = vst.msk [vmem:[#allocation3] sm:$0xff] %vm50, 0.0
    $region57: #{tpu_custom_call.1} parent=1 // pred_fallthru
      _
    %v53 = vld [vmem:[%s0] sm:$0xff]
    %v54 = vld [vmem:[%s0 + $0x8] sm:$0xff]
    %v55 = vld [vmem:[%s0 + $0x10] sm:$0xff]
    %v56 = vld [vmem:[%s0 + $0x18] sm:$0xff]
    %v57 = vld [vmem:[%s0 + $0x20] sm:$0xff]
    %v58 = vld [vmem:[%s0 + $0x28] sm:$0xff]
    %v59 = vld [vmem:[%s0 + $0x30] sm:$0xff]
    %v60 = vld [vmem:[%s0 + $0x38] sm:$0xff]
    %v61 = vld [vmem:[%s2] sm:$0x1]
    %63 = vset.pattern.permute.xlu0 0
    %64 = vperm.xlu0 %63, %v53
    %v65 = vpop.permute.xlu0 %64
    %68 = vset.pattern.permute.xlu0 0
    %69 = vperm.xlu0 %68, %v54
    %v70 = vpop.permute.xlu0 %69
    %73 = vset.pattern.permute.xlu0 0
    %74 = vperm.xlu0 %73, %v55
    %v75 = vpop.permute.xlu0 %74
    %78 = vset.pattern.permute.xlu0 0
    %79 = vperm.xlu0 %78, %v56
    %v80 = vpop.permute.xlu0 %79
    %83 = vset.pattern.permute.xlu0 0
    %84 = vperm.xlu0 %83, %v57
    %v85 = vpop.permute.xlu0 %84
    %88 = vset.pattern.permute.xlu0 0
    %89 = vperm.xlu0 %88, %v58
    %v90 = vpop.permute.xlu0 %89
    %93 = vset.pattern.permute.xlu0 0
    %94 = vperm.xlu0 %93, %v59
    %v95 = vpop.permute.xlu0 %94
    %98 = vset.pattern.permute.xlu0 0
    %99 = vperm.xlu0 %98, %v60
    %v100 = vpop.permute.xlu0 %99
    %v103 = vlaneseq
    %v104 = vshrl.u32 %v103, 7
    %v105 = vsub.s32 0, %v104
    %v106 = vrot.slane %v61, %v105
    %v108 = vmul.f32 %v65, %v106
    %v109 = vmul.f32 %v70, %v106
    %v110 = vmul.f32 %v75, %v106
    %v111 = vmul.f32 %v80, %v106
    %v112 = vmul.f32 %v85, %v106
    %v113 = vmul.f32 %v90, %v106
    %v114 = vmul.f32 %v95, %v106
    %v115 = vmul.f32 %v100, %v106
    %v116 = vld [vmem:[%s3] sm:$0x1]
    %v118 = vlaneseq
    %v119 = vshrl.u32 %v118, 7
    %v120 = vsub.s32 0, %v119
    %v121 = vrot.slane %v116, %v120
    %v123 = vadd.f32 %v108, %v121
    %v124 = vadd.f32 %v109, %v121
    %v125 = vadd.f32 %v110, %v121
    %v126 = vadd.f32 %v111, %v121
    %v127 = vadd.f32 %v112, %v121
    %v128 = vadd.f32 %v113, %v121
    %v129 = vadd.f32 %v114, %v121
    %v130 = vadd.f32 %v115, %v121
    %vm131 = vcmask 261120
    %132 = vst.msk [vmem:[#allocation4] sm:$0xff] %vm131, %v123
    %133 = vst.msk [vmem:[#allocation4 + $0x8] sm:$0xff] %vm131, %v124
    %134 = vst.msk [vmem:[#allocation4 + $0x10] sm:$0xff] %vm131, %v125
    %135 = vst.msk [vmem:[#allocation4 + $0x18] sm:$0xff] %vm131, %v126
    %136 = vst.msk [vmem:[#allocation4 + $0x20] sm:$0xff] %vm131, %v127
    %137 = vst.msk [vmem:[#allocation4 + $0x28] sm:$0xff] %vm131, %v128
    %138 = vst.msk [vmem:[#allocation4 + $0x30] sm:$0xff] %vm131, %v129
    %139 = vst.msk [vmem:[#allocation4 + $0x38] sm:$0xff] %vm131, %v130
    %v140 = vld [vmem:[%s8] sm:$0x1]
    %v142 = vlaneseq
    %v143 = vshrl.u32 %v142, 7
    %v144 = vsub.s32 0, %v143
    %v145 = vrot.slane %v140, %v144
    %v147 = vmul.f32 %v65, %v145
    %v148 = vmul.f32 %v70, %v145
    %v149 = vmul.f32 %v75, %v145
    %v150 = vmul.f32 %v80, %v145
    %v151 = vmul.f32 %v85, %v145
    %v152 = vmul.f32 %v90, %v145
    %v153 = vmul.f32 %v95, %v145
    %v154 = vmul.f32 %v100, %v145
    %v155 = vtanh.pop %v147
    %v156 = vtanh.pop %v148
    %v157 = vtanh.pop %v149
    %v158 = vtanh.pop %v150
    %v159 = vtanh.pop %v151
    %v160 = vtanh.pop %v152
    %v161 = vtanh.pop %v153
    %v162 = vtanh.pop %v154
    %163 = vst.msk [vmem:[#allocation5] sm:$0xff] %vm131, %v155
    %164 = vst.msk [vmem:[#allocation5 + $0x8] sm:$0xff] %vm131, %v156
    %165 = vst.msk [vmem:[#allocation5 + $0x10] sm:$0xff] %vm131, %v157
    %166 = vst.msk [vmem:[#allocation5 + $0x18] sm:$0xff] %vm131, %v158
    %167 = vst.msk [vmem:[#allocation5 + $0x20] sm:$0xff] %vm131, %v159
    %168 = vst.msk [vmem:[#allocation5 + $0x28] sm:$0xff] %vm131, %v160
    %169 = vst.msk [vmem:[#allocation5 + $0x30] sm:$0xff] %vm131, %v161
    %170 = vst.msk [vmem:[#allocation5 + $0x38] sm:$0xff] %vm131, %v162
    %v171 = vld [vmem:[#allocation2] sm:$0xff]
    %v172 = vld [vmem:[#allocation3] sm:$0xff]
    %v173 = vpack.c.bf16 %v171, %v171
    %v174 = vld [vmem:[%s1] sm:$0xf]
    %v175 = vld [vmem:[%s1 + $0x4] sm:$0xf]
    %v176 = vld [vmem:[%s1 + $0x8] sm:$0xf]
    %v177 = vld [vmem:[%s1 + $0xc] sm:$0xf]
    %v178 = vld [vmem:[#allocation4] sm:$0xff]
    %v183 = vunpack.c.l.b16 %v174
    %v184 = vunpack.c.l.b16 %v175
    %v185 = vunpack.c.l.b16 %v176
    %v186 = vunpack.c.l.b16 %v177
    %v187 = vpack.c.b16 %v184, %v183
    %v188 = vpack.c.b16 %v186, %v185
    %v192 = vsel %vm131, %v173, 0
    %194 = vmatprep.subr.bf16.mxu0 0
    %195 = vmatpush1.bf16.msra.mxu0 %v187
    %196 = vmatprep.subr.bf16.mxu0 0
    %197 = vmatpush1.bf16.msra.mxu0 %v188
    %198 = vmatprep.subr.bf16.mxu0 0
    %199 = vmatpush1.bf16.msra.mxu0 0
    %200 = vmatprep.subr.bf16.mxu0 0
    %201 = vmatpush1.bf16.msra.mxu0 0
    %202 = vmatprep.subr.bf16.mxu0 0
    %203 = vmatpush1.bf16.msra.mxu0 0
    %204 = vmatprep.subr.bf16.mxu0 0
    %205 = vmatpush1.bf16.msra.mxu0 0
    %206 = vmatprep.subr.bf16.mxu0 0
    %207 = vmatpush1.bf16.msra.mxu0 0
    %208 = vmatprep.subr.bf16.mxu0 0
    %209 = vmatpush1.bf16.msra.mxu0 0
    %210 = vmatprep.subr.bf16.mxu0 0
    %211 = vmatpush1.bf16.msra.mxu0 0
    %212 = vmatprep.subr.bf16.mxu0 0
    %213 = vmatpush1.bf16.msra.mxu0 0
    %214 = vmatprep.subr.bf16.mxu0 0
    %215 = vmatpush1.bf16.msra.mxu0 0
    %216 = vmatprep.subr.bf16.mxu0 0
    %217 = vmatpush1.bf16.msra.mxu0 0
    %218 = vmatprep.subr.bf16.mxu0 0
    %219 = vmatpush1.bf16.msra.mxu0 0
    %220 = vmatprep.subr.bf16.mxu0 0
    %221 = vmatpush1.bf16.msra.mxu0 0
    %222 = vmatprep.subr.bf16.mxu0 0
    %223 = vmatpush1.bf16.msra.mxu0 0
    %224 = vmatprep.subr.bf16.mxu0 0
    %225 = vmatpush1.bf16.msra.mxu0 0
    %226 = vmatprep.mubr.bf16.mxu0 0
    %227 = vmatmul.mubr.bf16.gmra.mrb[0].mxu0 %v192
    %v228 = vpop.f32.mrb[0].mxu0
    %v229 = vadd.f32 %v178, %v228
    %v230 = vpop.f32.mrb[0].mxu0
    %v231 = vpop.f32.mrb[0].mxu0
    %v232 = vpop.f32.mrb[0].mxu0
    %233 = vdwg.mxu0
    %v234 = vmul.f32 %v229, 0.909
    %v235 = vxor.u32 %v229, 2147483648
    %v236 = vmul.f32 %v235, 1.442695
    %v237 = vpow.pop %v236
    %v238 = vadd.f32 %v237, 1.0
    %v239 = vrcp.pop %v238
    %v240 = vmul.f32 1.0, %v239
    %v241 = vmul.f32 %v234, %v240
    %v242 = vpack.c.bf16 %v241, %v241
    %v243 = vld [vmem:[%s4] sm:$0xf]
    %v244 = vld [vmem:[%s4 + $0x4] sm:$0xf]
    %v245 = vld [vmem:[%s4 + $0x8] sm:$0xf]
    %v246 = vld [vmem:[%s4 + $0xc] sm:$0xf]
    %v247 = vld [vmem:[%s5] sm:$0x1]
    %v249 = vlaneseq
    %v250 = vshrl.u32 %v249, 7
    %v251 = vsub.s32 0, %v250
    %v252 = vrot.slane %v247, %v251
    %v258 = vunpack.c.l.b16 %v243
    %v259 = vunpack.c.l.b16 %v244
    %v260 = vunpack.c.l.b16 %v245
    %v261 = vunpack.c.l.b16 %v246
    %v262 = vpack.c.b16 %v259, %v258
    %v263 = vpack.c.b16 %v261, %v260
    %v267 = vsel %vm131, %v242, 0
    %269 = vmatprep.subr.bf16.mxu0 0
    %270 = vmatpush1.bf16.msra.mxu0 %v262
    %271 = vmatprep.subr.bf16.mxu0 0
    %272 = vmatpush1.bf16.msra.mxu0 %v263
    %273 = vmatprep.subr.bf16.mxu0 0
    %274 = vmatpush1.bf16.msra.mxu0 0
    %275 = vmatprep.subr.bf16.mxu0 0
    %276 = vmatpush1.bf16.msra.mxu0 0
    %277 = vmatprep.subr.bf16.mxu0 0
    %278 = vmatpush1.bf16.msra.mxu0 0
    %279 = vmatprep.subr.bf16.mxu0 0
    %280 = vmatpush1.bf16.msra.mxu0 0
    %281 = vmatprep.subr.bf16.mxu0 0
    %282 = vmatpush1.bf16.msra.mxu0 0
    %283 = vmatprep.subr.bf16.mxu0 0
    %284 = vmatpush1.bf16.msra.mxu0 0
    %285 = vmatprep.subr.bf16.mxu0 0
    %286 = vmatpush1.bf16.msra.mxu0 0
    %287 = vmatprep.subr.bf16.mxu0 0
    %288 = vmatpush1.bf16.msra.mxu0 0
    %289 = vmatprep.subr.bf16.mxu0 0
    %290 = vmatpush1.bf16.msra.mxu0 0
    %291 = vmatprep.subr.bf16.mxu0 0
    %292 = vmatpush1.bf16.msra.mxu0 0
    %293 = vmatprep.subr.bf16.mxu0 0
    %294 = vmatpush1.bf16.msra.mxu0 0
    %295 = vmatprep.subr.bf16.mxu0 0
    %296 = vmatpush1.bf16.msra.mxu0 0
    %297 = vmatprep.subr.bf16.mxu0 0
    %298 = vmatpush1.bf16.msra.mxu0 0
    %299 = vmatprep.subr.bf16.mxu0 0
    %300 = vmatpush1.bf16.msra.mxu0 0
    %301 = vmatprep.mubr.bf16.mxu0 0
    %302 = vmatmul.mubr.bf16.gmra.mrb[0].mxu0 %v267
    %v303 = vpop.f32.mrb[0].mxu0
    %v304 = vadd.f32 %v252, %v303
    %v305 = vpop.f32.mrb[0].mxu0
    %v306 = vpop.f32.mrb[0].mxu0
    %v307 = vpop.f32.mrb[0].mxu0
    %308 = vdwg.mxu0
    %v309 = vmul.f32 %v304, 0.909
    %v310 = vxor.u32 %v304, 2147483648
    %v311 = vmul.f32 %v310, 1.442695
    %v312 = vpow.pop %v311
    %v313 = vadd.f32 %v312, 1.0
    %v314 = vrcp.pop %v313
    %v315 = vmul.f32 1.0, %v314
    %v316 = vmul.f32 %v309, %v315
    %v317 = vpack.c.bf16 %v316, %v316
    %v318 = vld [vmem:[%s6] sm:$0xf]
    %v319 = vld [vmem:[%s6 + $0x4] sm:$0xf]
    %v320 = vld [vmem:[%s6 + $0x8] sm:$0xf]
    %v321 = vld [vmem:[%s6 + $0xc] sm:$0xf]
    %v322 = vld [vmem:[%s7] sm:$0x1]
    %v324 = vlaneseq
    %v325 = vshrl.u32 %v324, 7
    %v326 = vsub.s32 0, %v325
    %v327 = vrot.slane %v322, %v326
    %v333 = vunpack.c.l.b16 %v318
    %v334 = vunpack.c.l.b16 %v319
    %v335 = vunpack.c.l.b16 %v320
    %v336 = vunpack.c.l.b16 %v321
    %v337 = vpack.c.b16 %v334, %v333
    %v338 = vpack.c.b16 %v336, %v335
    %v342 = vsel %vm131, %v317, 0
    %344 = vmatprep.subr.bf16.mxu0 0
    %345 = vmatpush1.bf16.msra.mxu0 %v337
    %346 = vmatprep.subr.bf16.mxu0 0
    %347 = vmatpush1.bf16.msra.mxu0 %v338
    %348 = vmatprep.subr.bf16.mxu0 0
    %349 = vmatpush1.bf16.msra.mxu0 0
    %350 = vmatprep.subr.bf16.mxu0 0
    %351 = vmatpush1.bf16.msra.mxu0 0
    %352 = vmatprep.subr.bf16.mxu0 0
    %353 = vmatpush1.bf16.msra.mxu0 0
    %354 = vmatprep.subr.bf16.mxu0 0
    %355 = vmatpush1.bf16.msra.mxu0 0
    %356 = vmatprep.subr.bf16.mxu0 0
    %357 = vmatpush1.bf16.msra.mxu0 0
    %358 = vmatprep.subr.bf16.mxu0 0
    %359 = vmatpush1.bf16.msra.mxu0 0
    %360 = vmatprep.subr.bf16.mxu0 0
    %361 = vmatpush1.bf16.msra.mxu0 0
    %362 = vmatprep.subr.bf16.mxu0 0
    %363 = vmatpush1.bf16.msra.mxu0 0
    %364 = vmatprep.subr.bf16.mxu0 0
    %365 = vmatpush1.bf16.msra.mxu0 0
    %366 = vmatprep.subr.bf16.mxu0 0
    %367 = vmatpush1.bf16.msra.mxu0 0
    %368 = vmatprep.subr.bf16.mxu0 0
    %369 = vmatpush1.bf16.msra.mxu0 0
    %370 = vmatprep.subr.bf16.mxu0 0
    %371 = vmatpush1.bf16.msra.mxu0 0
    %372 = vmatprep.subr.bf16.mxu0 0
    %373 = vmatpush1.bf16.msra.mxu0 0
    %374 = vmatprep.subr.bf16.mxu0 0
    %375 = vmatpush1.bf16.msra.mxu0 0
    %376 = vmatprep.mubr.bf16.mxu0 0
    %377 = vmatmul.mubr.bf16.gmra.mrb[0].mxu0 %v342
    %v378 = vpop.f32.mrb[0].mxu0
    %v379 = vadd.f32 %v327, %v378
    %v380 = vpop.f32.mrb[0].mxu0
    %v381 = vpop.f32.mrb[0].mxu0
    %v382 = vpop.f32.mrb[0].mxu0
    %383 = vdwg.mxu0
    %v384 = vld [vmem:[#allocation5] sm:$0xff]
    %v385 = vmul.f32 %v384, %v379
    %v386 = vadd.f32 %v171, %v385
    %v387 = vld [vmem:[%s0] sm:$0xff]
    %v388 = vpack.c.bf16 %v386, %v386
    %v389 = vld [vmem:[%s10] sm:$0xf]
    %v390 = vld [vmem:[%s10 + $0x4] sm:$0xf]
    %v391 = vld [vmem:[%s10 + $0x8] sm:$0xf]
    %v392 = vld [vmem:[%s10 + $0xc] sm:$0xf]
    %v393 = vld [vmem:[%s11] sm:$0x1]
    %v395 = vlaneseq
    %v396 = vshrl.u32 %v395, 7
    %v397 = vsub.s32 0, %v396
    %v398 = vrot.slane %v393, %v397
    %v404 = vunpack.c.l.b16 %v389
    %v405 = vunpack.c.l.b16 %v390
    %v406 = vunpack.c.l.b16 %v391
    %v407 = vunpack.c.l.b16 %v392
    %v408 = vpack.c.b16 %v405, %v404
    %v409 = vpack.c.b16 %v407, %v406
    %v413 = vsel %vm131, %v388, 0
    %415 = vmatprep.subr.bf16.mxu0 0
    %416 = vmatpush1.bf16.msra.mxu0 %v408
    %417 = vmatprep.subr.bf16.mxu0 0
    %418 = vmatpush1.bf16.msra.mxu0 %v409
    %419 = vmatprep.subr.bf16.mxu0 0
    %420 = vmatpush1.bf16.msra.mxu0 0
    %421 = vmatprep.subr.bf16.mxu0 0
    %422 = vmatpush1.bf16.msra.mxu0 0
    %423 = vmatprep.subr.bf16.mxu0 0
    %424 = vmatpush1.bf16.msra.mxu0 0
    %425 = vmatprep.subr.bf16.mxu0 0
    %426 = vmatpush1.bf16.msra.mxu0 0
    %427 = vmatprep.subr.bf16.mxu0 0
    %428 = vmatpush1.bf16.msra.mxu0 0
    %429 = vmatprep.subr.bf16.mxu0 0
    %430 = vmatpush1.bf16.msra.mxu0 0
    %431 = vmatprep.subr.bf16.mxu0 0
    %432 = vmatpush1.bf16.msra.mxu0 0
    %433 = vmatprep.subr.bf16.mxu0 0
    %434 = vmatpush1.bf16.msra.mxu0 0
    %435 = vmatprep.subr.bf16.mxu0 0
    %436 = vmatpush1.bf16.msra.mxu0 0
    %437 = vmatprep.subr.bf16.mxu0 0
    %438 = vmatpush1.bf16.msra.mxu0 0
    %439 = vmatprep.subr.bf16.mxu0 0
    %440 = vmatpush1.bf16.msra.mxu0 0
    %441 = vmatprep.subr.bf16.mxu0 0
    %442 = vmatpush1.bf16.msra.mxu0 0
    %443 = vmatprep.subr.bf16.mxu0 0
    %444 = vmatpush1.bf16.msra.mxu0 0
    %445 = vmatprep.subr.bf16.mxu0 0
    %446 = vmatpush1.bf16.msra.mxu0 0
    %447 = vmatprep.mubr.bf16.mxu0 0
    %448 = vmatmul.mubr.bf16.gmra.mrb[0].mxu0 %v413
    %v449 = vpop.f32.mrb[0].mxu0
    %v450 = vadd.f32 %v398, %v449
    %v451 = vpop.f32.mrb[0].mxu0
    %v452 = vpop.f32.mrb[0].mxu0
    %v453 = vpop.f32.mrb[0].mxu0
    %454 = vdwg.mxu0
    %v455 = vld [vmem:[%s9] sm:$0x1]
    %457 = vset.pattern.permute.xlu0 0
    %458 = vperm.xlu0 %457, %v387
    %v459 = vpop.permute.xlu0 %458
    %v461 = vlaneseq
    %v462 = vshrl.u32 %v461, 7
    %v463 = vsub.s32 0, %v462
    %v464 = vrot.slane %v455, %v463
    %v465 = vmul.f32 %v459, %v464
    %v466 = vadd.f32 %v450, %v465
    %v467 = vld [vmem:[%s9 + $0x1] sm:$0x1]
    %468 = vset.pattern.permute.xlu0 1
    %469 = vperm.xlu0 %468, %v387
    %v470 = vpop.permute.xlu0 %469
    %v472 = vlaneseq
    %v473 = vshrl.u32 %v472, 7
    %v474 = vsub.s32 0, %v473
    %v475 = vrot.slane %v467, %v474
    %v476 = vmul.f32 %v470, %v475
    %v477 = vadd.f32 %v466, %v476
    %v478 = vld [vmem:[%s9 + $0x2] sm:$0x1]
    %479 = vset.pattern.permute.xlu0 2
    %480 = vperm.xlu0 %479, %v387
    %v481 = vpop.permute.xlu0 %480
    %v483 = vlaneseq
    %v484 = vshrl.u32 %v483, 7
    %v485 = vsub.s32 0, %v484
    %v486 = vrot.slane %v478, %v485
    %v487 = vmul.f32 %v481, %v486
    %v488 = vadd.f32 %v477, %v487
    %v489 = vld [vmem:[%s9 + $0x3] sm:$0x1]
    %490 = vset.pattern.permute.xlu0 3
    %491 = vperm.xlu0 %490, %v387
    %v492 = vpop.permute.xlu0 %491
    %v494 = vlaneseq
    %v495 = vshrl.u32 %v494, 7
    %v496 = vsub.s32 0, %v495
    %v497 = vrot.slane %v489, %v496
    %v498 = vmul.f32 %v492, %v497
    %v499 = vadd.f32 %v488, %v498
    %v500 = vxor.u32 %v499, 2147483648
    %v501 = vmul.f32 %v500, 1.442695
    %v502 = vpow.pop %v501
    %v503 = vadd.f32 %v502, 1.0
    %v504 = vrcp.pop %v503
    %v505 = vmul.f32 1.0, %v504
    %v506 = vtanh.pop %v499
    %508 = vrot.lane.b32.xlu0 %v172, 32
    %v509 = vpop.permute.xlu0 %508
    %v511 = vmul.f32 %v505, %v509
    %513 = vrot.lane.b32.xlu0 %v506, 64
    %v514 = vpop.permute.xlu0 %513
    %v516 = vmul.f32 %v505, %v514
    %518 = vrot.lane.b32.xlu0 %v516, 32
    %v519 = vpop.permute.xlu0 %518
    %v521 = vadd.f32 %v511, %v519
    %v522 = vtanh.pop %v521
    %524 = vrot.lane.b32.xlu0 %v522, 64
    %v525 = vpop.permute.xlu0 %524
    %v527 = vmul.f32 %v505, %v525
    %v528 = vpack.c.bf16 %v527, %v527
    %s529 = scalar_lea.vmem [#allocation4], 8
    %v530 = vld [vmem:[%s529] sm:$0xff]
    %532 = vrot.lane.b32.xlu0 %v528, 32
    %v533 = vpop.permute.xlu0 %532
    %v535 = vsel %vm131, %v533, 0
    %537 = vmatprep.subr.bf16.mxu0 0
    %538 = vmatpush1.bf16.msra.mxu0 %v187
    %539 = vmatprep.subr.bf16.mxu0 0
    %540 = vmatpush1.bf16.msra.mxu0 %v188
    %541 = vmatprep.subr.bf16.mxu0 0
    %542 = vmatpush1.bf16.msra.mxu0 0
    %543 = vmatprep.subr.bf16.mxu0 0
    %544 = vmatpush1.bf16.msra.mxu0 0
    %545 = vmatprep.subr.bf16.mxu0 0
    %546 = vmatpush1.bf16.msra.mxu0 0
    %547 = vmatprep.subr.bf16.mxu0 0
    %548 = vmatpush1.bf16.msra.mxu0 0
    %549 = vmatprep.subr.bf16.mxu0 0
    %550 = vmatpush1.bf16.msra.mxu0 0
    %551 = vmatprep.subr.bf16.mxu0 0
    %552 = vmatpush1.bf16.msra.mxu0 0
    %553 = vmatprep.subr.bf16.mxu0 0
    %554 = vmatpush1.bf16.msra.mxu0 0
    %555 = vmatprep.subr.bf16.mxu0 0
    %556 = vmatpush1.bf16.msra.mxu0 0
    %557 = vmatprep.subr.bf16.mxu0 0
    %558 = vmatpush1.bf16.msra.mxu0 0
    %559 = vmatprep.subr.bf16.mxu0 0
    %560 = vmatpush1.bf16.msra.mxu0 0
    %561 = vmatprep.subr.bf16.mxu0 0
    %562 = vmatpush1.bf16.msra.mxu0 0
    %563 = vmatprep.subr.bf16.mxu0 0
    %564 = vmatpush1.bf16.msra.mxu0 0
    %565 = vmatprep.subr.bf16.mxu0 0
    %566 = vmatpush1.bf16.msra.mxu0 0
    %567 = vmatprep.subr.bf16.mxu0 0
    %568 = vmatpush1.bf16.msra.mxu0 0
    %569 = vmatprep.mubr.bf16.mxu0 0
    %570 = vmatmul.mubr.bf16.gmra.mrb[0].mxu0 %v535
    %v571 = vpop.f32.mrb[0].mxu0
    %v572 = vadd.f32 %v530, %v571
    %v573 = vpop.f32.mrb[0].mxu0
    %v574 = vpop.f32.mrb[0].mxu0
    %v575 = vpop.f32.mrb[0].mxu0
    %576 = vdwg.mxu0
    %v577 = vmul.f32 %v572, 0.909
    %v578 = vxor.u32 %v572, 2147483648
    %v579 = vmul.f32 %v578, 1.442695
    %v580 = vpow.pop %v579
    %v581 = vadd.f32 %v580, 1.0
    %v582 = vrcp.pop %v581
    %v583 = vmul.f32 1.0, %v582
    %v584 = vmul.f32 %v577, %v583
    %v585 = vpack.c.bf16 %v584, %v584
    %v587 = vsel %vm131, %v585, 0
    %589 = vmatprep.subr.bf16.mxu0 0
    %590 = vmatpush1.bf16.msra.mxu0 %v262
    %591 = vmatprep.subr.bf16.mxu0 0
    %592 = vmatpush1.bf16.msra.mxu0 %v263
    %593 = vmatprep.subr.bf16.mxu0 0
    %594 = vmatpush1.bf16.msra.mxu0 0
    %595 = vmatprep.subr.bf16.mxu0 0
    %596 = vmatpush1.bf16.msra.mxu0 0
    %597 = vmatprep.subr.bf16.mxu0 0
    %598 = vmatpush1.bf16.msra.mxu0 0
    %599 = vmatprep.subr.bf16.mxu0 0
    %600 = vmatpush1.bf16.msra.mxu0 0
    %601 = vmatprep.subr.bf16.mxu0 0
    %602 = vmatpush1.bf16.msra.mxu0 0
    %603 = vmatprep.subr.bf16.mxu0 0
    %604 = vmatpush1.bf16.msra.mxu0 0
    %605 = vmatprep.subr.bf16.mxu0 0
    %606 = vmatpush1.bf16.msra.mxu0 0
    %607 = vmatprep.subr.bf16.mxu0 0
    %608 = vmatpush1.bf16.msra.mxu0 0
    %609 = vmatprep.subr.bf16.mxu0 0
    %610 = vmatpush1.bf16.msra.mxu0 0
    %611 = vmatprep.subr.bf16.mxu0 0
    %612 = vmatpush1.bf16.msra.mxu0 0
    %613 = vmatprep.subr.bf16.mxu0 0
    %614 = vmatpush1.bf16.msra.mxu0 0
    %615 = vmatprep.subr.bf16.mxu0 0
    %616 = vmatpush1.bf16.msra.mxu0 0
    %617 = vmatprep.subr.bf16.mxu0 0
    %618 = vmatpush1.bf16.msra.mxu0 0
    %619 = vmatprep.subr.bf16.mxu0 0
    %620 = vmatpush1.bf16.msra.mxu0 0
    %621 = vmatprep.mubr.bf16.mxu0 0
    %622 = vmatmul.mubr.bf16.gmra.mrb[0].mxu0 %v587
    %v623 = vpop.f32.mrb[0].mxu0
    %v624 = vadd.f32 %v252, %v623
    %v625 = vpop.f32.mrb[0].mxu0
    %v626 = vpop.f32.mrb[0].mxu0
    %v627 = vpop.f32.mrb[0].mxu0
    %628 = vdwg.mxu0
    %v629 = vmul.f32 %v624, 0.909
    %v630 = vxor.u32 %v624, 2147483648
    %v631 = vmul.f32 %v630, 1.442695
    %v632 = vpow.pop %v631
    %v633 = vadd.f32 %v632, 1.0
    %v634 = vrcp.pop %v633
    %v635 = vmul.f32 1.0, %v634
    %v636 = vmul.f32 %v629, %v635
    %v637 = vpack.c.bf16 %v636, %v636
    %v639 = vsel %vm131, %v637, 0
    %641 = vmatprep.subr.bf16.mxu0 0
    %642 = vmatpush1.bf16.msra.mxu0 %v337
    %643 = vmatprep.subr.bf16.mxu0 0
    %644 = vmatpush1.bf16.msra.mxu0 %v338
    %645 = vmatprep.subr.bf16.mxu0 0
    %646 = vmatpush1.bf16.msra.mxu0 0
    %647 = vmatprep.subr.bf16.mxu0 0
    %648 = vmatpush1.bf16.msra.mxu0 0
    %649 = vmatprep.subr.bf16.mxu0 0
    %650 = vmatpush1.bf16.msra.mxu0 0
    %651 = vmatprep.subr.bf16.mxu0 0
    %652 = vmatpush1.bf16.msra.mxu0 0
    %653 = vmatprep.subr.bf16.mxu0 0
    %654 = vmatpush1.bf16.msra.mxu0 0
    %655 = vmatprep.subr.bf16.mxu0 0
    %656 = vmatpush1.bf16.msra.mxu0 0
    %657 = vmatprep.subr.bf16.mxu0 0
    %658 = vmatpush1.bf16.msra.mxu0 0
    %659 = vmatprep.subr.bf16.mxu0 0
    %660 = vmatpush1.bf16.msra.mxu0 0
    %661 = vmatprep.subr.bf16.mxu0 0
    %662 = vmatpush1.bf16.msra.mxu0 0
    %663 = vmatprep.subr.bf16.mxu0 0
    %664 = vmatpush1.bf16.msra.mxu0 0
    %665 = vmatprep.subr.bf16.mxu0 0
    %666 = vmatpush1.bf16.msra.mxu0 0
    %667 = vmatprep.subr.bf16.mxu0 0
    %668 = vmatpush1.bf16.msra.mxu0 0
    %669 = vmatprep.subr.bf16.mxu0 0
    %670 = vmatpush1.bf16.msra.mxu0 0
    %671 = vmatprep.subr.bf16.mxu0 0
    %672 = vmatpush1.bf16.msra.mxu0 0
    %673 = vmatprep.mubr.bf16.mxu0 0
    %674 = vmatmul.mubr.bf16.gmra.mrb[0].mxu0 %v639
    %v675 = vpop.f32.mrb[0].mxu0
    %v676 = vadd.f32 %v327, %v675
    %v677 = vpop.f32.mrb[0].mxu0
    %v678 = vpop.f32.mrb[0].mxu0
    %v679 = vpop.f32.mrb[0].mxu0
    %680 = vdwg.mxu0
    %s681 = scalar_lea.vmem [#allocation5], 8
    %v682 = vld [vmem:[%s681] sm:$0xff]
    %v683 = vmul.f32 %v682, %v676
    %685 = vrot.lane.b32.xlu0 %v683, 96
    %v686 = vpop.permute.xlu0 %685
    %v688 = vadd.f32 %v527, %v686
    %s689 = scalar_lea.vmem %s0, 8
    %v690 = vld [vmem:[%s689] sm:$0xff]
    %v691 = vpack.c.bf16 %v688, %v688
    %693 = vrot.lane.b32.xlu0 %v691, 32
    %v694 = vpop.permute.xlu0 %693
    %v696 = vsel %vm131, %v694, 0
    %698 = vmatprep.subr.bf16.mxu0 0
    %699 = vmatpush1.bf16.msra.mxu0 %v408
    %700 = vmatprep.subr.bf16.mxu0 0
    %701 = vmatpush1.bf16.msra.mxu0 %v409
    %702 = vmatprep.subr.bf16.mxu0 0
    %703 = vmatpush1.bf16.msra.mxu0 0
    %704 = vmatprep.subr.bf16.mxu0 0
    %705 = vmatpush1.bf16.msra.mxu0 0
    %706 = vmatprep.subr.bf16.mxu0 0
    %707 = vmatpush1.bf16.msra.mxu0 0
    %708 = vmatprep.subr.bf16.mxu0 0
    %709 = vmatpush1.bf16.msra.mxu0 0
    %710 = vmatprep.subr.bf16.mxu0 0
    %711 = vmatpush1.bf16.msra.mxu0 0
    %712 = vmatprep.subr.bf16.mxu0 0
    %713 = vmatpush1.bf16.msra.mxu0 0
    %714 = vmatprep.subr.bf16.mxu0 0
    %715 = vmatpush1.bf16.msra.mxu0 0
    %716 = vmatprep.subr.bf16.mxu0 0
    %717 = vmatpush1.bf16.msra.mxu0 0
    %718 = vmatprep.subr.bf16.mxu0 0
    %719 = vmatpush1.bf16.msra.mxu0 0
    %720 = vmatprep.subr.bf16.mxu0 0
    %721 = vmatpush1.bf16.msra.mxu0 0
    %722 = vmatprep.subr.bf16.mxu0 0
    %723 = vmatpush1.bf16.msra.mxu0 0
    %724 = vmatprep.subr.bf16.mxu0 0
    %725 = vmatpush1.bf16.msra.mxu0 0
    %726 = vmatprep.subr.bf16.mxu0 0
    %727 = vmatpush1.bf16.msra.mxu0 0
    %728 = vmatprep.subr.bf16.mxu0 0
    %729 = vmatpush1.bf16.msra.mxu0 0
    %730 = vmatprep.mubr.bf16.mxu0 0
    %731 = vmatmul.mubr.bf16.gmra.mrb[0].mxu0 %v696
    %v732 = vpop.f32.mrb[0].mxu0
    %v733 = vadd.f32 %v398, %v732
    %v734 = vpop.f32.mrb[0].mxu0
    %v735 = vpop.f32.mrb[0].mxu0
    %v736 = vpop.f32.mrb[0].mxu0
    %737 = vdwg.mxu0
    %739 = vset.pattern.permute.xlu0 0
    %740 = vperm.xlu0 %739, %v690
    %v741 = vpop.permute.xlu0 %740
    %v743 = vmul.f32 %v741, %v464
    %v744 = vadd.f32 %v733, %v743
    %745 = vset.pattern.permute.xlu0 1
    %746 = vperm.xlu0 %745, %v690
    %v747 = vpop.permute.xlu0 %746
    %v749 = vmul.f32 %v747, %v475
    %v750 = vadd.f32 %v744, %v749
    %751 = vset.pattern.permute.xlu0 2
    %752 = vperm.xlu0 %751, %v690
    %v753 = vpop.permute.xlu0 %752
    %v755 = vmul.f32 %v753, %v486
    %v756 = vadd.f32 %v750, %v755
    %757 = vset.pattern.permute.xlu0 3
    %758 = vperm.xlu0 %757, %v690
    %v759 = vpop.permute.xlu0 %758
    %v761 = vmul.f32 %v759, %v497
    %v762 = vadd.f32 %v756, %v761
    %v763 = vxor.u32 %v762, 2147483648
    %v764 = vmul.f32 %v763, 1.442695
    %v765 = vpow.pop %v764
    %v766 = vadd.f32 %v765, 1.0
    %v767 = vrcp.pop %v766
    %v768 = vmul.f32 1.0, %v767
    %v769 = vtanh.pop %v762
    %v770 = vmul.f32 %v768, %v521
    %772 = vrot.lane.b32.xlu0 %v769, 64
    %v773 = vpop.permute.xlu0 %772
    %v775 = vmul.f32 %v768, %v773
    %777 = vrot.lane.b32.xlu0 %v775, 32
    %v778 = vpop.permute.xlu0 %777
    %v780 = vadd.f32 %v770, %v778
    %v781 = vtanh.pop %v780
    %783 = vrot.lane.b32.xlu0 %v781, 64
    %v784 = vpop.permute.xlu0 %783
    %v786 = vmul.f32 %v768, %v784
    %v787 = vpack.c.bf16 %v786, %v786
    %s788 = scalar_lea.vmem [#allocation4], 16
    %v789 = vld [vmem:[%s788] sm:$0xff]
    %791 = vrot.lane.b32.xlu0 %v787, 32
    %v792 = vpop.permute.xlu0 %791
    %v794 = vsel %vm131, %v792, 0
    %796 = vmatprep.subr.bf16.mxu0 0
    %797 = vmatpush1.bf16.msra.mxu0 %v187
    %798 = vmatprep.subr.bf16.mxu0 0
    %799 = vmatpush1.bf16.msra.mxu0 %v188
    %800 = vmatprep.subr.bf16.mxu0 0
    %801 = vmatpush1.bf16.msra.mxu0 0
    %802 = vmatprep.subr.bf16.mxu0 0
    %803 = vmatpush1.bf16.msra.mxu0 0
    %804 = vmatprep.subr.bf16.mxu0 0
    %805 = vmatpush1.bf16.msra.mxu0 0
    %806 = vmatprep.subr.bf16.mxu0 0
    %807 = vmatpush1.bf16.msra.mxu0 0
    %808 = vmatprep.subr.bf16.mxu0 0
    %809 = vmatpush1.bf16.msra.mxu0 0
    %810 = vmatprep.subr.bf16.mxu0 0
    %811 = vmatpush1.bf16.msra.mxu0 0
    %812 = vmatprep.subr.bf16.mxu0 0
    %813 = vmatpush1.bf16.msra.mxu0 0
    %814 = vmatprep.subr.bf16.mxu0 0
    %815 = vmatpush1.bf16.msra.mxu0 0
    %816 = vmatprep.subr.bf16.mxu0 0
    %817 = vmatpush1.bf16.msra.mxu0 0
    %818 = vmatprep.subr.bf16.mxu0 0
    %819 = vmatpush1.bf16.msra.mxu0 0
    %820 = vmatprep.subr.bf16.mxu0 0
    %821 = vmatpush1.bf16.msra.mxu0 0
    %822 = vmatprep.subr.bf16.mxu0 0
    %823 = vmatpush1.bf16.msra.mxu0 0
    %824 = vmatprep.subr.bf16.mxu0 0
    %825 = vmatpush1.bf16.msra.mxu0 0
    %826 = vmatprep.subr.bf16.mxu0 0
    %827 = vmatpush1.bf16.msra.mxu0 0
    %828 = vmatprep.mubr.bf16.mxu0 0
    %829 = vmatmul.mubr.bf16.gmra.mrb[0].mxu0 %v794
    %v830 = vpop.f32.mrb[0].mxu0
    %v831 = vadd.f32 %v789, %v830
    %v832 = vpop.f32.mrb[0].mxu0
    %v833 = vpop.f32.mrb[0].mxu0
    %v834 = vpop.f32.mrb[0].mxu0
    %835 = vdwg.mxu0
    %v836 = vmul.f32 %v831, 0.909
    %v837 = vxor.u32 %v831, 2147483648
    %v838 = vmul.f32 %v837, 1.442695
    %v839 = vpow.pop %v838
    %v840 = vadd.f32 %v839, 1.0
    %v841 = vrcp.pop %v840
    %v842 = vmul.f32 1.0, %v841
    %v843 = vmul.f32 %v836, %v842
    %v844 = vpack.c.bf16 %v843, %v843
    %v846 = vsel %vm131, %v844, 0
    %848 = vmatprep.subr.bf16.mxu0 0
    %849 = vmatpush1.bf16.msra.mxu0 %v262
    %850 = vmatprep.subr.bf16.mxu0 0
    %851 = vmatpush1.bf16.msra.mxu0 %v263
    %852 = vmatprep.subr.bf16.mxu0 0
    %853 = vmatpush1.bf16.msra.mxu0 0
    %854 = vmatprep.subr.bf16.mxu0 0
    %855 = vmatpush1.bf16.msra.mxu0 0
    %856 = vmatprep.subr.bf16.mxu0 0
    %857 = vmatpush1.bf16.msra.mxu0 0
    %858 = vmatprep.subr.bf16.mxu0 0
    %859 = vmatpush1.bf16.msra.mxu0 0
    %860 = vmatprep.subr.bf16.mxu0 0
    %861 = vmatpush1.bf16.msra.mxu0 0
    %862 = vmatprep.subr.bf16.mxu0 0
    %863 = vmatpush1.bf16.msra.mxu0 0
    %864 = vmatprep.subr.bf16.mxu0 0
    %865 = vmatpush1.bf16.msra.mxu0 0
    %866 = vmatprep.subr.bf16.mxu0 0
    %867 = vmatpush1.bf16.msra.mxu0 0
    %868 = vmatprep.subr.bf16.mxu0 0
    %869 = vmatpush1.bf16.msra.mxu0 0
    %870 = vmatprep.subr.bf16.mxu0 0
    %871 = vmatpush1.bf16.msra.mxu0 0
    %872 = vmatprep.subr.bf16.mxu0 0
    %873 = vmatpush1.bf16.msra.mxu0 0
    %874 = vmatprep.subr.bf16.mxu0 0
    %875 = vmatpush1.bf16.msra.mxu0 0
    %876 = vmatprep.subr.bf16.mxu0 0
    %877 = vmatpush1.bf16.msra.mxu0 0
    %878 = vmatprep.subr.bf16.mxu0 0
    %879 = vmatpush1.bf16.msra.mxu0 0
    %880 = vmatprep.mubr.bf16.mxu0 0
    %881 = vmatmul.mubr.bf16.gmra.mrb[0].mxu0 %v846
    %v882 = vpop.f32.mrb[0].mxu0
    %v883 = vadd.f32 %v252, %v882
    %v884 = vpop.f32.mrb[0].mxu0
    %v885 = vpop.f32.mrb[0].mxu0
    %v886 = vpop.f32.mrb[0].mxu0
    %887 = vdwg.mxu0
    %v888 = vmul.f32 %v883, 0.909
    %v889 = vxor.u32 %v883, 2147483648
    %v890 = vmul.f32 %v889, 1.442695
    %v891 = vpow.pop %v890
    %v892 = vadd.f32 %v891, 1.0
    %v893 = vrcp.pop %v892
    %v894 = vmul.f32 1.0, %v893
    %v895 = vmul.f32 %v888, %v894
    %v896 = vpack.c.bf16 %v895, %v895
    %v898 = vsel %vm131, %v896, 0
    %900 = vmatprep.subr.bf16.mxu0 0
    %901 = vmatpush1.bf16.msra.mxu0 %v337
    %902 = vmatprep.subr.bf16.mxu0 0
    %903 = vmatpush1.bf16.msra.mxu0 %v338
    %904 = vmatprep.subr.bf16.mxu0 0
    %905 = vmatpush1.bf16.msra.mxu0 0
    %906 = vmatprep.subr.bf16.mxu0 0
    %907 = vmatpush1.bf16.msra.mxu0 0
    %908 = vmatprep.subr.bf16.mxu0 0
    %909 = vmatpush1.bf16.msra.mxu0 0
    %910 = vmatprep.subr.bf16.mxu0 0
    %911 = vmatpush1.bf16.msra.mxu0 0
    %912 = vmatprep.subr.bf16.mxu0 0
    %913 = vmatpush1.bf16.msra.mxu0 0
    %914 = vmatprep.subr.bf16.mxu0 0
    %915 = vmatpush1.bf16.msra.mxu0 0
    %916 = vmatprep.subr.bf16.mxu0 0
    %917 = vmatpush1.bf16.msra.mxu0 0
    %918 = vmatprep.subr.bf16.mxu0 0
    %919 = vmatpush1.bf16.msra.mxu0 0
    %920 = vmatprep.subr.bf16.mxu0 0
    %921 = vmatpush1.bf16.msra.mxu0 0
    %922 = vmatprep.subr.bf16.mxu0 0
    %923 = vmatpush1.bf16.msra.mxu0 0
    %924 = vmatprep.subr.bf16.mxu0 0
    %925 = vmatpush1.bf16.msra.mxu0 0
    %926 = vmatprep.subr.bf16.mxu0 0
    %927 = vmatpush1.bf16.msra.mxu0 0
    %928 = vmatprep.subr.bf16.mxu0 0
    %929 = vmatpush1.bf16.msra.mxu0 0
    %930 = vmatprep.subr.bf16.mxu0 0
    %931 = vmatpush1.bf16.msra.mxu0 0
    %932 = vmatprep.mubr.bf16.mxu0 0
    %933 = vmatmul.mubr.bf16.gmra.mrb[0].mxu0 %v898
    %v934 = vpop.f32.mrb[0].mxu0
    %v935 = vadd.f32 %v327, %v934
    %v936 = vpop.f32.mrb[0].mxu0
    %v937 = vpop.f32.mrb[0].mxu0
    %v938 = vpop.f32.mrb[0].mxu0
    %939 = vdwg.mxu0
    %s940 = scalar_lea.vmem [#allocation5], 16
    %v941 = vld [vmem:[%s940] sm:$0xff]
    %v942 = vmul.f32 %v941, %v935
    %944 = vrot.lane.b32.xlu0 %v942, 96
    %v945 = vpop.permute.xlu0 %944
    %v947 = vadd.f32 %v786, %v945
    %s948 = scalar_lea.vmem %s0, 16
    %v949 = vld [vmem:[%s948] sm:$0xff]
    %v950 = vpack.c.bf16 %v947, %v947
    %952 = vrot.lane.b32.xlu0 %v950, 32
    %v953 = vpop.permute.xlu0 %952
    %v955 = vsel %vm131, %v953, 0
    %957 = vmatprep.subr.bf16.mxu0 0
    %958 = vmatpush1.bf16.msra.mxu0 %v408
    %959 = vmatprep.subr.bf16.mxu0 0
    %960 = vmatpush1.bf16.msra.mxu0 %v409
    %961 = vmatprep.subr.bf16.mxu0 0
    %962 = vmatpush1.bf16.msra.mxu0 0
    %963 = vmatprep.subr.bf16.mxu0 0
    %964 = vmatpush1.bf16.msra.mxu0 0
    %965 = vmatprep.subr.bf16.mxu0 0
    %966 = vmatpush1.bf16.msra.mxu0 0
    %967 = vmatprep.subr.bf16.mxu0 0
    %968 = vmatpush1.bf16.msra.mxu0 0
    %969 = vmatprep.subr.bf16.mxu0 0
    %970 = vmatpush1.bf16.msra.mxu0 0
    %971 = vmatprep.subr.bf16.mxu0 0
    %972 = vmatpush1.bf16.msra.mxu0 0
    %973 = vmatprep.subr.bf16.mxu0 0
    %974 = vmatpush1.bf16.msra.mxu0 0
    %975 = vmatprep.subr.bf16.mxu0 0
    %976 = vmatpush1.bf16.msra.mxu0 0
    %977 = vmatprep.subr.bf16.mxu0 0
    %978 = vmatpush1.bf16.msra.mxu0 0
    %979 = vmatprep.subr.bf16.mxu0 0
    %980 = vmatpush1.bf16.msra.mxu0 0
    %981 = vmatprep.subr.bf16.mxu0 0
    %982 = vmatpush1.bf16.msra.mxu0 0
    %983 = vmatprep.subr.bf16.mxu0 0
    %984 = vmatpush1.bf16.msra.mxu0 0
    %985 = vmatprep.subr.bf16.mxu0 0
    %986 = vmatpush1.bf16.msra.mxu0 0
    %987 = vmatprep.subr.bf16.mxu0 0
    %988 = vmatpush1.bf16.msra.mxu0 0
    %989 = vmatprep.mubr.bf16.mxu0 0
    %990 = vmatmul.mubr.bf16.gmra.mrb[0].mxu0 %v955
    %v991 = vpop.f32.mrb[0].mxu0
    %v992 = vadd.f32 %v398, %v991
    %v993 = vpop.f32.mrb[0].mxu0
    %v994 = vpop.f32.mrb[0].mxu0
    %v995 = vpop.f32.mrb[0].mxu0
    %996 = vdwg.mxu0
    %998 = vset.pattern.permute.xlu0 0
    %999 = vperm.xlu0 %998, %v949
    %v1000 = vpop.permute.xlu0 %999
    %v1002 = vmul.f32 %v1000, %v464
    %v1003 = vadd.f32 %v992, %v1002
    %1004 = vset.pattern.permute.xlu0 1
    %1005 = vperm.xlu0 %1004, %v949
    %v1006 = vpop.permute.xlu0 %1005
    %v1008 = vmul.f32 %v1006, %v475
    %v1009 = vadd.f32 %v1003, %v1008
    %1010 = vset.pattern.permute.xlu0 2
    %1011 = vperm.xlu0 %1010, %v949
    %v1012 = vpop.permute.xlu0 %1011
    %v1014 = vmul.f32 %v1012, %v486
    %v1015 = vadd.f32 %v1009, %v1014
    %1016 = vset.pattern.permute.xlu0 3
    %1017 = vperm.xlu0 %1016, %v949
    %v1018 = vpop.permute.xlu0 %1017
    %v1020 = vmul.f32 %v1018, %v497
    %v1021 = vadd.f32 %v1015, %v1020
    %v1022 = vxor.u32 %v1021, 2147483648
    %v1023 = vmul.f32 %v1022, 1.442695
    %v1024 = vpow.pop %v1023
    %v1025 = vadd.f32 %v1024, 1.0
    %v1026 = vrcp.pop %v1025
    %v1027 = vmul.f32 1.0, %v1026
    %v1028 = vtanh.pop %v1021
    %v1029 = vmul.f32 %v1027, %v780
    %1031 = vrot.lane.b32.xlu0 %v1028, 64
    %v1032 = vpop.permute.xlu0 %1031
    %v1034 = vmul.f32 %v1027, %v1032
    %1036 = vrot.lane.b32.xlu0 %v1034, 32
    %v1037 = vpop.permute.xlu0 %1036
    %v1039 = vadd.f32 %v1029, %v1037
    %v1040 = vtanh.pop %v1039
    %1042 = vrot.lane.b32.xlu0 %v1040, 64
    %v1043 = vpop.permute.xlu0 %1042
    %v1045 = vmul.f32 %v1027, %v1043
    %v1046 = vpack.c.bf16 %v1045, %v1045
    %s1047 = scalar_lea.vmem [#allocation4], 24
    %v1048 = vld [vmem:[%s1047] sm:$0xff]
    %1050 = vrot.lane.b32.xlu0 %v1046, 32
    %v1051 = vpop.permute.xlu0 %1050
    %v1053 = vsel %vm131, %v1051, 0
    %1055 = vmatprep.subr.bf16.mxu0 0
    %1056 = vmatpush1.bf16.msra.mxu0 %v187
    %1057 = vmatprep.subr.bf16.mxu0 0
    %1058 = vmatpush1.bf16.msra.mxu0 %v188
    %1059 = vmatprep.subr.bf16.mxu0 0
    %1060 = vmatpush1.bf16.msra.mxu0 0
    %1061 = vmatprep.subr.bf16.mxu0 0
    %1062 = vmatpush1.bf16.msra.mxu0 0
    %1063 = vmatprep.subr.bf16.mxu0 0
    %1064 = vmatpush1.bf16.msra.mxu0 0
    %1065 = vmatprep.subr.bf16.mxu0 0
    %1066 = vmatpush1.bf16.msra.mxu0 0
    %1067 = vmatprep.subr.bf16.mxu0 0
    %1068 = vmatpush1.bf16.msra.mxu0 0
    %1069 = vmatprep.subr.bf16.mxu0 0
    %1070 = vmatpush1.bf16.msra.mxu0 0
    %1071 = vmatprep.subr.bf16.mxu0 0
    %1072 = vmatpush1.bf16.msra.mxu0 0
    %1073 = vmatprep.subr.bf16.mxu0 0
    %1074 = vmatpush1.bf16.msra.mxu0 0
    %1075 = vmatprep.subr.bf16.mxu0 0
    %1076 = vmatpush1.bf16.msra.mxu0 0
    %1077 = vmatprep.subr.bf16.mxu0 0
    %1078 = vmatpush1.bf16.msra.mxu0 0
    %1079 = vmatprep.subr.bf16.mxu0 0
    %1080 = vmatpush1.bf16.msra.mxu0 0
    %1081 = vmatprep.subr.bf16.mxu0 0
    %1082 = vmatpush1.bf16.msra.mxu0 0
    %1083 = vmatprep.subr.bf16.mxu0 0
    %1084 = vmatpush1.bf16.msra.mxu0 0
    %1085 = vmatprep.subr.bf16.mxu0 0
    %1086 = vmatpush1.bf16.msra.mxu0 0
    %1087 = vmatprep.mubr.bf16.mxu0 0
    %1088 = vmatmul.mubr.bf16.gmra.mrb[0].mxu0 %v1053
    %v1089 = vpop.f32.mrb[0].mxu0
    %v1090 = vadd.f32 %v1048, %v1089
    %v1091 = vpop.f32.mrb[0].mxu0
    %v1092 = vpop.f32.mrb[0].mxu0
    %v1093 = vpop.f32.mrb[0].mxu0
    %1094 = vdwg.mxu0
    %v1095 = vmul.f32 %v1090, 0.909
    %v1096 = vxor.u32 %v1090, 2147483648
    %v1097 = vmul.f32 %v1096, 1.442695
    %v1098 = vpow.pop %v1097
    %v1099 = vadd.f32 %v1098, 1.0
    %v1100 = vrcp.pop %v1099
    %v1101 = vmul.f32 1.0, %v1100
    %v1102 = vmul.f32 %v1095, %v1101
    %v1103 = vpack.c.bf16 %v1102, %v1102
    %v1105 = vsel %vm131, %v1103, 0
    %1107 = vmatprep.subr.bf16.mxu0 0
    %1108 = vmatpush1.bf16.msra.mxu0 %v262
    %1109 = vmatprep.subr.bf16.mxu0 0
    %1110 = vmatpush1.bf16.msra.mxu0 %v263
    %1111 = vmatprep.subr.bf16.mxu0 0
    %1112 = vmatpush1.bf16.msra.mxu0 0
    %1113 = vmatprep.subr.bf16.mxu0 0
    %1114 = vmatpush1.bf16.msra.mxu0 0
    %1115 = vmatprep.subr.bf16.mxu0 0
    %1116 = vmatpush1.bf16.msra.mxu0 0
    %1117 = vmatprep.subr.bf16.mxu0 0
    %1118 = vmatpush1.bf16.msra.mxu0 0
    %1119 = vmatprep.subr.bf16.mxu0 0
    %1120 = vmatpush1.bf16.msra.mxu0 0
    %1121 = vmatprep.subr.bf16.mxu0 0
    %1122 = vmatpush1.bf16.msra.mxu0 0
    %1123 = vmatprep.subr.bf16.mxu0 0
    %1124 = vmatpush1.bf16.msra.mxu0 0
    %1125 = vmatprep.subr.bf16.mxu0 0
    %1126 = vmatpush1.bf16.msra.mxu0 0
    %1127 = vmatprep.subr.bf16.mxu0 0
    %1128 = vmatpush1.bf16.msra.mxu0 0
    %1129 = vmatprep.subr.bf16.mxu0 0
    %1130 = vmatpush1.bf16.msra.mxu0 0
    %1131 = vmatprep.subr.bf16.mxu0 0
    %1132 = vmatpush1.bf16.msra.mxu0 0
    %1133 = vmatprep.subr.bf16.mxu0 0
    %1134 = vmatpush1.bf16.msra.mxu0 0
    %1135 = vmatprep.subr.bf16.mxu0 0
    %1136 = vmatpush1.bf16.msra.mxu0 0
    %1137 = vmatprep.subr.bf16.mxu0 0
    %1138 = vmatpush1.bf16.msra.mxu0 0
    %1139 = vmatprep.mubr.bf16.mxu0 0
    %1140 = vmatmul.mubr.bf16.gmra.mrb[0].mxu0 %v1105
    %v1141 = vpop.f32.mrb[0].mxu0
    %v1142 = vadd.f32 %v252, %v1141
    %v1143 = vpop.f32.mrb[0].mxu0
    %v1144 = vpop.f32.mrb[0].mxu0
    %v1145 = vpop.f32.mrb[0].mxu0
    %1146 = vdwg.mxu0
    %v1147 = vmul.f32 %v1142, 0.909
    %v1148 = vxor.u32 %v1142, 2147483648
    %v1149 = vmul.f32 %v1148, 1.442695
    %v1150 = vpow.pop %v1149
    %v1151 = vadd.f32 %v1150, 1.0
    %v1152 = vrcp.pop %v1151
    %v1153 = vmul.f32 1.0, %v1152
    %v1154 = vmul.f32 %v1147, %v1153
    %v1155 = vpack.c.bf16 %v1154, %v1154
    %v1157 = vsel %vm131, %v1155, 0
    %1159 = vmatprep.subr.bf16.mxu0 0
    %1160 = vmatpush1.bf16.msra.mxu0 %v337
    %1161 = vmatprep.subr.bf16.mxu0 0
    %1162 = vmatpush1.bf16.msra.mxu0 %v338
    %1163 = vmatprep.subr.bf16.mxu0 0
    %1164 = vmatpush1.bf16.msra.mxu0 0
    %1165 = vmatprep.subr.bf16.mxu0 0
    %1166 = vmatpush1.bf16.msra.mxu0 0
    %1167 = vmatprep.subr.bf16.mxu0 0
    %1168 = vmatpush1.bf16.msra.mxu0 0
    %1169 = vmatprep.subr.bf16.mxu0 0
    %1170 = vmatpush1.bf16.msra.mxu0 0
    %1171 = vmatprep.subr.bf16.mxu0 0
    %1172 = vmatpush1.bf16.msra.mxu0 0
    %1173 = vmatprep.subr.bf16.mxu0 0
    %1174 = vmatpush1.bf16.msra.mxu0 0
    %1175 = vmatprep.subr.bf16.mxu0 0
    %1176 = vmatpush1.bf16.msra.mxu0 0
    %1177 = vmatprep.subr.bf16.mxu0 0
    %1178 = vmatpush1.bf16.msra.mxu0 0
    %1179 = vmatprep.subr.bf16.mxu0 0
    %1180 = vmatpush1.bf16.msra.mxu0 0
    %1181 = vmatprep.subr.bf16.mxu0 0
    %1182 = vmatpush1.bf16.msra.mxu0 0
    %1183 = vmatprep.subr.bf16.mxu0 0
    %1184 = vmatpush1.bf16.msra.mxu0 0
    %1185 = vmatprep.subr.bf16.mxu0 0
    %1186 = vmatpush1.bf16.msra.mxu0 0
    %1187 = vmatprep.subr.bf16.mxu0 0
    %1188 = vmatpush1.bf16.msra.mxu0 0
    %1189 = vmatprep.subr.bf16.mxu0 0
    %1190 = vmatpush1.bf16.msra.mxu0 0
    %1191 = vmatprep.mubr.bf16.mxu0 0
    %1192 = vmatmul.mubr.bf16.gmra.mrb[0].mxu0 %v1157
    %v1193 = vpop.f32.mrb[0].mxu0
    %v1194 = vadd.f32 %v327, %v1193
    %v1195 = vpop.f32.mrb[0].mxu0
    %v1196 = vpop.f32.mrb[0].mxu0
    %v1197 = vpop.f32.mrb[0].mxu0
    %1198 = vdwg.mxu0
    %s1199 = scalar_lea.vmem [#allocation5], 24
    %v1200 = vld [vmem:[%s1199] sm:$0xff]
    %v1201 = vmul.f32 %v1200, %v1194
    %1203 = vrot.lane.b32.xlu0 %v1201, 96
    %v1204 = vpop.permute.xlu0 %1203
    %v1206 = vadd.f32 %v1045, %v1204
    %s1207 = scalar_lea.vmem %s0, 24
    %v1208 = vld [vmem:[%s1207] sm:$0xff]
    %v1209 = vpack.c.bf16 %v1206, %v1206
    %1211 = vrot.lane.b32.xlu0 %v1209, 32
    %v1212 = vpop.permute.xlu0 %1211
    %v1214 = vsel %vm131, %v1212, 0
    %1216 = vmatprep.subr.bf16.mxu0 0
    %1217 = vmatpush1.bf16.msra.mxu0 %v408
    %1218 = vmatprep.subr.bf16.mxu0 0
    %1219 = vmatpush1.bf16.msra.mxu0 %v409
    %1220 = vmatprep.subr.bf16.mxu0 0
    %1221 = vmatpush1.bf16.msra.mxu0 0
    %1222 = vmatprep.subr.bf16.mxu0 0
    %1223 = vmatpush1.bf16.msra.mxu0 0
    %1224 = vmatprep.subr.bf16.mxu0 0
    %1225 = vmatpush1.bf16.msra.mxu0 0
    %1226 = vmatprep.subr.bf16.mxu0 0
    %1227 = vmatpush1.bf16.msra.mxu0 0
    %1228 = vmatprep.subr.bf16.mxu0 0
    %1229 = vmatpush1.bf16.msra.mxu0 0
    %1230 = vmatprep.subr.bf16.mxu0 0
    %1231 = vmatpush1.bf16.msra.mxu0 0
    %1232 = vmatprep.subr.bf16.mxu0 0
    %1233 = vmatpush1.bf16.msra.mxu0 0
    %1234 = vmatprep.subr.bf16.mxu0 0
    %1235 = vmatpush1.bf16.msra.mxu0 0
    %1236 = vmatprep.subr.bf16.mxu0 0
    %1237 = vmatpush1.bf16.msra.mxu0 0
    %1238 = vmatprep.subr.bf16.mxu0 0
    %1239 = vmatpush1.bf16.msra.mxu0 0
    %1240 = vmatprep.subr.bf16.mxu0 0
    %1241 = vmatpush1.bf16.msra.mxu0 0
    %1242 = vmatprep.subr.bf16.mxu0 0
    %1243 = vmatpush1.bf16.msra.mxu0 0
    %1244 = vmatprep.subr.bf16.mxu0 0
    %1245 = vmatpush1.bf16.msra.mxu0 0
    %1246 = vmatprep.subr.bf16.mxu0 0
    %1247 = vmatpush1.bf16.msra.mxu0 0
    %1248 = vmatprep.mubr.bf16.mxu0 0
    %1249 = vmatmul.mubr.bf16.gmra.mrb[0].mxu0 %v1214
    %v1250 = vpop.f32.mrb[0].mxu0
    %v1251 = vadd.f32 %v398, %v1250
    %v1252 = vpop.f32.mrb[0].mxu0
    %v1253 = vpop.f32.mrb[0].mxu0
    %v1254 = vpop.f32.mrb[0].mxu0
    %1255 = vdwg.mxu0
    %1257 = vset.pattern.permute.xlu0 0
    %1258 = vperm.xlu0 %1257, %v1208
    %v1259 = vpop.permute.xlu0 %1258
    %v1261 = vmul.f32 %v1259, %v464
    %v1262 = vadd.f32 %v1251, %v1261
    %1263 = vset.pattern.permute.xlu0 1
    %1264 = vperm.xlu0 %1263, %v1208
    %v1265 = vpop.permute.xlu0 %1264
    %v1267 = vmul.f32 %v1265, %v475
    %v1268 = vadd.f32 %v1262, %v1267
    %1269 = vset.pattern.permute.xlu0 2
    %1270 = vperm.xlu0 %1269, %v1208
    %v1271 = vpop.permute.xlu0 %1270
    %v1273 = vmul.f32 %v1271, %v486
    %v1274 = vadd.f32 %v1268, %v1273
    %1275 = vset.pattern.permute.xlu0 3
    %1276 = vperm.xlu0 %1275, %v1208
    %v1277 = vpop.permute.xlu0 %1276
    %v1279 = vmul.f32 %v1277, %v497
    %v1280 = vadd.f32 %v1274, %v1279
    %v1281 = vxor.u32 %v1280, 2147483648
    %v1282 = vmul.f32 %v1281, 1.442695
    %v1283 = vpow.pop %v1282
    %v1284 = vadd.f32 %v1283, 1.0
    %v1285 = vrcp.pop %v1284
    %v1286 = vmul.f32 1.0, %v1285
    %v1287 = vtanh.pop %v1280
    %v1288 = vmul.f32 %v1286, %v1039
    %1290 = vrot.lane.b32.xlu0 %v1287, 64
    %v1291 = vpop.permute.xlu0 %1290
    %v1293 = vmul.f32 %v1286, %v1291
    %1295 = vrot.lane.b32.xlu0 %v1293, 32
    %v1296 = vpop.permute.xlu0 %1295
    %v1298 = vadd.f32 %v1288, %v1296
    %v1299 = vtanh.pop %v1298
    %1301 = vrot.lane.b32.xlu0 %v1299, 64
    %v1302 = vpop.permute.xlu0 %1301
    %v1304 = vmul.f32 %v1286, %v1302
    %v1305 = vpack.c.bf16 %v1304, %v1304
    %s1306 = scalar_lea.vmem [#allocation4], 32
    %v1307 = vld [vmem:[%s1306] sm:$0xff]
    %1309 = vrot.lane.b32.xlu0 %v1305, 32
    %v1310 = vpop.permute.xlu0 %1309
    %v1312 = vsel %vm131, %v1310, 0
    %1314 = vmatprep.subr.bf16.mxu0 0
    %1315 = vmatpush1.bf16.msra.mxu0 %v187
    %1316 = vmatprep.subr.bf16.mxu0 0
    %1317 = vmatpush1.bf16.msra.mxu0 %v188
    %1318 = vmatprep.subr.bf16.mxu0 0
    %1319 = vmatpush1.bf16.msra.mxu0 0
    %1320 = vmatprep.subr.bf16.mxu0 0
    %1321 = vmatpush1.bf16.msra.mxu0 0
    %1322 = vmatprep.subr.bf16.mxu0 0
    %1323 = vmatpush1.bf16.msra.mxu0 0
    %1324 = vmatprep.subr.bf16.mxu0 0
    %1325 = vmatpush1.bf16.msra.mxu0 0
    %1326 = vmatprep.subr.bf16.mxu0 0
    %1327 = vmatpush1.bf16.msra.mxu0 0
    %1328 = vmatprep.subr.bf16.mxu0 0
    %1329 = vmatpush1.bf16.msra.mxu0 0
    %1330 = vmatprep.subr.bf16.mxu0 0
    %1331 = vmatpush1.bf16.msra.mxu0 0
    %1332 = vmatprep.subr.bf16.mxu0 0
    %1333 = vmatpush1.bf16.msra.mxu0 0
    %1334 = vmatprep.subr.bf16.mxu0 0
    %1335 = vmatpush1.bf16.msra.mxu0 0
    %1336 = vmatprep.subr.bf16.mxu0 0
    %1337 = vmatpush1.bf16.msra.mxu0 0
    %1338 = vmatprep.subr.bf16.mxu0 0
    %1339 = vmatpush1.bf16.msra.mxu0 0
    %1340 = vmatprep.subr.bf16.mxu0 0
    %1341 = vmatpush1.bf16.msra.mxu0 0
    %1342 = vmatprep.subr.bf16.mxu0 0
    %1343 = vmatpush1.bf16.msra.mxu0 0
    %1344 = vmatprep.subr.bf16.mxu0 0
    %1345 = vmatpush1.bf16.msra.mxu0 0
    %1346 = vmatprep.mubr.bf16.mxu0 0
    %1347 = vmatmul.mubr.bf16.gmra.mrb[0].mxu0 %v1312
    %v1348 = vpop.f32.mrb[0].mxu0
    %v1349 = vadd.f32 %v1307, %v1348
    %v1350 = vpop.f32.mrb[0].mxu0
    %v1351 = vpop.f32.mrb[0].mxu0
    %v1352 = vpop.f32.mrb[0].mxu0
    %1353 = vdwg.mxu0
    %v1354 = vmul.f32 %v1349, 0.909
    %v1355 = vxor.u32 %v1349, 2147483648
    %v1356 = vmul.f32 %v1355, 1.442695
    %v1357 = vpow.pop %v1356
    %v1358 = vadd.f32 %v1357, 1.0
    %v1359 = vrcp.pop %v1358
    %v1360 = vmul.f32 1.0, %v1359
    %v1361 = vmul.f32 %v1354, %v1360
    %v1362 = vpack.c.bf16 %v1361, %v1361
    %v1364 = vsel %vm131, %v1362, 0
    %1366 = vmatprep.subr.bf16.mxu0 0
    %1367 = vmatpush1.bf16.msra.mxu0 %v262
    %1368 = vmatprep.subr.bf16.mxu0 0
    %1369 = vmatpush1.bf16.msra.mxu0 %v263
    %1370 = vmatprep.subr.bf16.mxu0 0
    %1371 = vmatpush1.bf16.msra.mxu0 0
    %1372 = vmatprep.subr.bf16.mxu0 0
    %1373 = vmatpush1.bf16.msra.mxu0 0
    %1374 = vmatprep.subr.bf16.mxu0 0
    %1375 = vmatpush1.bf16.msra.mxu0 0
    %1376 = vmatprep.subr.bf16.mxu0 0
    %1377 = vmatpush1.bf16.msra.mxu0 0
    %1378 = vmatprep.subr.bf16.mxu0 0
    %1379 = vmatpush1.bf16.msra.mxu0 0
    %1380 = vmatprep.subr.bf16.mxu0 0
    %1381 = vmatpush1.bf16.msra.mxu0 0
    %1382 = vmatprep.subr.bf16.mxu0 0
    %1383 = vmatpush1.bf16.msra.mxu0 0
    %1384 = vmatprep.subr.bf16.mxu0 0
    %1385 = vmatpush1.bf16.msra.mxu0 0
    %1386 = vmatprep.subr.bf16.mxu0 0
    %1387 = vmatpush1.bf16.msra.mxu0 0
    %1388 = vmatprep.subr.bf16.mxu0 0
    %1389 = vmatpush1.bf16.msra.mxu0 0
    %1390 = vmatprep.subr.bf16.mxu0 0
    %1391 = vmatpush1.bf16.msra.mxu0 0
    %1392 = vmatprep.subr.bf16.mxu0 0
    %1393 = vmatpush1.bf16.msra.mxu0 0
    %1394 = vmatprep.subr.bf16.mxu0 0
    %1395 = vmatpush1.bf16.msra.mxu0 0
    %1396 = vmatprep.subr.bf16.mxu0 0
    %1397 = vmatpush1.bf16.msra.mxu0 0
    %1398 = vmatprep.mubr.bf16.mxu0 0
    %1399 = vmatmul.mubr.bf16.gmra.mrb[0].mxu0 %v1364
    %v1400 = vpop.f32.mrb[0].mxu0
    %v1401 = vadd.f32 %v252, %v1400
    %v1402 = vpop.f32.mrb[0].mxu0
    %v1403 = vpop.f32.mrb[0].mxu0
    %v1404 = vpop.f32.mrb[0].mxu0
    %1405 = vdwg.mxu0
    %v1406 = vmul.f32 %v1401, 0.909
    %v1407 = vxor.u32 %v1401, 2147483648
    %v1408 = vmul.f32 %v1407, 1.442695
    %v1409 = vpow.pop %v1408
    %v1410 = vadd.f32 %v1409, 1.0
    %v1411 = vrcp.pop %v1410
    %v1412 = vmul.f32 1.0, %v1411
    %v1413 = vmul.f32 %v1406, %v1412
    %v1414 = vpack.c.bf16 %v1413, %v1413
    %v1416 = vsel %vm131, %v1414, 0
    %1418 = vmatprep.subr.bf16.mxu0 0
    %1419 = vmatpush1.bf16.msra.mxu0 %v337
    %1420 = vmatprep.subr.bf16.mxu0 0
    %1421 = vmatpush1.bf16.msra.mxu0 %v338
    %1422 = vmatprep.subr.bf16.mxu0 0
    %1423 = vmatpush1.bf16.msra.mxu0 0
    %1424 = vmatprep.subr.bf16.mxu0 0
    %1425 = vmatpush1.bf16.msra.mxu0 0
    %1426 = vmatprep.subr.bf16.mxu0 0
    %1427 = vmatpush1.bf16.msra.mxu0 0
    %1428 = vmatprep.subr.bf16.mxu0 0
    %1429 = vmatpush1.bf16.msra.mxu0 0
    %1430 = vmatprep.subr.bf16.mxu0 0
    %1431 = vmatpush1.bf16.msra.mxu0 0
    %1432 = vmatprep.subr.bf16.mxu0 0
    %1433 = vmatpush1.bf16.msra.mxu0 0
    %1434 = vmatprep.subr.bf16.mxu0 0
    %1435 = vmatpush1.bf16.msra.mxu0 0
    %1436 = vmatprep.subr.bf16.mxu0 0
    %1437 = vmatpush1.bf16.msra.mxu0 0
    %1438 = vmatprep.subr.bf16.mxu0 0
    %1439 = vmatpush1.bf16.msra.mxu0 0
    %1440 = vmatprep.subr.bf16.mxu0 0
    %1441 = vmatpush1.bf16.msra.mxu0 0
    %1442 = vmatprep.subr.bf16.mxu0 0
    %1443 = vmatpush1.bf16.msra.mxu0 0
    %1444 = vmatprep.subr.bf16.mxu0 0
    %1445 = vmatpush1.bf16.msra.mxu0 0
    %1446 = vmatprep.subr.bf16.mxu0 0
    %1447 = vmatpush1.bf16.msra.mxu0 0
    %1448 = vmatprep.subr.bf16.mxu0 0
    %1449 = vmatpush1.bf16.msra.mxu0 0
    %1450 = vmatprep.mubr.bf16.mxu0 0
    %1451 = vmatmul.mubr.bf16.gmra.mrb[0].mxu0 %v1416
    %v1452 = vpop.f32.mrb[0].mxu0
    %v1453 = vadd.f32 %v327, %v1452
    %v1454 = vpop.f32.mrb[0].mxu0
    %v1455 = vpop.f32.mrb[0].mxu0
    %v1456 = vpop.f32.mrb[0].mxu0
    %1457 = vdwg.mxu0
    %s1458 = scalar_lea.vmem [#allocation5], 32
    %v1459 = vld [vmem:[%s1458] sm:$0xff]
    %v1460 = vmul.f32 %v1459, %v1453
    %1462 = vrot.lane.b32.xlu0 %v1460, 96
    %v1463 = vpop.permute.xlu0 %1462
    %v1465 = vadd.f32 %v1304, %v1463
    %s1466 = scalar_lea.vmem %s0, 32
    %v1467 = vld [vmem:[%s1466] sm:$0xff]
    %v1468 = vpack.c.bf16 %v1465, %v1465
    %1470 = vrot.lane.b32.xlu0 %v1468, 32
    %v1471 = vpop.permute.xlu0 %1470
    %v1473 = vsel %vm131, %v1471, 0
    %1475 = vmatprep.subr.bf16.mxu0 0
    %1476 = vmatpush1.bf16.msra.mxu0 %v408
    %1477 = vmatprep.subr.bf16.mxu0 0
    %1478 = vmatpush1.bf16.msra.mxu0 %v409
    %1479 = vmatprep.subr.bf16.mxu0 0
    %1480 = vmatpush1.bf16.msra.mxu0 0
    %1481 = vmatprep.subr.bf16.mxu0 0
    %1482 = vmatpush1.bf16.msra.mxu0 0
    %1483 = vmatprep.subr.bf16.mxu0 0
    %1484 = vmatpush1.bf16.msra.mxu0 0
    %1485 = vmatprep.subr.bf16.mxu0 0
    %1486 = vmatpush1.bf16.msra.mxu0 0
    %1487 = vmatprep.subr.bf16.mxu0 0
    %1488 = vmatpush1.bf16.msra.mxu0 0
    %1489 = vmatprep.subr.bf16.mxu0 0
    %1490 = vmatpush1.bf16.msra.mxu0 0
    %1491 = vmatprep.subr.bf16.mxu0 0
    %1492 = vmatpush1.bf16.msra.mxu0 0
    %1493 = vmatprep.subr.bf16.mxu0 0
    %1494 = vmatpush1.bf16.msra.mxu0 0
    %1495 = vmatprep.subr.bf16.mxu0 0
    %1496 = vmatpush1.bf16.msra.mxu0 0
    %1497 = vmatprep.subr.bf16.mxu0 0
    %1498 = vmatpush1.bf16.msra.mxu0 0
    %1499 = vmatprep.subr.bf16.mxu0 0
    %1500 = vmatpush1.bf16.msra.mxu0 0
    %1501 = vmatprep.subr.bf16.mxu0 0
    %1502 = vmatpush1.bf16.msra.mxu0 0
    %1503 = vmatprep.subr.bf16.mxu0 0
    %1504 = vmatpush1.bf16.msra.mxu0 0
    %1505 = vmatprep.subr.bf16.mxu0 0
    %1506 = vmatpush1.bf16.msra.mxu0 0
    %1507 = vmatprep.mubr.bf16.mxu0 0
    %1508 = vmatmul.mubr.bf16.gmra.mrb[0].mxu0 %v1473
    %v1509 = vpop.f32.mrb[0].mxu0
    %v1510 = vadd.f32 %v398, %v1509
    %v1511 = vpop.f32.mrb[0].mxu0
    %v1512 = vpop.f32.mrb[0].mxu0
    %v1513 = vpop.f32.mrb[0].mxu0
    %1514 = vdwg.mxu0
    %1516 = vset.pattern.permute.xlu0 0
    %1517 = vperm.xlu0 %1516, %v1467
    %v1518 = vpop.permute.xlu0 %1517
    %v1520 = vmul.f32 %v1518, %v464
    %v1521 = vadd.f32 %v1510, %v1520
    %1522 = vset.pattern.permute.xlu0 1
    %1523 = vperm.xlu0 %1522, %v1467
    %v1524 = vpop.permute.xlu0 %1523
    %v1526 = vmul.f32 %v1524, %v475
    %v1527 = vadd.f32 %v1521, %v1526
    %1528 = vset.pattern.permute.xlu0 2
    %1529 = vperm.xlu0 %1528, %v1467
    %v1530 = vpop.permute.xlu0 %1529
    %v1532 = vmul.f32 %v1530, %v486
    %v1533 = vadd.f32 %v1527, %v1532
    %1534 = vset.pattern.permute.xlu0 3
    %1535 = vperm.xlu0 %1534, %v1467
    %v1536 = vpop.permute.xlu0 %1535
    %v1538 = vmul.f32 %v1536, %v497
    %v1539 = vadd.f32 %v1533, %v1538
    %v1540 = vxor.u32 %v1539, 2147483648
    %v1541 = vmul.f32 %v1540, 1.442695
    %v1542 = vpow.pop %v1541
    %v1543 = vadd.f32 %v1542, 1.0
    %v1544 = vrcp.pop %v1543
    %v1545 = vmul.f32 1.0, %v1544
    %v1546 = vtanh.pop %v1539
    %v1547 = vmul.f32 %v1545, %v1298
    %1549 = vrot.lane.b32.xlu0 %v1546, 64
    %v1550 = vpop.permute.xlu0 %1549
    %v1552 = vmul.f32 %v1545, %v1550
    %1554 = vrot.lane.b32.xlu0 %v1552, 32
    %v1555 = vpop.permute.xlu0 %1554
    %v1557 = vadd.f32 %v1547, %v1555
    %v1558 = vtanh.pop %v1557
    %1560 = vrot.lane.b32.xlu0 %v1558, 64
    %v1561 = vpop.permute.xlu0 %1560
    %v1563 = vmul.f32 %v1545, %v1561
    %v1564 = vpack.c.bf16 %v1563, %v1563
    %s1565 = scalar_lea.vmem [#allocation4], 40
    %v1566 = vld [vmem:[%s1565] sm:$0xff]
    %1568 = vrot.lane.b32.xlu0 %v1564, 32
    %v1569 = vpop.permute.xlu0 %1568
    %v1571 = vsel %vm131, %v1569, 0
    %1573 = vmatprep.subr.bf16.mxu0 0
    %1574 = vmatpush1.bf16.msra.mxu0 %v187
    %1575 = vmatprep.subr.bf16.mxu0 0
    %1576 = vmatpush1.bf16.msra.mxu0 %v188
    %1577 = vmatprep.subr.bf16.mxu0 0
    %1578 = vmatpush1.bf16.msra.mxu0 0
    %1579 = vmatprep.subr.bf16.mxu0 0
    %1580 = vmatpush1.bf16.msra.mxu0 0
    %1581 = vmatprep.subr.bf16.mxu0 0
    %1582 = vmatpush1.bf16.msra.mxu0 0
    %1583 = vmatprep.subr.bf16.mxu0 0
    %1584 = vmatpush1.bf16.msra.mxu0 0
    %1585 = vmatprep.subr.bf16.mxu0 0
    %1586 = vmatpush1.bf16.msra.mxu0 0
    %1587 = vmatprep.subr.bf16.mxu0 0
    %1588 = vmatpush1.bf16.msra.mxu0 0
    %1589 = vmatprep.subr.bf16.mxu0 0
    %1590 = vmatpush1.bf16.msra.mxu0 0
    %1591 = vmatprep.subr.bf16.mxu0 0
    %1592 = vmatpush1.bf16.msra.mxu0 0
    %1593 = vmatprep.subr.bf16.mxu0 0
    %1594 = vmatpush1.bf16.msra.mxu0 0
    %1595 = vmatprep.subr.bf16.mxu0 0
    %1596 = vmatpush1.bf16.msra.mxu0 0
    %1597 = vmatprep.subr.bf16.mxu0 0
    %1598 = vmatpush1.bf16.msra.mxu0 0
    %1599 = vmatprep.subr.bf16.mxu0 0
    %1600 = vmatpush1.bf16.msra.mxu0 0
    %1601 = vmatprep.subr.bf16.mxu0 0
    %1602 = vmatpush1.bf16.msra.mxu0 0
    %1603 = vmatprep.subr.bf16.mxu0 0
    %1604 = vmatpush1.bf16.msra.mxu0 0
    %1605 = vmatprep.mubr.bf16.mxu0 0
    %1606 = vmatmul.mubr.bf16.gmra.mrb[0].mxu0 %v1571
    %v1607 = vpop.f32.mrb[0].mxu0
    %v1608 = vadd.f32 %v1566, %v1607
    %v1609 = vpop.f32.mrb[0].mxu0
    %v1610 = vpop.f32.mrb[0].mxu0
    %v1611 = vpop.f32.mrb[0].mxu0
    %1612 = vdwg.mxu0
    %v1613 = vmul.f32 %v1608, 0.909
    %v1614 = vxor.u32 %v1608, 2147483648
    %v1615 = vmul.f32 %v1614, 1.442695
    %v1616 = vpow.pop %v1615
    %v1617 = vadd.f32 %v1616, 1.0
    %v1618 = vrcp.pop %v1617
    %v1619 = vmul.f32 1.0, %v1618
    %v1620 = vmul.f32 %v1613, %v1619
    %v1621 = vpack.c.bf16 %v1620, %v1620
    %v1623 = vsel %vm131, %v1621, 0
    %1625 = vmatprep.subr.bf16.mxu0 0
    %1626 = vmatpush1.bf16.msra.mxu0 %v262
    %1627 = vmatprep.subr.bf16.mxu0 0
    %1628 = vmatpush1.bf16.msra.mxu0 %v263
    %1629 = vmatprep.subr.bf16.mxu0 0
    %1630 = vmatpush1.bf16.msra.mxu0 0
    %1631 = vmatprep.subr.bf16.mxu0 0
    %1632 = vmatpush1.bf16.msra.mxu0 0
    %1633 = vmatprep.subr.bf16.mxu0 0
    %1634 = vmatpush1.bf16.msra.mxu0 0
    %1635 = vmatprep.subr.bf16.mxu0 0
    %1636 = vmatpush1.bf16.msra.mxu0 0
    %1637 = vmatprep.subr.bf16.mxu0 0
    %1638 = vmatpush1.bf16.msra.mxu0 0
    %1639 = vmatprep.subr.bf16.mxu0 0
    %1640 = vmatpush1.bf16.msra.mxu0 0
    %1641 = vmatprep.subr.bf16.mxu0 0
    %1642 = vmatpush1.bf16.msra.mxu0 0
    %1643 = vmatprep.subr.bf16.mxu0 0
    %1644 = vmatpush1.bf16.msra.mxu0 0
    %1645 = vmatprep.subr.bf16.mxu0 0
    %1646 = vmatpush1.bf16.msra.mxu0 0
    %1647 = vmatprep.subr.bf16.mxu0 0
    %1648 = vmatpush1.bf16.msra.mxu0 0
    %1649 = vmatprep.subr.bf16.mxu0 0
    %1650 = vmatpush1.bf16.msra.mxu0 0
    %1651 = vmatprep.subr.bf16.mxu0 0
    %1652 = vmatpush1.bf16.msra.mxu0 0
    %1653 = vmatprep.subr.bf16.mxu0 0
    %1654 = vmatpush1.bf16.msra.mxu0 0
    %1655 = vmatprep.subr.bf16.mxu0 0
    %1656 = vmatpush1.bf16.msra.mxu0 0
    %1657 = vmatprep.mubr.bf16.mxu0 0
    %1658 = vmatmul.mubr.bf16.gmra.mrb[0].mxu0 %v1623
    %v1659 = vpop.f32.mrb[0].mxu0
    %v1660 = vadd.f32 %v252, %v1659
    %v1661 = vpop.f32.mrb[0].mxu0
    %v1662 = vpop.f32.mrb[0].mxu0
    %v1663 = vpop.f32.mrb[0].mxu0
    %1664 = vdwg.mxu0
    %v1665 = vmul.f32 %v1660, 0.909
    %v1666 = vxor.u32 %v1660, 2147483648
    %v1667 = vmul.f32 %v1666, 1.442695
    %v1668 = vpow.pop %v1667
    %v1669 = vadd.f32 %v1668, 1.0
    %v1670 = vrcp.pop %v1669
    %v1671 = vmul.f32 1.0, %v1670
    %v1672 = vmul.f32 %v1665, %v1671
    %v1673 = vpack.c.bf16 %v1672, %v1672
    %v1675 = vsel %vm131, %v1673, 0
    %1677 = vmatprep.subr.bf16.mxu0 0
    %1678 = vmatpush1.bf16.msra.mxu0 %v337
    %1679 = vmatprep.subr.bf16.mxu0 0
    %1680 = vmatpush1.bf16.msra.mxu0 %v338
    %1681 = vmatprep.subr.bf16.mxu0 0
    %1682 = vmatpush1.bf16.msra.mxu0 0
    %1683 = vmatprep.subr.bf16.mxu0 0
    %1684 = vmatpush1.bf16.msra.mxu0 0
    %1685 = vmatprep.subr.bf16.mxu0 0
    %1686 = vmatpush1.bf16.msra.mxu0 0
    %1687 = vmatprep.subr.bf16.mxu0 0
    %1688 = vmatpush1.bf16.msra.mxu0 0
    %1689 = vmatprep.subr.bf16.mxu0 0
    %1690 = vmatpush1.bf16.msra.mxu0 0
    %1691 = vmatprep.subr.bf16.mxu0 0
    %1692 = vmatpush1.bf16.msra.mxu0 0
    %1693 = vmatprep.subr.bf16.mxu0 0
    %1694 = vmatpush1.bf16.msra.mxu0 0
    %1695 = vmatprep.subr.bf16.mxu0 0
    %1696 = vmatpush1.bf16.msra.mxu0 0
    %1697 = vmatprep.subr.bf16.mxu0 0
    %1698 = vmatpush1.bf16.msra.mxu0 0
    %1699 = vmatprep.subr.bf16.mxu0 0
    %1700 = vmatpush1.bf16.msra.mxu0 0
    %1701 = vmatprep.subr.bf16.mxu0 0
    %1702 = vmatpush1.bf16.msra.mxu0 0
    %1703 = vmatprep.subr.bf16.mxu0 0
    %1704 = vmatpush1.bf16.msra.mxu0 0
    %1705 = vmatprep.subr.bf16.mxu0 0
    %1706 = vmatpush1.bf16.msra.mxu0 0
    %1707 = vmatprep.subr.bf16.mxu0 0
    %1708 = vmatpush1.bf16.msra.mxu0 0
    %1709 = vmatprep.mubr.bf16.mxu0 0
    %1710 = vmatmul.mubr.bf16.gmra.mrb[0].mxu0 %v1675
    %v1711 = vpop.f32.mrb[0].mxu0
    %v1712 = vadd.f32 %v327, %v1711
    %v1713 = vpop.f32.mrb[0].mxu0
    %v1714 = vpop.f32.mrb[0].mxu0
    %v1715 = vpop.f32.mrb[0].mxu0
    %1716 = vdwg.mxu0
    %s1717 = scalar_lea.vmem [#allocation5], 40
    %v1718 = vld [vmem:[%s1717] sm:$0xff]
    %v1719 = vmul.f32 %v1718, %v1712
    %1721 = vrot.lane.b32.xlu0 %v1719, 96
    %v1722 = vpop.permute.xlu0 %1721
    %v1724 = vadd.f32 %v1563, %v1722
    %s1725 = scalar_lea.vmem %s0, 40
    %v1726 = vld [vmem:[%s1725] sm:$0xff]
    %v1727 = vpack.c.bf16 %v1724, %v1724
    %1729 = vrot.lane.b32.xlu0 %v1727, 32
    %v1730 = vpop.permute.xlu0 %1729
    %v1732 = vsel %vm131, %v1730, 0
    %1734 = vmatprep.subr.bf16.mxu0 0
    %1735 = vmatpush1.bf16.msra.mxu0 %v408
    %1736 = vmatprep.subr.bf16.mxu0 0
    %1737 = vmatpush1.bf16.msra.mxu0 %v409
    %1738 = vmatprep.subr.bf16.mxu0 0
    %1739 = vmatpush1.bf16.msra.mxu0 0
    %1740 = vmatprep.subr.bf16.mxu0 0
    %1741 = vmatpush1.bf16.msra.mxu0 0
    %1742 = vmatprep.subr.bf16.mxu0 0
    %1743 = vmatpush1.bf16.msra.mxu0 0
    %1744 = vmatprep.subr.bf16.mxu0 0
    %1745 = vmatpush1.bf16.msra.mxu0 0
    %1746 = vmatprep.subr.bf16.mxu0 0
    %1747 = vmatpush1.bf16.msra.mxu0 0
    %1748 = vmatprep.subr.bf16.mxu0 0
    %1749 = vmatpush1.bf16.msra.mxu0 0
    %1750 = vmatprep.subr.bf16.mxu0 0
    %1751 = vmatpush1.bf16.msra.mxu0 0
    %1752 = vmatprep.subr.bf16.mxu0 0
    %1753 = vmatpush1.bf16.msra.mxu0 0
    %1754 = vmatprep.subr.bf16.mxu0 0
    %1755 = vmatpush1.bf16.msra.mxu0 0
    %1756 = vmatprep.subr.bf16.mxu0 0
    %1757 = vmatpush1.bf16.msra.mxu0 0
    %1758 = vmatprep.subr.bf16.mxu0 0
    %1759 = vmatpush1.bf16.msra.mxu0 0
    %1760 = vmatprep.subr.bf16.mxu0 0
    %1761 = vmatpush1.bf16.msra.mxu0 0
    %1762 = vmatprep.subr.bf16.mxu0 0
    %1763 = vmatpush1.bf16.msra.mxu0 0
    %1764 = vmatprep.subr.bf16.mxu0 0
    %1765 = vmatpush1.bf16.msra.mxu0 0
    %1766 = vmatprep.mubr.bf16.mxu0 0
    %1767 = vmatmul.mubr.bf16.gmra.mrb[0].mxu0 %v1732
    %v1768 = vpop.f32.mrb[0].mxu0
    %v1769 = vadd.f32 %v398, %v1768
    %v1770 = vpop.f32.mrb[0].mxu0
    %v1771 = vpop.f32.mrb[0].mxu0
    %v1772 = vpop.f32.mrb[0].mxu0
    %1773 = vdwg.mxu0
    %1775 = vset.pattern.permute.xlu0 0
    %1776 = vperm.xlu0 %1775, %v1726
    %v1777 = vpop.permute.xlu0 %1776
    %v1779 = vmul.f32 %v1777, %v464
    %v1780 = vadd.f32 %v1769, %v1779
    %1781 = vset.pattern.permute.xlu0 1
    %1782 = vperm.xlu0 %1781, %v1726
    %v1783 = vpop.permute.xlu0 %1782
    %v1785 = vmul.f32 %v1783, %v475
    %v1786 = vadd.f32 %v1780, %v1785
    %1787 = vset.pattern.permute.xlu0 2
    %1788 = vperm.xlu0 %1787, %v1726
    %v1789 = vpop.permute.xlu0 %1788
    %v1791 = vmul.f32 %v1789, %v486
    %v1792 = vadd.f32 %v1786, %v1791
    %1793 = vset.pattern.permute.xlu0 3
    %1794 = vperm.xlu0 %1793, %v1726
    %v1795 = vpop.permute.xlu0 %1794
    %v1797 = vmul.f32 %v1795, %v497
    %v1798 = vadd.f32 %v1792, %v1797
    %v1799 = vxor.u32 %v1798, 2147483648
    %v1800 = vmul.f32 %v1799, 1.442695
    %v1801 = vpow.pop %v1800
    %v1802 = vadd.f32 %v1801, 1.0
    %v1803 = vrcp.pop %v1802
    %v1804 = vmul.f32 1.0, %v1803
    %v1805 = vtanh.pop %v1798
    %v1806 = vmul.f32 %v1804, %v1557
    %1808 = vrot.lane.b32.xlu0 %v1805, 64
    %v1809 = vpop.permute.xlu0 %1808
    %v1811 = vmul.f32 %v1804, %v1809
    %1813 = vrot.lane.b32.xlu0 %v1811, 32
    %v1814 = vpop.permute.xlu0 %1813
    %v1816 = vadd.f32 %v1806, %v1814
    %v1817 = vtanh.pop %v1816
    %1819 = vrot.lane.b32.xlu0 %v1817, 64
    %v1820 = vpop.permute.xlu0 %1819
    %v1822 = vmul.f32 %v1804, %v1820
    %v1823 = vpack.c.bf16 %v1822, %v1822
    %s1824 = scalar_lea.vmem [#allocation4], 48
    %v1825 = vld [vmem:[%s1824] sm:$0xff]
    %1827 = vrot.lane.b32.xlu0 %v1823, 32
    %v1828 = vpop.permute.xlu0 %1827
    %v1830 = vsel %vm131, %v1828, 0
    %1832 = vmatprep.subr.bf16.mxu0 0
    %1833 = vmatpush1.bf16.msra.mxu0 %v187
    %1834 = vmatprep.subr.bf16.mxu0 0
    %1835 = vmatpush1.bf16.msra.mxu0 %v188
    %1836 = vmatprep.subr.bf16.mxu0 0
    %1837 = vmatpush1.bf16.msra.mxu0 0
    %1838 = vmatprep.subr.bf16.mxu0 0
    %1839 = vmatpush1.bf16.msra.mxu0 0
    %1840 = vmatprep.subr.bf16.mxu0 0
    %1841 = vmatpush1.bf16.msra.mxu0 0
    %1842 = vmatprep.subr.bf16.mxu0 0
    %1843 = vmatpush1.bf16.msra.mxu0 0
    %1844 = vmatprep.subr.bf16.mxu0 0
    %1845 = vmatpush1.bf16.msra.mxu0 0
    %1846 = vmatprep.subr.bf16.mxu0 0
    %1847 = vmatpush1.bf16.msra.mxu0 0
    %1848 = vmatprep.subr.bf16.mxu0 0
    %1849 = vmatpush1.bf16.msra.mxu0 0
    %1850 = vmatprep.subr.bf16.mxu0 0
    %1851 = vmatpush1.bf16.msra.mxu0 0
    %1852 = vmatprep.subr.bf16.mxu0 0
    %1853 = vmatpush1.bf16.msra.mxu0 0
    %1854 = vmatprep.subr.bf16.mxu0 0
    %1855 = vmatpush1.bf16.msra.mxu0 0
    %1856 = vmatprep.subr.bf16.mxu0 0
    %1857 = vmatpush1.bf16.msra.mxu0 0
    %1858 = vmatprep.subr.bf16.mxu0 0
    %1859 = vmatpush1.bf16.msra.mxu0 0
    %1860 = vmatprep.subr.bf16.mxu0 0
    %1861 = vmatpush1.bf16.msra.mxu0 0
    %1862 = vmatprep.subr.bf16.mxu0 0
    %1863 = vmatpush1.bf16.msra.mxu0 0
    %1864 = vmatprep.mubr.bf16.mxu0 0
    %1865 = vmatmul.mubr.bf16.gmra.mrb[0].mxu0 %v1830
    %v1866 = vpop.f32.mrb[0].mxu0
    %v1867 = vadd.f32 %v1825, %v1866
    %v1868 = vpop.f32.mrb[0].mxu0
    %v1869 = vpop.f32.mrb[0].mxu0
    %v1870 = vpop.f32.mrb[0].mxu0
    %1871 = vdwg.mxu0
    %v1872 = vmul.f32 %v1867, 0.909
    %v1873 = vxor.u32 %v1867, 2147483648
    %v1874 = vmul.f32 %v1873, 1.442695
    %v1875 = vpow.pop %v1874
    %v1876 = vadd.f32 %v1875, 1.0
    %v1877 = vrcp.pop %v1876
    %v1878 = vmul.f32 1.0, %v1877
    %v1879 = vmul.f32 %v1872, %v1878
    %v1880 = vpack.c.bf16 %v1879, %v1879
    %v1882 = vsel %vm131, %v1880, 0
    %1884 = vmatprep.subr.bf16.mxu0 0
    %1885 = vmatpush1.bf16.msra.mxu0 %v262
    %1886 = vmatprep.subr.bf16.mxu0 0
    %1887 = vmatpush1.bf16.msra.mxu0 %v263
    %1888 = vmatprep.subr.bf16.mxu0 0
    %1889 = vmatpush1.bf16.msra.mxu0 0
    %1890 = vmatprep.subr.bf16.mxu0 0
    %1891 = vmatpush1.bf16.msra.mxu0 0
    %1892 = vmatprep.subr.bf16.mxu0 0
    %1893 = vmatpush1.bf16.msra.mxu0 0
    %1894 = vmatprep.subr.bf16.mxu0 0
    %1895 = vmatpush1.bf16.msra.mxu0 0
    %1896 = vmatprep.subr.bf16.mxu0 0
    %1897 = vmatpush1.bf16.msra.mxu0 0
    %1898 = vmatprep.subr.bf16.mxu0 0
    %1899 = vmatpush1.bf16.msra.mxu0 0
    %1900 = vmatprep.subr.bf16.mxu0 0
    %1901 = vmatpush1.bf16.msra.mxu0 0
    %1902 = vmatprep.subr.bf16.mxu0 0
    %1903 = vmatpush1.bf16.msra.mxu0 0
    %1904 = vmatprep.subr.bf16.mxu0 0
    %1905 = vmatpush1.bf16.msra.mxu0 0
    %1906 = vmatprep.subr.bf16.mxu0 0
    %1907 = vmatpush1.bf16.msra.mxu0 0
    %1908 = vmatprep.subr.bf16.mxu0 0
    %1909 = vmatpush1.bf16.msra.mxu0 0
    %1910 = vmatprep.subr.bf16.mxu0 0
    %1911 = vmatpush1.bf16.msra.mxu0 0
    %1912 = vmatprep.subr.bf16.mxu0 0
    %1913 = vmatpush1.bf16.msra.mxu0 0
    %1914 = vmatprep.subr.bf16.mxu0 0
    %1915 = vmatpush1.bf16.msra.mxu0 0
    %1916 = vmatprep.mubr.bf16.mxu0 0
    %1917 = vmatmul.mubr.bf16.gmra.mrb[0].mxu0 %v1882
    %v1918 = vpop.f32.mrb[0].mxu0
    %v1919 = vadd.f32 %v252, %v1918
    %v1920 = vpop.f32.mrb[0].mxu0
    %v1921 = vpop.f32.mrb[0].mxu0
    %v1922 = vpop.f32.mrb[0].mxu0
    %1923 = vdwg.mxu0
    %v1924 = vmul.f32 %v1919, 0.909
    %v1925 = vxor.u32 %v1919, 2147483648
    %v1926 = vmul.f32 %v1925, 1.442695
    %v1927 = vpow.pop %v1926
    %v1928 = vadd.f32 %v1927, 1.0
    %v1929 = vrcp.pop %v1928
    %v1930 = vmul.f32 1.0, %v1929
    %v1931 = vmul.f32 %v1924, %v1930
    %v1932 = vpack.c.bf16 %v1931, %v1931
    %v1934 = vsel %vm131, %v1932, 0
    %1936 = vmatprep.subr.bf16.mxu0 0
    %1937 = vmatpush1.bf16.msra.mxu0 %v337
    %1938 = vmatprep.subr.bf16.mxu0 0
    %1939 = vmatpush1.bf16.msra.mxu0 %v338
    %1940 = vmatprep.subr.bf16.mxu0 0
    %1941 = vmatpush1.bf16.msra.mxu0 0
    %1942 = vmatprep.subr.bf16.mxu0 0
    %1943 = vmatpush1.bf16.msra.mxu0 0
    %1944 = vmatprep.subr.bf16.mxu0 0
    %1945 = vmatpush1.bf16.msra.mxu0 0
    %1946 = vmatprep.subr.bf16.mxu0 0
    %1947 = vmatpush1.bf16.msra.mxu0 0
    %1948 = vmatprep.subr.bf16.mxu0 0
    %1949 = vmatpush1.bf16.msra.mxu0 0
    %1950 = vmatprep.subr.bf16.mxu0 0
    %1951 = vmatpush1.bf16.msra.mxu0 0
    %1952 = vmatprep.subr.bf16.mxu0 0
    %1953 = vmatpush1.bf16.msra.mxu0 0
    %1954 = vmatprep.subr.bf16.mxu0 0
    %1955 = vmatpush1.bf16.msra.mxu0 0
    %1956 = vmatprep.subr.bf16.mxu0 0
    %1957 = vmatpush1.bf16.msra.mxu0 0
    %1958 = vmatprep.subr.bf16.mxu0 0
    %1959 = vmatpush1.bf16.msra.mxu0 0
    %1960 = vmatprep.subr.bf16.mxu0 0
    %1961 = vmatpush1.bf16.msra.mxu0 0
    %1962 = vmatprep.subr.bf16.mxu0 0
    %1963 = vmatpush1.bf16.msra.mxu0 0
    %1964 = vmatprep.subr.bf16.mxu0 0
    %1965 = vmatpush1.bf16.msra.mxu0 0
    %1966 = vmatprep.subr.bf16.mxu0 0
    %1967 = vmatpush1.bf16.msra.mxu0 0
    %1968 = vmatprep.mubr.bf16.mxu0 0
    %1969 = vmatmul.mubr.bf16.gmra.mrb[0].mxu0 %v1934
    %v1970 = vpop.f32.mrb[0].mxu0
    %v1971 = vadd.f32 %v327, %v1970
    %v1972 = vpop.f32.mrb[0].mxu0
    %v1973 = vpop.f32.mrb[0].mxu0
    %v1974 = vpop.f32.mrb[0].mxu0
    %1975 = vdwg.mxu0
    %s1976 = scalar_lea.vmem [#allocation5], 48
    %v1977 = vld [vmem:[%s1976] sm:$0xff]
    %v1978 = vmul.f32 %v1977, %v1971
    %1980 = vrot.lane.b32.xlu0 %v1978, 96
    %v1981 = vpop.permute.xlu0 %1980
    %v1983 = vadd.f32 %v1822, %v1981
    %s1984 = scalar_lea.vmem %s0, 48
    %v1985 = vld [vmem:[%s1984] sm:$0xff]
    %v1986 = vpack.c.bf16 %v1983, %v1983
    %1988 = vrot.lane.b32.xlu0 %v1986, 32
    %v1989 = vpop.permute.xlu0 %1988
    %v1991 = vsel %vm131, %v1989, 0
    %1993 = vmatprep.subr.bf16.mxu0 0
    %1994 = vmatpush1.bf16.msra.mxu0 %v408
    %1995 = vmatprep.subr.bf16.mxu0 0
    %1996 = vmatpush1.bf16.msra.mxu0 %v409
    %1997 = vmatprep.subr.bf16.mxu0 0
    %1998 = vmatpush1.bf16.msra.mxu0 0
    %1999 = vmatprep.subr.bf16.mxu0 0
    %2000 = vmatpush1.bf16.msra.mxu0 0
    %2001 = vmatprep.subr.bf16.mxu0 0
    %2002 = vmatpush1.bf16.msra.mxu0 0
    %2003 = vmatprep.subr.bf16.mxu0 0
    %2004 = vmatpush1.bf16.msra.mxu0 0
    %2005 = vmatprep.subr.bf16.mxu0 0
    %2006 = vmatpush1.bf16.msra.mxu0 0
    %2007 = vmatprep.subr.bf16.mxu0 0
    %2008 = vmatpush1.bf16.msra.mxu0 0
    %2009 = vmatprep.subr.bf16.mxu0 0
    %2010 = vmatpush1.bf16.msra.mxu0 0
    %2011 = vmatprep.subr.bf16.mxu0 0
    %2012 = vmatpush1.bf16.msra.mxu0 0
    %2013 = vmatprep.subr.bf16.mxu0 0
    %2014 = vmatpush1.bf16.msra.mxu0 0
    %2015 = vmatprep.subr.bf16.mxu0 0
    %2016 = vmatpush1.bf16.msra.mxu0 0
    %2017 = vmatprep.subr.bf16.mxu0 0
    %2018 = vmatpush1.bf16.msra.mxu0 0
    %2019 = vmatprep.subr.bf16.mxu0 0
    %2020 = vmatpush1.bf16.msra.mxu0 0
    %2021 = vmatprep.subr.bf16.mxu0 0
    %2022 = vmatpush1.bf16.msra.mxu0 0
    %2023 = vmatprep.subr.bf16.mxu0 0
    %2024 = vmatpush1.bf16.msra.mxu0 0
    %2025 = vmatprep.mubr.bf16.mxu0 0
    %2026 = vmatmul.mubr.bf16.gmra.mrb[0].mxu0 %v1991
    %v2027 = vpop.f32.mrb[0].mxu0
    %v2028 = vadd.f32 %v398, %v2027
    %v2029 = vpop.f32.mrb[0].mxu0
    %v2030 = vpop.f32.mrb[0].mxu0
    %v2031 = vpop.f32.mrb[0].mxu0
    %2032 = vdwg.mxu0
    %2034 = vset.pattern.permute.xlu0 0
    %2035 = vperm.xlu0 %2034, %v1985
    %v2036 = vpop.permute.xlu0 %2035
    %v2038 = vmul.f32 %v2036, %v464
    %v2039 = vadd.f32 %v2028, %v2038
    %2040 = vset.pattern.permute.xlu0 1
    %2041 = vperm.xlu0 %2040, %v1985
    %v2042 = vpop.permute.xlu0 %2041
    %v2044 = vmul.f32 %v2042, %v475
    %v2045 = vadd.f32 %v2039, %v2044
    %2046 = vset.pattern.permute.xlu0 2
    %2047 = vperm.xlu0 %2046, %v1985
    %v2048 = vpop.permute.xlu0 %2047
    %v2050 = vmul.f32 %v2048, %v486
    %v2051 = vadd.f32 %v2045, %v2050
    %2052 = vset.pattern.permute.xlu0 3
    %2053 = vperm.xlu0 %2052, %v1985
    %v2054 = vpop.permute.xlu0 %2053
    %v2056 = vmul.f32 %v2054, %v497
    %v2057 = vadd.f32 %v2051, %v2056
    %v2058 = vxor.u32 %v2057, 2147483648
    %v2059 = vmul.f32 %v2058, 1.442695
    %v2060 = vpow.pop %v2059
    %v2061 = vadd.f32 %v2060, 1.0
    %v2062 = vrcp.pop %v2061
    %v2063 = vmul.f32 1.0, %v2062
    %v2064 = vtanh.pop %v2057
    %v2065 = vmul.f32 %v2063, %v1816
    %2067 = vrot.lane.b32.xlu0 %v2064, 64
    %v2068 = vpop.permute.xlu0 %2067
    %v2070 = vmul.f32 %v2063, %v2068
    %2072 = vrot.lane.b32.xlu0 %v2070, 32
    %v2073 = vpop.permute.xlu0 %2072
    %v2075 = vadd.f32 %v2065, %v2073
    %v2076 = vtanh.pop %v2075
    %2078 = vrot.lane.b32.xlu0 %v2076, 64
    %v2079 = vpop.permute.xlu0 %2078
    %v2081 = vmul.f32 %v2063, %v2079
    %v2082 = vpack.c.bf16 %v2081, %v2081
    %s2083 = scalar_lea.vmem [#allocation4], 56
    %v2084 = vld [vmem:[%s2083] sm:$0xff]
    %2086 = vrot.lane.b32.xlu0 %v2082, 32
    %v2087 = vpop.permute.xlu0 %2086
    %v2089 = vsel %vm131, %v2087, 0
    %2091 = vmatprep.subr.bf16.mxu0 0
    %2092 = vmatpush1.bf16.msra.mxu0 %v187
    %2093 = vmatprep.subr.bf16.mxu0 0
    %2094 = vmatpush1.bf16.msra.mxu0 %v188
    %2095 = vmatprep.subr.bf16.mxu0 0
    %2096 = vmatpush1.bf16.msra.mxu0 0
    %2097 = vmatprep.subr.bf16.mxu0 0
    %2098 = vmatpush1.bf16.msra.mxu0 0
    %2099 = vmatprep.subr.bf16.mxu0 0
    %2100 = vmatpush1.bf16.msra.mxu0 0
    %2101 = vmatprep.subr.bf16.mxu0 0
    %2102 = vmatpush1.bf16.msra.mxu0 0
    %2103 = vmatprep.subr.bf16.mxu0 0
    %2104 = vmatpush1.bf16.msra.mxu0 0
    %2105 = vmatprep.subr.bf16.mxu0 0
    %2106 = vmatpush1.bf16.msra.mxu0 0
    %2107 = vmatprep.subr.bf16.mxu0 0
    %2108 = vmatpush1.bf16.msra.mxu0 0
    %2109 = vmatprep.subr.bf16.mxu0 0
    %2110 = vmatpush1.bf16.msra.mxu0 0
    %2111 = vmatprep.subr.bf16.mxu0 0
    %2112 = vmatpush1.bf16.msra.mxu0 0
    %2113 = vmatprep.subr.bf16.mxu0 0
    %2114 = vmatpush1.bf16.msra.mxu0 0
    %2115 = vmatprep.subr.bf16.mxu0 0
    %2116 = vmatpush1.bf16.msra.mxu0 0
    %2117 = vmatprep.subr.bf16.mxu0 0
    %2118 = vmatpush1.bf16.msra.mxu0 0
    %2119 = vmatprep.subr.bf16.mxu0 0
    %2120 = vmatpush1.bf16.msra.mxu0 0
    %2121 = vmatprep.subr.bf16.mxu0 0
    %2122 = vmatpush1.bf16.msra.mxu0 0
    %2123 = vmatprep.mubr.bf16.mxu0 0
    %2124 = vmatmul.mubr.bf16.gmra.mrb[0].mxu0 %v2089
    %v2125 = vpop.f32.mrb[0].mxu0
    %v2126 = vadd.f32 %v2084, %v2125
    %v2127 = vpop.f32.mrb[0].mxu0
    %v2128 = vpop.f32.mrb[0].mxu0
    %v2129 = vpop.f32.mrb[0].mxu0
    %2130 = vdwg.mxu0
    %v2131 = vmul.f32 %v2126, 0.909
    %v2132 = vxor.u32 %v2126, 2147483648
    %v2133 = vmul.f32 %v2132, 1.442695
    %v2134 = vpow.pop %v2133
    %v2135 = vadd.f32 %v2134, 1.0
    %v2136 = vrcp.pop %v2135
    %v2137 = vmul.f32 1.0, %v2136
    %v2138 = vmul.f32 %v2131, %v2137
    %v2139 = vpack.c.bf16 %v2138, %v2138
    %v2141 = vsel %vm131, %v2139, 0
    %2143 = vmatprep.subr.bf16.mxu0 0
    %2144 = vmatpush1.bf16.msra.mxu0 %v262
    %2145 = vmatprep.subr.bf16.mxu0 0
    %2146 = vmatpush1.bf16.msra.mxu0 %v263
    %2147 = vmatprep.subr.bf16.mxu0 0
    %2148 = vmatpush1.bf16.msra.mxu0 0
    %2149 = vmatprep.subr.bf16.mxu0 0
    %2150 = vmatpush1.bf16.msra.mxu0 0
    %2151 = vmatprep.subr.bf16.mxu0 0
    %2152 = vmatpush1.bf16.msra.mxu0 0
    %2153 = vmatprep.subr.bf16.mxu0 0
    %2154 = vmatpush1.bf16.msra.mxu0 0
    %2155 = vmatprep.subr.bf16.mxu0 0
    %2156 = vmatpush1.bf16.msra.mxu0 0
    %2157 = vmatprep.subr.bf16.mxu0 0
    %2158 = vmatpush1.bf16.msra.mxu0 0
    %2159 = vmatprep.subr.bf16.mxu0 0
    %2160 = vmatpush1.bf16.msra.mxu0 0
    %2161 = vmatprep.subr.bf16.mxu0 0
    %2162 = vmatpush1.bf16.msra.mxu0 0
    %2163 = vmatprep.subr.bf16.mxu0 0
    %2164 = vmatpush1.bf16.msra.mxu0 0
    %2165 = vmatprep.subr.bf16.mxu0 0
    %2166 = vmatpush1.bf16.msra.mxu0 0
    %2167 = vmatprep.subr.bf16.mxu0 0
    %2168 = vmatpush1.bf16.msra.mxu0 0
    %2169 = vmatprep.subr.bf16.mxu0 0
    %2170 = vmatpush1.bf16.msra.mxu0 0
    %2171 = vmatprep.subr.bf16.mxu0 0
    %2172 = vmatpush1.bf16.msra.mxu0 0
    %2173 = vmatprep.subr.bf16.mxu0 0
    %2174 = vmatpush1.bf16.msra.mxu0 0
    %2175 = vmatprep.mubr.bf16.mxu0 0
    %2176 = vmatmul.mubr.bf16.gmra.mrb[0].mxu0 %v2141
    %v2177 = vpop.f32.mrb[0].mxu0
    %v2178 = vadd.f32 %v252, %v2177
    %v2179 = vpop.f32.mrb[0].mxu0
    %v2180 = vpop.f32.mrb[0].mxu0
    %v2181 = vpop.f32.mrb[0].mxu0
    %2182 = vdwg.mxu0
    %v2183 = vmul.f32 %v2178, 0.909
    %v2184 = vxor.u32 %v2178, 2147483648
    %v2185 = vmul.f32 %v2184, 1.442695
    %v2186 = vpow.pop %v2185
    %v2187 = vadd.f32 %v2186, 1.0
    %v2188 = vrcp.pop %v2187
    %v2189 = vmul.f32 1.0, %v2188
    %v2190 = vmul.f32 %v2183, %v2189
    %v2191 = vpack.c.bf16 %v2190, %v2190
    %v2193 = vsel %vm131, %v2191, 0
    %2195 = vmatprep.subr.bf16.mxu0 0
    %2196 = vmatpush1.bf16.msra.mxu0 %v337
    %2197 = vmatprep.subr.bf16.mxu0 0
    %2198 = vmatpush1.bf16.msra.mxu0 %v338
    %2199 = vmatprep.subr.bf16.mxu0 0
    %2200 = vmatpush1.bf16.msra.mxu0 0
    %2201 = vmatprep.subr.bf16.mxu0 0
    %2202 = vmatpush1.bf16.msra.mxu0 0
    %2203 = vmatprep.subr.bf16.mxu0 0
    %2204 = vmatpush1.bf16.msra.mxu0 0
    %2205 = vmatprep.subr.bf16.mxu0 0
    %2206 = vmatpush1.bf16.msra.mxu0 0
    %2207 = vmatprep.subr.bf16.mxu0 0
    %2208 = vmatpush1.bf16.msra.mxu0 0
    %2209 = vmatprep.subr.bf16.mxu0 0
    %2210 = vmatpush1.bf16.msra.mxu0 0
    %2211 = vmatprep.subr.bf16.mxu0 0
    %2212 = vmatpush1.bf16.msra.mxu0 0
    %2213 = vmatprep.subr.bf16.mxu0 0
    %2214 = vmatpush1.bf16.msra.mxu0 0
    %2215 = vmatprep.subr.bf16.mxu0 0
    %2216 = vmatpush1.bf16.msra.mxu0 0
    %2217 = vmatprep.subr.bf16.mxu0 0
    %2218 = vmatpush1.bf16.msra.mxu0 0
    %2219 = vmatprep.subr.bf16.mxu0 0
    %2220 = vmatpush1.bf16.msra.mxu0 0
    %2221 = vmatprep.subr.bf16.mxu0 0
    %2222 = vmatpush1.bf16.msra.mxu0 0
    %2223 = vmatprep.subr.bf16.mxu0 0
    %2224 = vmatpush1.bf16.msra.mxu0 0
    %2225 = vmatprep.subr.bf16.mxu0 0
    %2226 = vmatpush1.bf16.msra.mxu0 0
    %2227 = vmatprep.mubr.bf16.mxu0 0
    %2228 = vmatmul.mubr.bf16.gmra.mrb[0].mxu0 %v2193
    %v2229 = vpop.f32.mrb[0].mxu0
    %v2230 = vadd.f32 %v327, %v2229
    %v2231 = vpop.f32.mrb[0].mxu0
    %v2232 = vpop.f32.mrb[0].mxu0
    %v2233 = vpop.f32.mrb[0].mxu0
    %2234 = vdwg.mxu0
    %s2235 = scalar_lea.vmem [#allocation5], 56
    %v2236 = vld [vmem:[%s2235] sm:$0xff]
    %v2237 = vmul.f32 %v2236, %v2230
    %2239 = vrot.lane.b32.xlu0 %v2237, 96
    %v2240 = vpop.permute.xlu0 %2239
    %v2242 = vadd.f32 %v2081, %v2240
    %s2243 = scalar_lea.vmem %s0, 56
    %v2244 = vld [vmem:[%s2243] sm:$0xff]
    %v2245 = vpack.c.bf16 %v2242, %v2242
    %2247 = vrot.lane.b32.xlu0 %v2245, 32
    %v2248 = vpop.permute.xlu0 %2247
    %v2250 = vsel %vm131, %v2248, 0
    %2252 = vmatprep.subr.bf16.mxu0 0
    %2253 = vmatpush1.bf16.msra.mxu0 %v408
    %2254 = vmatprep.subr.bf16.mxu0 0
    %2255 = vmatpush1.bf16.msra.mxu0 %v409
    %2256 = vmatprep.subr.bf16.mxu0 0
    %2257 = vmatpush1.bf16.msra.mxu0 0
    %2258 = vmatprep.subr.bf16.mxu0 0
    %2259 = vmatpush1.bf16.msra.mxu0 0
    %2260 = vmatprep.subr.bf16.mxu0 0
    %2261 = vmatpush1.bf16.msra.mxu0 0
    %2262 = vmatprep.subr.bf16.mxu0 0
    %2263 = vmatpush1.bf16.msra.mxu0 0
    %2264 = vmatprep.subr.bf16.mxu0 0
    %2265 = vmatpush1.bf16.msra.mxu0 0
    %2266 = vmatprep.subr.bf16.mxu0 0
    %2267 = vmatpush1.bf16.msra.mxu0 0
    %2268 = vmatprep.subr.bf16.mxu0 0
    %2269 = vmatpush1.bf16.msra.mxu0 0
    %2270 = vmatprep.subr.bf16.mxu0 0
    %2271 = vmatpush1.bf16.msra.mxu0 0
    %2272 = vmatprep.subr.bf16.mxu0 0
    %2273 = vmatpush1.bf16.msra.mxu0 0
    %2274 = vmatprep.subr.bf16.mxu0 0
    %2275 = vmatpush1.bf16.msra.mxu0 0
    %2276 = vmatprep.subr.bf16.mxu0 0
    %2277 = vmatpush1.bf16.msra.mxu0 0
    %2278 = vmatprep.subr.bf16.mxu0 0
    %2279 = vmatpush1.bf16.msra.mxu0 0
    %2280 = vmatprep.subr.bf16.mxu0 0
    %2281 = vmatpush1.bf16.msra.mxu0 0
    %2282 = vmatprep.subr.bf16.mxu0 0
    %2283 = vmatpush1.bf16.msra.mxu0 0
    %2284 = vmatprep.mubr.bf16.mxu0 0
    %2285 = vmatmul.mubr.bf16.gmra.mrb[0].mxu0 %v2250
    %v2286 = vpop.f32.mrb[0].mxu0
    %v2287 = vadd.f32 %v398, %v2286
    %v2288 = vpop.f32.mrb[0].mxu0
    %v2289 = vpop.f32.mrb[0].mxu0
    %v2290 = vpop.f32.mrb[0].mxu0
    %2291 = vdwg.mxu0
    %2293 = vset.pattern.permute.xlu0 0
    %2294 = vperm.xlu0 %2293, %v2244
    %v2295 = vpop.permute.xlu0 %2294
    %v2297 = vmul.f32 %v2295, %v464
    %v2298 = vadd.f32 %v2287, %v2297
    %2299 = vset.pattern.permute.xlu0 1
    %2300 = vperm.xlu0 %2299, %v2244
    %v2301 = vpop.permute.xlu0 %2300
    %v2303 = vmul.f32 %v2301, %v475
    %v2304 = vadd.f32 %v2298, %v2303
    %2305 = vset.pattern.permute.xlu0 2
    %2306 = vperm.xlu0 %2305, %v2244
    %v2307 = vpop.permute.xlu0 %2306
    %v2309 = vmul.f32 %v2307, %v486
    %v2310 = vadd.f32 %v2304, %v2309
    %2311 = vset.pattern.permute.xlu0 3
    %2312 = vperm.xlu0 %2311, %v2244
    %v2313 = vpop.permute.xlu0 %2312
    %v2315 = vmul.f32 %v2313, %v497
    %v2316 = vadd.f32 %v2310, %v2315
    %v2317 = vxor.u32 %v2316, 2147483648
    %v2318 = vmul.f32 %v2317, 1.442695
    %v2319 = vpow.pop %v2318
    %v2320 = vadd.f32 %v2319, 1.0
    %v2321 = vrcp.pop %v2320
    %v2322 = vmul.f32 1.0, %v2321
    %v2323 = vtanh.pop %v2316
    %v2324 = vmul.f32 %v2322, %v2075
    %2326 = vrot.lane.b32.xlu0 %v2323, 64
    %v2327 = vpop.permute.xlu0 %2326
    %v2329 = vmul.f32 %v2322, %v2327
    %2331 = vrot.lane.b32.xlu0 %v2329, 32
    %v2332 = vpop.permute.xlu0 %2331
    %v2334 = vadd.f32 %v2324, %v2332
    %v2335 = vtanh.pop %v2334
    %2337 = vrot.lane.b32.xlu0 %v2335, 64
    %v2338 = vpop.permute.xlu0 %2337
    %v2340 = vmul.f32 %v2322, %v2338
    %2342 = vrot.lane.b32.xlu0 %v2340, 32
    %v2343 = vpop.permute.xlu0 %2342
    %2345 = vst.msk [vmem:[#allocation2] sm:$0xff] %vm131, %v2343
    %2347 = vrot.lane.b32.xlu0 %v2334, 96
    %v2348 = vpop.permute.xlu0 %2347
    %2350 = vst.msk [vmem:[#allocation3] sm:$0xff] %vm131, %v2348
    // Predicated region
    $region58: #{tpu_custom_call.1} parent=1 // pred_check
      %p2351 = pneg %p46
    $region59: #{tpu_custom_call.1} parent=1 // pred_check_branch
      %2353 = sbr.rel (%p2351) target = $region61
    $region60: #{tpu_custom_call.1} parent=1 // pred_region
      %v2354 = vld [vmem:[%s12] sm:$0x1]
      %v2356 = vlaneseq
      %v2357 = vshrl.u32 %v2356, 7
      %v2358 = vsub.s32 0, %v2357
      %v2359 = vrot.slane %v2354, %v2358
      %2360 = vrot.lane.b32.xlu0 %v2359, 96
      %v2361 = vpop.permute.xlu0 %2360
      %v2363 = vmul.f32 %v2340, %v2361
      %2365 = vrot.lane.b32.xlu0 %v2363, 32
      %v2366 = vpop.permute.xlu0 %2365
      %v2368 = vsel %vm131, %v2366, 0.0
      %2369 = vadd.xlane.f32.xlu0 %v2368
      %v2370 = vpop.xlane.xlu0 %2369
      %2371 = vst [vmem:[#allocation6] sm:$0xff] %v2370
    $region61: #{tpu_custom_call.1} parent=1 // pred_fallthru
      _
    // Predicated region
    $region62: #{tpu_custom_call.1} parent=1 // pred_check
      _
    $region63: #{tpu_custom_call.1} parent=1 // pred_check_branch
      %2373 = sbr.rel (0) target = $region65
    $region64: #{tpu_custom_call.1} parent=1 // pred_region
      %s2375 = ssub.s32 128, 128
      %2376 = vsyncadd [#allocation7], %s2375
      %s2378 = sshll.u32 [#allocation6], 4
      %s2379 = int_to_ptr.vmem [resolvable:$true] %s2378
      %2381 = dma.vmem_to_hbm [thread:$0]  %s2379, 128, %s13, [#allocation7]
    $region65: #{tpu_custom_call.1} parent=1 // pred_fallthru
      _
    // Predicated region
    $region66: #{tpu_custom_call.1} parent=1 // pred_check
      _
    $region67: #{tpu_custom_call.1} parent=1 // pred_check_branch
      %2383 = sbr.rel (0) target = $region69
    $region68: #{tpu_custom_call.1} parent=1 // pred_region
      %2384 = dma.done [#allocation7], 128
    $region69: #{tpu_custom_call.1} parent=1 // pred_fallthru
      _
    %2385 = vsyncpa [#allocation7], 1

</llo_original>
